<compile_context>
chip_gen: v6e
topology: v6e:2x2x1
jax: 0.10.0
libtpu: 0.0.40
codegen_flags: <defaults>
</compile_context>

<pallas_src>
from functools import partial

import jax
import jax.numpy as jnp
import numpy as np
from jax.experimental import pallas as pl
from jax.experimental.pallas import tpu as pltpu


# ------------------------------ fused kernel -------------------------------

def _fused_net_kernel(xt_ref, t1a_ref, t1b_ref, b1e_ref, t2_ref, b2e_ref,
                      wfc1_ref, bfc1_ref, wfc2_ref, bfc2m_ref, out_ref):
    # xt_ref   : (7*TB, 112) bf16 -- row q*TB+n holds image-n rows 4q..4q+3 (112 lanes)
    # t1a_ref  : (4, 2, 112, 128) bf16 -- conv1 banded mats, taps inside row-group Z
    # t1b_ref  : (4, 2, 112, 128) bf16 -- conv1 banded mats, taps spilling into Z+1
    # b1e_ref  : (1, 128) f32          -- conv1 bias broadcast over 12 pooled cols
    # t2_ref   : (5, 2, 128, 128) bf16 -- conv2 banded mats [row tap i, col phase dx]
    # b2e_ref  : (1, 128) f32
    # wfc1_ref : (4, 128, 64) bf16     -- fc1 weight split by pooled row y
    # bfc1_ref : (1, 64) f32
    # wfc2_ref : (64, 128) bf16
    # bfc2m_ref: (1, 128) f32          -- fc2 bias, pad lanes = -1e9 (softmax mask)
    # out_ref  : (TB, 128) f32         -- log-probs in lanes 0..9
    TB = out_ref.shape[0]

    # Two sublane-aligned views of the input block (no relayout, just slices):
    #   ga row (Z*TB + n): image rows 4Z..4Z+3    (Z in 0..5)
    #   gb row (Z*TB + n): image rows 4Z+4..4Z+7
    ga = xt_ref[pl.ds(0, 6 * TB), :]              # (6*TB, 112) bf16
    gb = xt_ref[pl.ds(TB, 6 * TB), :]             # (6*TB, 112) bf16

    # ---- conv1 (banded matmuls, taps packed in K) + 2x2 max-pool + ReLU ----------
    # p1[e] row (Z*TB + n), lane X*10+c = relu'd pooled conv1 at pooled row 2Z+e,
    # pooled col X, channel c.
    p1 = []
    for e in range(2):                            # pooled-row parity
        mx = None
        for a in range(2):                        # row inside 2x2 pooling window
            t0 = 2 * e + a
            for bb in range(2):                   # col inside 2x2 pooling window
                acc = (jnp.dot(ga, t1a_ref[t0, bb],
                               preferred_element_type=jnp.float32)
                       + jnp.dot(gb, t1b_ref[t0, bb],
                                 preferred_element_type=jnp.float32))   # (6TB,128)
                mx = acc if mx is None else jnp.maximum(mx, acc)
        p1.append(jnp.maximum(mx + b1e_ref[...], 0.0).astype(jnp.bfloat16))

    # ---- conv2 (banded matmuls) + 2x2 max-pool + ReLU ----------------------------
    mx2 = None
    for dy in range(2):                           # row inside 2x2 pooling window
        for dx in range(2):                       # col inside 2x2 pooling window
            acc = None
            for i in range(5):                    # conv row tap
                t = dy + i
                lhs = p1[t % 2][(t // 2) * TB:(t // 2 + 4) * TB, :]     # (4TB,128)
                part = jnp.dot(lhs, t2_ref[i, dx],
                               preferred_element_type=jnp.float32)      # (4TB,128)
                acc = part if acc is None else acc + part
            mx2 = acc if mx2 is None else jnp.maximum(mx2, acc)
    # pooled2 row (y*TB + n), lane X2*20 + c2 = relu'd pooled conv2 at (y, X2, c2)
    pooled2 = jnp.maximum(mx2 + b2e_ref[...], 0.0).astype(jnp.bfloat16)  # (4TB,128)

    # ---- fc1 + ReLU --------------------------------------------------------------
    z = None
    for y in range(4):
        part = jnp.dot(pooled2[y * TB:(y + 1) * TB, :], wfc1_ref[y],
                       preferred_element_type=jnp.float32)               # (TB, 64)
        z = part if z is None else z + part
    h1 = jnp.maximum(z + bfc1_ref[...], 0.0).astype(jnp.bfloat16)        # (TB, 64)

    # ---- fc2 + log_softmax -------------------------------------------------------
    logits = jnp.dot(h1, wfc2_ref[...],
                     preferred_element_type=jnp.float32) + bfc2m_ref[...]  # (TB,128)
    m = jnp.max(logits, axis=-1, keepdims=True)
    s = logits - m
    lse = jnp.log(jnp.sum(jnp.exp(s), axis=-1, keepdims=True))
    out_ref[...] = s - lse


# --------------------------- host-side weight prep -------------------------

def prepare_params(params):
    """Restructure PyTorch-layout weights into lane-dense bf16 slabs (done once)."""
    w1 = np.asarray(params["conv1_w"], np.float32)    # (10, 1, 5, 5)
    b1 = np.asarray(params["conv1_b"], np.float32)
    w2 = np.asarray(params["conv2_w"], np.float32)    # (20, 10, 5, 5)
    b2 = np.asarray(params["conv2_b"], np.float32)
    fw1 = np.asarray(params["fc1_w"], np.float32)     # (50, 320)
    fb1 = np.asarray(params["fc1_b"], np.float32)
    fw2 = np.asarray(params["fc2_w"], np.float32)     # (10, 50)
    fb2 = np.asarray(params["fc2_b"], np.float32)

    # conv1: output lanes = X*10 + co (pooled col X in 0..11, out chan co in 0..9).
    # Input K lanes = u*28 + col where u is the row offset inside a 4-row group.
    # For pooling phase (e, a) -> t0 = 2e + a, conv output row = 4Z + t0; tap i
    # reads input row 4Z + t0 + i: rows with t0+i <= 3 live in group Z (T1A),
    # rows with t0+i >= 4 live in group Z+1 (T1B).
    T1A = np.zeros((4, 2, 112, 128), np.float32)
    T1B = np.zeros((4, 2, 112, 128), np.float32)
    for t0 in range(4):
        for bb in range(2):
            for i in range(5):
                s = t0 + i
                if s <= 3:
                    u, tgt = s, T1A
                else:
                    u, tgt = s - 4, T1B
                for j in range(5):
                    for X in range(12):
                        c_in = 2 * X + bb + j
                        tgt[t0, bb, u * 28 + c_in, X * 10:X * 10 + 10] = w1[:, 0, i, j]
    b1e = np.zeros((1, 128), np.float32)
    for X in range(12):
        b1e[0, X * 10:X * 10 + 10] = b1

    # conv2: in-lanes = X*10 + ci, out-lanes = X2*20 + co2 (X2 in 0..3, co2 in 0..19)
    T2 = np.zeros((5, 2, 128, 128), np.float32)
    for i in range(5):
        for dx in range(2):
            for X2 in range(4):
                for j in range(5):
                    X = 2 * X2 + dx + j
                    T2[i, dx, X * 10:X * 10 + 10, X2 * 20:X2 * 20 + 20] = w2[:, :, i, j].T
    b2e = np.zeros((1, 128), np.float32)
    for X2 in range(4):
        b2e[0, X2 * 20:X2 * 20 + 20] = b2

    # fc1: input lanes are (x*20 + c) per pooled row y; match PyTorch NCHW flatten
    Wfc1 = np.zeros((4, 128, 64), np.float32)
    for y in range(4):
        for x4 in range(4):
            k = 16 * np.arange(20) + y * 4 + x4       # flat index c*16 + y*4 + x
            Wfc1[y, x4 * 20:x4 * 20 + 20, :50] = fw1[:, k].T
    bfc1 = np.zeros((1, 64), np.float32)
    bfc1[0, :50] = fb1

    Wfc2 = np.zeros((64, 128), np.float32)
    Wfc2[:50, :10] = fw2.T
    bfc2m = np.full((1, 128), -1e9, np.float32)       # -1e9 masks pad lanes in softmax
    bfc2m[0, :10] = fb2

    bf = lambda a: jnp.asarray(a, jnp.bfloat16)
    f32 = lambda a: jnp.asarray(a, jnp.float32)
    return {"T1A": bf(T1A), "T1B": bf(T1B), "b1e": f32(b1e),
            "T2": bf(T2), "b2e": f32(b2e),
            "Wfc1": bf(Wfc1), "bfc1": f32(bfc1), "Wfc2": bf(Wfc2), "bfc2m": f32(bfc2m)}


# ------------------------------- forward pass -------------------------------

def _round_up(v, m):
    return (v + m - 1) // m * m


@partial(jax.jit, static_argnames=("tb",))
def net_forward(prep, x, tb=128):
    """x: (B, 1, 28, 28) f32 -> (B, 10) log-probs."""
    B = x.shape[0]
    TB = min(tb, _round_up(B, 16))        # batch tile (multiple of 16 for bf16 tiles)
    Bp = _round_up(B, TB)
    nb = Bp // TB                         # v7x note: nb >= 2 lets both TCs work

    xr = x.reshape(B, 28, 28)
    if Bp != B:
        xr = jnp.pad(xr, ((0, Bp - B), (0, 0), (0, 0)))
    # One fused reshape+transpose+cast: view each image as 7 groups of 4 rows
    # (28x28 -> 7x112, free row-major reshape) and make the batch contiguous in
    # sublanes within each batch block: row (b*7 + q)*TB + n == image b*TB+n,
    # image rows 4q..4q+3.
    xt = (xr.reshape(nb, TB, 7, 112)
            .transpose(0, 2, 1, 3)
            .reshape(nb * 7 * TB, 112)
            .astype(jnp.bfloat16))

    out = pl.pallas_call(
        _fused_net_kernel,
        out_shape=jax.ShapeDtypeStruct((Bp, 128), jnp.float32),
        grid=(nb,),
        in_specs=[
            pl.BlockSpec((7 * TB, 112), lambda b: (b, 0)),
            pl.BlockSpec((4, 2, 112, 128), lambda b: (0, 0, 0, 0)),
            pl.BlockSpec((4, 2, 112, 128), lambda b: (0, 0, 0, 0)),
            pl.BlockSpec((1, 128), lambda b: (0, 0)),
            pl.BlockSpec((5, 2, 128, 128), lambda b: (0, 0, 0, 0)),
            pl.BlockSpec((1, 128), lambda b: (0, 0)),
            pl.BlockSpec((4, 128, 64), lambda b: (0, 0, 0)),
            pl.BlockSpec((1, 64), lambda b: (0, 0)),
            pl.BlockSpec((64, 128), lambda b: (0, 0)),
            pl.BlockSpec((1, 128), lambda b: (0, 0)),
        ],
        out_specs=pl.BlockSpec((TB, 128), lambda b: (b, 0)),
        compiler_params=pltpu.CompilerParams(dimension_semantics=("parallel",)),
    )(xt, prep["T1A"], prep["T1B"], prep["b1e"], prep["T2"], prep["b2e"],
      prep["Wfc1"], prep["bfc1"], prep["Wfc2"], prep["bfc2m"])

    return out[:B, :10]


# ------------------------------ reference / init ----------------------------

def init_params(key):
    ks = jax.random.split(key, 8)
    return {
        "conv1_w": jax.random.normal(ks[0], (10, 1, 5, 5), jnp.float32) * 0.1,
        "conv1_b": jax.random.normal(ks[1], (10,), jnp.float32) * 0.1,
        "conv2_w": jax.random.normal(ks[2], (20, 10, 5, 5), jnp.float32) * 0.1,
        "conv2_b": jax.random.normal(ks[3], (20,), jnp.float32) * 0.1,
        "fc1_w": jax.random.normal(ks[4], (50, 320), jnp.float32) * 0.1,
        "fc1_b": jax.random.normal(ks[5], (50,), jnp.float32) * 0.1,
        "fc2_w": jax.random.normal(ks[6], (10, 50), jnp.float32) * 0.1,
        "fc2_b": jax.random.normal(ks[7], (10,), jnp.float32) * 0.1,
    }


def net_forward_ref(params, x):
    """Pure-JAX f32 reference (PyTorch semantics, eval mode)."""
    def conv(x, w, b):
        y = jax.lax.conv_general_dilated(
            x, w, (1, 1), "VALID", dimension_numbers=("NCHW", "OIHW", "NCHW"))
        return y + b.reshape(1, -1, 1, 1)

    def pool_relu(x):
        B, C, H, W = x.shape
        y = x.reshape(B, C, H // 2, 2, W // 2, 2).max(axis=(3, 5))
        return jnp.maximum(y, 0.0)

    x = pool_relu(conv(x, params["conv1_w"], params["conv1_b"]))
    x = pool_relu(conv(x, params["conv2_w"], params["conv2_b"]))
    x = x.reshape(-1, 320)
    x = jnp.maximum(x @ params["fc1_w"].T + params["fc1_b"], 0.0)
    x = x @ params["fc2_w"].T + params["fc2_b"]
    return jax.nn.log_softmax(x, axis=1)


if __name__ == "__main__":
    key = jax.random.PRNGKey(0)
    pkey, xkey, xkey2 = jax.random.split(key, 3)
    params = init_params(pkey)
    prep = prepare_params(params)

    # Small MNIST-shaped batch (the module's view(-1, 320) hard-codes 1x28x28 inputs).
    x_small = jax.random.normal(xkey, (2, 1, 28, 28), jnp.float32)
    out_small = jax.block_until_ready(net_forward(prep, x_small))
    ref_small = net_forward_ref(params, x_small)
    # bf16 matmul operands with f32 accumulation -> loosened tolerance
    np.testing.assert_allclose(np.asarray(out_small), np.asarray(ref_small),
                               rtol=5e-2, atol=5e-2)
    assert out_small.shape == (2, 10)

    # Larger batch exercising the batch-blocked grid (2 blocks of TB=128).
    x_big = jax.random.normal(xkey2, (256, 1, 28, 28), jnp.float32)
    out_big = jax.block_until_ready(net_forward(prep, x_big))
    ref_big = net_forward_ref(params, x_big)
    np.testing.assert_allclose(np.asarray(out_big), np.asarray(ref_big),
                               rtol=5e-2, atol=5e-2)

    print("KERNEL_OK")
</pallas_src>

<mosaic_0001>
module attributes {stable_mosaic.version = 11 : i64} {
  func.func @_fused_net_kernel(%arg0: i32, %arg1: memref<112x112xbf16, #tpu.memory_space<vmem>>, %arg2: memref<4x2x112x128xbf16, #tpu.memory_space<vmem>>, %arg3: memref<4x2x112x128xbf16, #tpu.memory_space<vmem>>, %arg4: memref<1x128xf32, #tpu.memory_space<vmem>>, %arg5: memref<5x2x128x128xbf16, #tpu.memory_space<vmem>>, %arg6: memref<1x128xf32, #tpu.memory_space<vmem>>, %arg7: memref<4x128x64xbf16, #tpu.memory_space<vmem>>, %arg8: memref<1x64xf32, #tpu.memory_space<vmem>>, %arg9: memref<64x128xbf16, #tpu.memory_space<vmem>>, %arg10: memref<1x128xf32, #tpu.memory_space<vmem>>, %arg11: memref<16x128xf32, #tpu.memory_space<vmem>>) attributes {dimension_semantics = [#tpu.dimension_semantics<parallel>], iteration_bounds = array<i64: 1>, scalar_prefetch = 0 : i64, scratch_operands = 0 : i64, tpu.core_type = #tpu.core_type<tc>, window_params = [{transform_indices = @transform_0, window_bounds = array<i64: 112, 112>}, {pipeline_mode = #tpu.pipeline_mode<synchronous>, transform_indices = @transform_1, window_bounds = array<i64: 4, 2, 112, 128>}, {pipeline_mode = #tpu.pipeline_mode<synchronous>, transform_indices = @transform_2, window_bounds = array<i64: 4, 2, 112, 128>}, {pipeline_mode = #tpu.pipeline_mode<synchronous>, transform_indices = @transform_3, window_bounds = array<i64: 1, 128>}, {pipeline_mode = #tpu.pipeline_mode<synchronous>, transform_indices = @transform_4, window_bounds = array<i64: 5, 2, 128, 128>}, {pipeline_mode = #tpu.pipeline_mode<synchronous>, transform_indices = @transform_5, window_bounds = array<i64: 1, 128>}, {pipeline_mode = #tpu.pipeline_mode<synchronous>, transform_indices = @transform_6, window_bounds = array<i64: 4, 128, 64>}, {pipeline_mode = #tpu.pipeline_mode<synchronous>, transform_indices = @transform_7, window_bounds = array<i64: 1, 64>}, {pipeline_mode = #tpu.pipeline_mode<synchronous>, transform_indices = @transform_8, window_bounds = array<i64: 64, 128>}, {pipeline_mode = #tpu.pipeline_mode<synchronous>, transform_indices = @transform_9, window_bounds = array<i64: 1, 128>}, {transform_indices = @transform_10, window_bounds = array<i64: 16, 128>}]} {
    %c0 = arith.constant 0 : index
    %c0_0 = arith.constant 0 : index
    %0 = vector.load %arg1[%c0, %c0_0] : memref<112x112xbf16, #tpu.memory_space<vmem>>, vector<96x112xbf16>
    %c16 = arith.constant 16 : index
    %c0_1 = arith.constant 0 : index
    %1 = vector.load %arg1[%c16, %c0_1] : memref<112x112xbf16, #tpu.memory_space<vmem>>, vector<96x112xbf16>
    %c0_2 = arith.constant 0 : index
    %c0_3 = arith.constant 0 : index
    %c0_4 = arith.constant 0 : index
    %c0_5 = arith.constant 0 : index
    %2 = vector.load %arg2[%c0_2, %c0_3, %c0_4, %c0_5] : memref<4x2x112x128xbf16, #tpu.memory_space<vmem>>, vector<1x1x112x128xbf16>
    %3 = vector.shape_cast %2 : vector<1x1x112x128xbf16> to vector<112x128xbf16>
    %cst = arith.constant dense<0.000000e+00> : vector<96x128xf32>
    %4 = tpu.matmul %0, %3, %cst {dimension_numbers = #tpu.dot_dimension_numbers<[1], [0], [0], [1], [0, 0, 1, 1], [], []>} : vector<96x112xbf16>, vector<112x128xbf16>, vector<96x128xf32> -> vector<96x128xf32>
    %c0_6 = arith.constant 0 : index
    %c0_7 = arith.constant 0 : index
    %c0_8 = arith.constant 0 : index
    %c0_9 = arith.constant 0 : index
    %5 = vector.load %arg3[%c0_6, %c0_7, %c0_8, %c0_9] : memref<4x2x112x128xbf16, #tpu.memory_space<vmem>>, vector<1x1x112x128xbf16>
    %6 = vector.shape_cast %5 : vector<1x1x112x128xbf16> to vector<112x128xbf16>
    %cst_10 = arith.constant dense<0.000000e+00> : vector<96x128xf32>
    %7 = tpu.matmul %1, %6, %cst_10 {dimension_numbers = #tpu.dot_dimension_numbers<[1], [0], [0], [1], [0, 0, 1, 1], [], []>} : vector<96x112xbf16>, vector<112x128xbf16>, vector<96x128xf32> -> vector<96x128xf32>
    %8 = arith.addf %4, %7 : vector<96x128xf32>
    %c0_11 = arith.constant 0 : index
    %c1 = arith.constant 1 : index
    %c0_12 = arith.constant 0 : index
    %c0_13 = arith.constant 0 : index
    %9 = vector.load %arg2[%c0_11, %c1, %c0_12, %c0_13] : memref<4x2x112x128xbf16, #tpu.memory_space<vmem>>, vector<1x1x112x128xbf16>
    %10 = vector.shape_cast %9 : vector<1x1x112x128xbf16> to vector<112x128xbf16>
    %cst_14 = arith.constant dense<0.000000e+00> : vector<96x128xf32>
    %11 = tpu.matmul %0, %10, %cst_14 {dimension_numbers = #tpu.dot_dimension_numbers<[1], [0], [0], [1], [0, 0, 1, 1], [], []>} : vector<96x112xbf16>, vector<112x128xbf16>, vector<96x128xf32> -> vector<96x128xf32>
    %c0_15 = arith.constant 0 : index
    %c1_16 = arith.constant 1 : index
    %c0_17 = arith.constant 0 : index
    %c0_18 = arith.constant 0 : index
    %12 = vector.load %arg3[%c0_15, %c1_16, %c0_17, %c0_18] : memref<4x2x112x128xbf16, #tpu.memory_space<vmem>>, vector<1x1x112x128xbf16>
    %13 = vector.shape_cast %12 : vector<1x1x112x128xbf16> to vector<112x128xbf16>
    %cst_19 = arith.constant dense<0.000000e+00> : vector<96x128xf32>
    %14 = tpu.matmul %1, %13, %cst_19 {dimension_numbers = #tpu.dot_dimension_numbers<[1], [0], [0], [1], [0, 0, 1, 1], [], []>} : vector<96x112xbf16>, vector<112x128xbf16>, vector<96x128xf32> -> vector<96x128xf32>
    %15 = arith.addf %11, %14 : vector<96x128xf32>
    %16 = arith.maximumf %8, %15 : vector<96x128xf32>
    %c1_20 = arith.constant 1 : index
    %c0_21 = arith.constant 0 : index
    %c0_22 = arith.constant 0 : index
    %c0_23 = arith.constant 0 : index
    %17 = vector.load %arg2[%c1_20, %c0_21, %c0_22, %c0_23] : memref<4x2x112x128xbf16, #tpu.memory_space<vmem>>, vector<1x1x112x128xbf16>
    %18 = vector.shape_cast %17 : vector<1x1x112x128xbf16> to vector<112x128xbf16>
    %cst_24 = arith.constant dense<0.000000e+00> : vector<96x128xf32>
    %19 = tpu.matmul %0, %18, %cst_24 {dimension_numbers = #tpu.dot_dimension_numbers<[1], [0], [0], [1], [0, 0, 1, 1], [], []>} : vector<96x112xbf16>, vector<112x128xbf16>, vector<96x128xf32> -> vector<96x128xf32>
    %c1_25 = arith.constant 1 : index
    %c0_26 = arith.constant 0 : index
    %c0_27 = arith.constant 0 : index
    %c0_28 = arith.constant 0 : index
    %20 = vector.load %arg3[%c1_25, %c0_26, %c0_27, %c0_28] : memref<4x2x112x128xbf16, #tpu.memory_space<vmem>>, vector<1x1x112x128xbf16>
    %21 = vector.shape_cast %20 : vector<1x1x112x128xbf16> to vector<112x128xbf16>
    %cst_29 = arith.constant dense<0.000000e+00> : vector<96x128xf32>
    %22 = tpu.matmul %1, %21, %cst_29 {dimension_numbers = #tpu.dot_dimension_numbers<[1], [0], [0], [1], [0, 0, 1, 1], [], []>} : vector<96x112xbf16>, vector<112x128xbf16>, vector<96x128xf32> -> vector<96x128xf32>
    %23 = arith.addf %19, %22 : vector<96x128xf32>
    %24 = arith.maximumf %16, %23 : vector<96x128xf32>
    %c1_30 = arith.constant 1 : index
    %c1_31 = arith.constant 1 : index
    %c0_32 = arith.constant 0 : index
    %c0_33 = arith.constant 0 : index
    %25 = vector.load %arg2[%c1_30, %c1_31, %c0_32, %c0_33] : memref<4x2x112x128xbf16, #tpu.memory_space<vmem>>, vector<1x1x112x128xbf16>
    %26 = vector.shape_cast %25 : vector<1x1x112x128xbf16> to vector<112x128xbf16>
    %cst_34 = arith.constant dense<0.000000e+00> : vector<96x128xf32>
    %27 = tpu.matmul %0, %26, %cst_34 {dimension_numbers = #tpu.dot_dimension_numbers<[1], [0], [0], [1], [0, 0, 1, 1], [], []>} : vector<96x112xbf16>, vector<112x128xbf16>, vector<96x128xf32> -> vector<96x128xf32>
    %c1_35 = arith.constant 1 : index
    %c1_36 = arith.constant 1 : index
    %c0_37 = arith.constant 0 : index
    %c0_38 = arith.constant 0 : index
    %28 = vector.load %arg3[%c1_35, %c1_36, %c0_37, %c0_38] : memref<4x2x112x128xbf16, #tpu.memory_space<vmem>>, vector<1x1x112x128xbf16>
    %29 = vector.shape_cast %28 : vector<1x1x112x128xbf16> to vector<112x128xbf16>
    %cst_39 = arith.constant dense<0.000000e+00> : vector<96x128xf32>
    %30 = tpu.matmul %1, %29, %cst_39 {dimension_numbers = #tpu.dot_dimension_numbers<[1], [0], [0], [1], [0, 0, 1, 1], [], []>} : vector<96x112xbf16>, vector<112x128xbf16>, vector<96x128xf32> -> vector<96x128xf32>
    %31 = arith.addf %27, %30 : vector<96x128xf32>
    %32 = arith.maximumf %24, %31 : vector<96x128xf32>
    %c0_40 = arith.constant 0 : index
    %c0_41 = arith.constant 0 : index
    %33 = vector.load %arg4[%c0_40, %c0_41] : memref<1x128xf32, #tpu.memory_space<vmem>>, vector<1x128xf32>
    %34 = vector.broadcast %33 : vector<1x128xf32> to vector<96x128xf32>
    %35 = arith.addf %32, %34 : vector<96x128xf32>
    %cst_42 = arith.constant 0.000000e+00 : f32
    %36 = vector.broadcast %cst_42 : f32 to vector<96x128xf32>
    %37 = arith.maximumf %35, %36 : vector<96x128xf32>
    %38 = arith.truncf %37 : vector<96x128xf32> to vector<96x128xbf16>
    %c2 = arith.constant 2 : index
    %c0_43 = arith.constant 0 : index
    %c0_44 = arith.constant 0 : index
    %c0_45 = arith.constant 0 : index
    %39 = vector.load %arg2[%c2, %c0_43, %c0_44, %c0_45] : memref<4x2x112x128xbf16, #tpu.memory_space<vmem>>, vector<1x1x112x128xbf16>
    %40 = vector.shape_cast %39 : vector<1x1x112x128xbf16> to vector<112x128xbf16>
    %cst_46 = arith.constant dense<0.000000e+00> : vector<96x128xf32>
    %41 = tpu.matmul %0, %40, %cst_46 {dimension_numbers = #tpu.dot_dimension_numbers<[1], [0], [0], [1], [0, 0, 1, 1], [], []>} : vector<96x112xbf16>, vector<112x128xbf16>, vector<96x128xf32> -> vector<96x128xf32>
    %c2_47 = arith.constant 2 : index
    %c0_48 = arith.constant 0 : index
    %c0_49 = arith.constant 0 : index
    %c0_50 = arith.constant 0 : index
    %42 = vector.load %arg3[%c2_47, %c0_48, %c0_49, %c0_50] : memref<4x2x112x128xbf16, #tpu.memory_space<vmem>>, vector<1x1x112x128xbf16>
    %43 = vector.shape_cast %42 : vector<1x1x112x128xbf16> to vector<112x128xbf16>
    %cst_51 = arith.constant dense<0.000000e+00> : vector<96x128xf32>
    %44 = tpu.matmul %1, %43, %cst_51 {dimension_numbers = #tpu.dot_dimension_numbers<[1], [0], [0], [1], [0, 0, 1, 1], [], []>} : vector<96x112xbf16>, vector<112x128xbf16>, vector<96x128xf32> -> vector<96x128xf32>
    %45 = arith.addf %41, %44 : vector<96x128xf32>
    %c2_52 = arith.constant 2 : index
    %c1_53 = arith.constant 1 : index
    %c0_54 = arith.constant 0 : index
    %c0_55 = arith.constant 0 : index
    %46 = vector.load %arg2[%c2_52, %c1_53, %c0_54, %c0_55] : memref<4x2x112x128xbf16, #tpu.memory_space<vmem>>, vector<1x1x112x128xbf16>
    %47 = vector.shape_cast %46 : vector<1x1x112x128xbf16> to vector<112x128xbf16>
    %cst_56 = arith.constant dense<0.000000e+00> : vector<96x128xf32>
    %48 = tpu.matmul %0, %47, %cst_56 {dimension_numbers = #tpu.dot_dimension_numbers<[1], [0], [0], [1], [0, 0, 1, 1], [], []>} : vector<96x112xbf16>, vector<112x128xbf16>, vector<96x128xf32> -> vector<96x128xf32>
    %c2_57 = arith.constant 2 : index
    %c1_58 = arith.constant 1 : index
    %c0_59 = arith.constant 0 : index
    %c0_60 = arith.constant 0 : index
    %49 = vector.load %arg3[%c2_57, %c1_58, %c0_59, %c0_60] : memref<4x2x112x128xbf16, #tpu.memory_space<vmem>>, vector<1x1x112x128xbf16>
    %50 = vector.shape_cast %49 : vector<1x1x112x128xbf16> to vector<112x128xbf16>
    %cst_61 = arith.constant dense<0.000000e+00> : vector<96x128xf32>
    %51 = tpu.matmul %1, %50, %cst_61 {dimension_numbers = #tpu.dot_dimension_numbers<[1], [0], [0], [1], [0, 0, 1, 1], [], []>} : vector<96x112xbf16>, vector<112x128xbf16>, vector<96x128xf32> -> vector<96x128xf32>
    %52 = arith.addf %48, %51 : vector<96x128xf32>
    %53 = arith.maximumf %45, %52 : vector<96x128xf32>
    %c3 = arith.constant 3 : index
    %c0_62 = arith.constant 0 : index
    %c0_63 = arith.constant 0 : index
    %c0_64 = arith.constant 0 : index
    %54 = vector.load %arg2[%c3, %c0_62, %c0_63, %c0_64] : memref<4x2x112x128xbf16, #tpu.memory_space<vmem>>, vector<1x1x112x128xbf16>
    %55 = vector.shape_cast %54 : vector<1x1x112x128xbf16> to vector<112x128xbf16>
    %cst_65 = arith.constant dense<0.000000e+00> : vector<96x128xf32>
    %56 = tpu.matmul %0, %55, %cst_65 {dimension_numbers = #tpu.dot_dimension_numbers<[1], [0], [0], [1], [0, 0, 1, 1], [], []>} : vector<96x112xbf16>, vector<112x128xbf16>, vector<96x128xf32> -> vector<96x128xf32>
    %c3_66 = arith.constant 3 : index
    %c0_67 = arith.constant 0 : index
    %c0_68 = arith.constant 0 : index
    %c0_69 = arith.constant 0 : index
    %57 = vector.load %arg3[%c3_66, %c0_67, %c0_68, %c0_69] : memref<4x2x112x128xbf16, #tpu.memory_space<vmem>>, vector<1x1x112x128xbf16>
    %58 = vector.shape_cast %57 : vector<1x1x112x128xbf16> to vector<112x128xbf16>
    %cst_70 = arith.constant dense<0.000000e+00> : vector<96x128xf32>
    %59 = tpu.matmul %1, %58, %cst_70 {dimension_numbers = #tpu.dot_dimension_numbers<[1], [0], [0], [1], [0, 0, 1, 1], [], []>} : vector<96x112xbf16>, vector<112x128xbf16>, vector<96x128xf32> -> vector<96x128xf32>
    %60 = arith.addf %56, %59 : vector<96x128xf32>
    %61 = arith.maximumf %53, %60 : vector<96x128xf32>
    %c3_71 = arith.constant 3 : index
    %c1_72 = arith.constant 1 : index
    %c0_73 = arith.constant 0 : index
    %c0_74 = arith.constant 0 : index
    %62 = vector.load %arg2[%c3_71, %c1_72, %c0_73, %c0_74] : memref<4x2x112x128xbf16, #tpu.memory_space<vmem>>, vector<1x1x112x128xbf16>
    %63 = vector.shape_cast %62 : vector<1x1x112x128xbf16> to vector<112x128xbf16>
    %cst_75 = arith.constant dense<0.000000e+00> : vector<96x128xf32>
    %64 = tpu.matmul %0, %63, %cst_75 {dimension_numbers = #tpu.dot_dimension_numbers<[1], [0], [0], [1], [0, 0, 1, 1], [], []>} : vector<96x112xbf16>, vector<112x128xbf16>, vector<96x128xf32> -> vector<96x128xf32>
    %c3_76 = arith.constant 3 : index
    %c1_77 = arith.constant 1 : index
    %c0_78 = arith.constant 0 : index
    %c0_79 = arith.constant 0 : index
    %65 = vector.load %arg3[%c3_76, %c1_77, %c0_78, %c0_79] : memref<4x2x112x128xbf16, #tpu.memory_space<vmem>>, vector<1x1x112x128xbf16>
    %66 = vector.shape_cast %65 : vector<1x1x112x128xbf16> to vector<112x128xbf16>
    %cst_80 = arith.constant dense<0.000000e+00> : vector<96x128xf32>
    %67 = tpu.matmul %1, %66, %cst_80 {dimension_numbers = #tpu.dot_dimension_numbers<[1], [0], [0], [1], [0, 0, 1, 1], [], []>} : vector<96x112xbf16>, vector<112x128xbf16>, vector<96x128xf32> -> vector<96x128xf32>
    %68 = arith.addf %64, %67 : vector<96x128xf32>
    %69 = arith.maximumf %61, %68 : vector<96x128xf32>
    %c0_81 = arith.constant 0 : index
    %c0_82 = arith.constant 0 : index
    %70 = vector.load %arg4[%c0_81, %c0_82] : memref<1x128xf32, #tpu.memory_space<vmem>>, vector<1x128xf32>
    %71 = vector.broadcast %70 : vector<1x128xf32> to vector<96x128xf32>
    %72 = arith.addf %69, %71 : vector<96x128xf32>
    %cst_83 = arith.constant 0.000000e+00 : f32
    %73 = vector.broadcast %cst_83 : f32 to vector<96x128xf32>
    %74 = arith.maximumf %72, %73 : vector<96x128xf32>
    %75 = arith.truncf %74 : vector<96x128xf32> to vector<96x128xbf16>
    %76 = vector.extract_strided_slice %38 {offsets = [0, 0], sizes = [64, 128], strides = [1, 1]} : vector<96x128xbf16> to vector<64x128xbf16>
    %c0_84 = arith.constant 0 : index
    %c0_85 = arith.constant 0 : index
    %c0_86 = arith.constant 0 : index
    %c0_87 = arith.constant 0 : index
    %77 = vector.load %arg5[%c0_84, %c0_85, %c0_86, %c0_87] : memref<5x2x128x128xbf16, #tpu.memory_space<vmem>>, vector<1x1x128x128xbf16>
    %78 = vector.shape_cast %77 : vector<1x1x128x128xbf16> to vector<128x128xbf16>
    %cst_88 = arith.constant dense<0.000000e+00> : vector<64x128xf32>
    %79 = tpu.matmul %76, %78, %cst_88 {dimension_numbers = #tpu.dot_dimension_numbers<[1], [0], [0], [1], [0, 0, 1, 1], [], []>} : vector<64x128xbf16>, vector<128x128xbf16>, vector<64x128xf32> -> vector<64x128xf32>
    %80 = vector.extract_strided_slice %75 {offsets = [0, 0], sizes = [64, 128], strides = [1, 1]} : vector<96x128xbf16> to vector<64x128xbf16>
    %c1_89 = arith.constant 1 : index
    %c0_90 = arith.constant 0 : index
    %c0_91 = arith.constant 0 : index
    %c0_92 = arith.constant 0 : index
    %81 = vector.load %arg5[%c1_89, %c0_90, %c0_91, %c0_92] : memref<5x2x128x128xbf16, #tpu.memory_space<vmem>>, vector<1x1x128x128xbf16>
    %82 = vector.shape_cast %81 : vector<1x1x128x128xbf16> to vector<128x128xbf16>
    %cst_93 = arith.constant dense<0.000000e+00> : vector<64x128xf32>
    %83 = tpu.matmul %80, %82, %cst_93 {dimension_numbers = #tpu.dot_dimension_numbers<[1], [0], [0], [1], [0, 0, 1, 1], [], []>} : vector<64x128xbf16>, vector<128x128xbf16>, vector<64x128xf32> -> vector<64x128xf32>
    %84 = arith.addf %79, %83 : vector<64x128xf32>
    %85 = vector.extract_strided_slice %38 {offsets = [16, 0], sizes = [64, 128], strides = [1, 1]} : vector<96x128xbf16> to vector<64x128xbf16>
    %c2_94 = arith.constant 2 : index
    %c0_95 = arith.constant 0 : index
    %c0_96 = arith.constant 0 : index
    %c0_97 = arith.constant 0 : index
    %86 = vector.load %arg5[%c2_94, %c0_95, %c0_96, %c0_97] : memref<5x2x128x128xbf16, #tpu.memory_space<vmem>>, vector<1x1x128x128xbf16>
    %87 = vector.shape_cast %86 : vector<1x1x128x128xbf16> to vector<128x128xbf16>
    %cst_98 = arith.constant dense<0.000000e+00> : vector<64x128xf32>
    %88 = tpu.matmul %85, %87, %cst_98 {dimension_numbers = #tpu.dot_dimension_numbers<[1], [0], [0], [1], [0, 0, 1, 1], [], []>} : vector<64x128xbf16>, vector<128x128xbf16>, vector<64x128xf32> -> vector<64x128xf32>
    %89 = arith.addf %84, %88 : vector<64x128xf32>
    %90 = vector.extract_strided_slice %75 {offsets = [16, 0], sizes = [64, 128], strides = [1, 1]} : vector<96x128xbf16> to vector<64x128xbf16>
    %c3_99 = arith.constant 3 : index
    %c0_100 = arith.constant 0 : index
    %c0_101 = arith.constant 0 : index
    %c0_102 = arith.constant 0 : index
    %91 = vector.load %arg5[%c3_99, %c0_100, %c0_101, %c0_102] : memref<5x2x128x128xbf16, #tpu.memory_space<vmem>>, vector<1x1x128x128xbf16>
    %92 = vector.shape_cast %91 : vector<1x1x128x128xbf16> to vector<128x128xbf16>
    %cst_103 = arith.constant dense<0.000000e+00> : vector<64x128xf32>
    %93 = tpu.matmul %90, %92, %cst_103 {dimension_numbers = #tpu.dot_dimension_numbers<[1], [0], [0], [1], [0, 0, 1, 1], [], []>} : vector<64x128xbf16>, vector<128x128xbf16>, vector<64x128xf32> -> vector<64x128xf32>
    %94 = arith.addf %89, %93 : vector<64x128xf32>
    %95 = vector.extract_strided_slice %38 {offsets = [32, 0], sizes = [64, 128], strides = [1, 1]} : vector<96x128xbf16> to vector<64x128xbf16>
    %c4 = arith.constant 4 : index
    %c0_104 = arith.constant 0 : index
    %c0_105 = arith.constant 0 : index
    %c0_106 = arith.constant 0 : index
    %96 = vector.load %arg5[%c4, %c0_104, %c0_105, %c0_106] : memref<5x2x128x128xbf16, #tpu.memory_space<vmem>>, vector<1x1x128x128xbf16>
    %97 = vector.shape_cast %96 : vector<1x1x128x128xbf16> to vector<128x128xbf16>
    %cst_107 = arith.constant dense<0.000000e+00> : vector<64x128xf32>
    %98 = tpu.matmul %95, %97, %cst_107 {dimension_numbers = #tpu.dot_dimension_numbers<[1], [0], [0], [1], [0, 0, 1, 1], [], []>} : vector<64x128xbf16>, vector<128x128xbf16>, vector<64x128xf32> -> vector<64x128xf32>
    %99 = arith.addf %94, %98 : vector<64x128xf32>
    %100 = vector.extract_strided_slice %38 {offsets = [0, 0], sizes = [64, 128], strides = [1, 1]} : vector<96x128xbf16> to vector<64x128xbf16>
    %c0_108 = arith.constant 0 : index
    %c1_109 = arith.constant 1 : index
    %c0_110 = arith.constant 0 : index
    %c0_111 = arith.constant 0 : index
    %101 = vector.load %arg5[%c0_108, %c1_109, %c0_110, %c0_111] : memref<5x2x128x128xbf16, #tpu.memory_space<vmem>>, vector<1x1x128x128xbf16>
    %102 = vector.shape_cast %101 : vector<1x1x128x128xbf16> to vector<128x128xbf16>
    %cst_112 = arith.constant dense<0.000000e+00> : vector<64x128xf32>
    %103 = tpu.matmul %100, %102, %cst_112 {dimension_numbers = #tpu.dot_dimension_numbers<[1], [0], [0], [1], [0, 0, 1, 1], [], []>} : vector<64x128xbf16>, vector<128x128xbf16>, vector<64x128xf32> -> vector<64x128xf32>
    %104 = vector.extract_strided_slice %75 {offsets = [0, 0], sizes = [64, 128], strides = [1, 1]} : vector<96x128xbf16> to vector<64x128xbf16>
    %c1_113 = arith.constant 1 : index
    %c1_114 = arith.constant 1 : index
    %c0_115 = arith.constant 0 : index
    %c0_116 = arith.constant 0 : index
    %105 = vector.load %arg5[%c1_113, %c1_114, %c0_115, %c0_116] : memref<5x2x128x128xbf16, #tpu.memory_space<vmem>>, vector<1x1x128x128xbf16>
    %106 = vector.shape_cast %105 : vector<1x1x128x128xbf16> to vector<128x128xbf16>
    %cst_117 = arith.constant dense<0.000000e+00> : vector<64x128xf32>
    %107 = tpu.matmul %104, %106, %cst_117 {dimension_numbers = #tpu.dot_dimension_numbers<[1], [0], [0], [1], [0, 0, 1, 1], [], []>} : vector<64x128xbf16>, vector<128x128xbf16>, vector<64x128xf32> -> vector<64x128xf32>
    %108 = arith.addf %103, %107 : vector<64x128xf32>
    %109 = vector.extract_strided_slice %38 {offsets = [16, 0], sizes = [64, 128], strides = [1, 1]} : vector<96x128xbf16> to vector<64x128xbf16>
    %c2_118 = arith.constant 2 : index
    %c1_119 = arith.constant 1 : index
    %c0_120 = arith.constant 0 : index
    %c0_121 = arith.constant 0 : index
    %110 = vector.load %arg5[%c2_118, %c1_119, %c0_120, %c0_121] : memref<5x2x128x128xbf16, #tpu.memory_space<vmem>>, vector<1x1x128x128xbf16>
    %111 = vector.shape_cast %110 : vector<1x1x128x128xbf16> to vector<128x128xbf16>
    %cst_122 = arith.constant dense<0.000000e+00> : vector<64x128xf32>
    %112 = tpu.matmul %109, %111, %cst_122 {dimension_numbers = #tpu.dot_dimension_numbers<[1], [0], [0], [1], [0, 0, 1, 1], [], []>} : vector<64x128xbf16>, vector<128x128xbf16>, vector<64x128xf32> -> vector<64x128xf32>
    %113 = arith.addf %108, %112 : vector<64x128xf32>
    %114 = vector.extract_strided_slice %75 {offsets = [16, 0], sizes = [64, 128], strides = [1, 1]} : vector<96x128xbf16> to vector<64x128xbf16>
    %c3_123 = arith.constant 3 : index
    %c1_124 = arith.constant 1 : index
    %c0_125 = arith.constant 0 : index
    %c0_126 = arith.constant 0 : index
    %115 = vector.load %arg5[%c3_123, %c1_124, %c0_125, %c0_126] : memref<5x2x128x128xbf16, #tpu.memory_space<vmem>>, vector<1x1x128x128xbf16>
    %116 = vector.shape_cast %115 : vector<1x1x128x128xbf16> to vector<128x128xbf16>
    %cst_127 = arith.constant dense<0.000000e+00> : vector<64x128xf32>
    %117 = tpu.matmul %114, %116, %cst_127 {dimension_numbers = #tpu.dot_dimension_numbers<[1], [0], [0], [1], [0, 0, 1, 1], [], []>} : vector<64x128xbf16>, vector<128x128xbf16>, vector<64x128xf32> -> vector<64x128xf32>
    %118 = arith.addf %113, %117 : vector<64x128xf32>
    %119 = vector.extract_strided_slice %38 {offsets = [32, 0], sizes = [64, 128], strides = [1, 1]} : vector<96x128xbf16> to vector<64x128xbf16>
    %c4_128 = arith.constant 4 : index
    %c1_129 = arith.constant 1 : index
    %c0_130 = arith.constant 0 : index
    %c0_131 = arith.constant 0 : index
    %120 = vector.load %arg5[%c4_128, %c1_129, %c0_130, %c0_131] : memref<5x2x128x128xbf16, #tpu.memory_space<vmem>>, vector<1x1x128x128xbf16>
    %121 = vector.shape_cast %120 : vector<1x1x128x128xbf16> to vector<128x128xbf16>
    %cst_132 = arith.constant dense<0.000000e+00> : vector<64x128xf32>
    %122 = tpu.matmul %119, %121, %cst_132 {dimension_numbers = #tpu.dot_dimension_numbers<[1], [0], [0], [1], [0, 0, 1, 1], [], []>} : vector<64x128xbf16>, vector<128x128xbf16>, vector<64x128xf32> -> vector<64x128xf32>
    %123 = arith.addf %118, %122 : vector<64x128xf32>
    %124 = arith.maximumf %99, %123 : vector<64x128xf32>
    %125 = vector.extract_strided_slice %75 {offsets = [0, 0], sizes = [64, 128], strides = [1, 1]} : vector<96x128xbf16> to vector<64x128xbf16>
    %c0_133 = arith.constant 0 : index
    %c0_134 = arith.constant 0 : index
    %c0_135 = arith.constant 0 : index
    %c0_136 = arith.constant 0 : index
    %126 = vector.load %arg5[%c0_133, %c0_134, %c0_135, %c0_136] : memref<5x2x128x128xbf16, #tpu.memory_space<vmem>>, vector<1x1x128x128xbf16>
    %127 = vector.shape_cast %126 : vector<1x1x128x128xbf16> to vector<128x128xbf16>
    %cst_137 = arith.constant dense<0.000000e+00> : vector<64x128xf32>
    %128 = tpu.matmul %125, %127, %cst_137 {dimension_numbers = #tpu.dot_dimension_numbers<[1], [0], [0], [1], [0, 0, 1, 1], [], []>} : vector<64x128xbf16>, vector<128x128xbf16>, vector<64x128xf32> -> vector<64x128xf32>
    %129 = vector.extract_strided_slice %38 {offsets = [16, 0], sizes = [64, 128], strides = [1, 1]} : vector<96x128xbf16> to vector<64x128xbf16>
    %c1_138 = arith.constant 1 : index
    %c0_139 = arith.constant 0 : index
    %c0_140 = arith.constant 0 : index
    %c0_141 = arith.constant 0 : index
    %130 = vector.load %arg5[%c1_138, %c0_139, %c0_140, %c0_141] : memref<5x2x128x128xbf16, #tpu.memory_space<vmem>>, vector<1x1x128x128xbf16>
    %131 = vector.shape_cast %130 : vector<1x1x128x128xbf16> to vector<128x128xbf16>
    %cst_142 = arith.constant dense<0.000000e+00> : vector<64x128xf32>
    %132 = tpu.matmul %129, %131, %cst_142 {dimension_numbers = #tpu.dot_dimension_numbers<[1], [0], [0], [1], [0, 0, 1, 1], [], []>} : vector<64x128xbf16>, vector<128x128xbf16>, vector<64x128xf32> -> vector<64x128xf32>
    %133 = arith.addf %128, %132 : vector<64x128xf32>
    %134 = vector.extract_strided_slice %75 {offsets = [16, 0], sizes = [64, 128], strides = [1, 1]} : vector<96x128xbf16> to vector<64x128xbf16>
    %c2_143 = arith.constant 2 : index
    %c0_144 = arith.constant 0 : index
    %c0_145 = arith.constant 0 : index
    %c0_146 = arith.constant 0 : index
    %135 = vector.load %arg5[%c2_143, %c0_144, %c0_145, %c0_146] : memref<5x2x128x128xbf16, #tpu.memory_space<vmem>>, vector<1x1x128x128xbf16>
    %136 = vector.shape_cast %135 : vector<1x1x128x128xbf16> to vector<128x128xbf16>
    %cst_147 = arith.constant dense<0.000000e+00> : vector<64x128xf32>
    %137 = tpu.matmul %134, %136, %cst_147 {dimension_numbers = #tpu.dot_dimension_numbers<[1], [0], [0], [1], [0, 0, 1, 1], [], []>} : vector<64x128xbf16>, vector<128x128xbf16>, vector<64x128xf32> -> vector<64x128xf32>
    %138 = arith.addf %133, %137 : vector<64x128xf32>
    %139 = vector.extract_strided_slice %38 {offsets = [32, 0], sizes = [64, 128], strides = [1, 1]} : vector<96x128xbf16> to vector<64x128xbf16>
    %c3_148 = arith.constant 3 : index
    %c0_149 = arith.constant 0 : index
    %c0_150 = arith.constant 0 : index
    %c0_151 = arith.constant 0 : index
    %140 = vector.load %arg5[%c3_148, %c0_149, %c0_150, %c0_151] : memref<5x2x128x128xbf16, #tpu.memory_space<vmem>>, vector<1x1x128x128xbf16>
    %141 = vector.shape_cast %140 : vector<1x1x128x128xbf16> to vector<128x128xbf16>
    %cst_152 = arith.constant dense<0.000000e+00> : vector<64x128xf32>
    %142 = tpu.matmul %139, %141, %cst_152 {dimension_numbers = #tpu.dot_dimension_numbers<[1], [0], [0], [1], [0, 0, 1, 1], [], []>} : vector<64x128xbf16>, vector<128x128xbf16>, vector<64x128xf32> -> vector<64x128xf32>
    %143 = arith.addf %138, %142 : vector<64x128xf32>
    %144 = vector.extract_strided_slice %75 {offsets = [32, 0], sizes = [64, 128], strides = [1, 1]} : vector<96x128xbf16> to vector<64x128xbf16>
    %c4_153 = arith.constant 4 : index
    %c0_154 = arith.constant 0 : index
    %c0_155 = arith.constant 0 : index
    %c0_156 = arith.constant 0 : index
    %145 = vector.load %arg5[%c4_153, %c0_154, %c0_155, %c0_156] : memref<5x2x128x128xbf16, #tpu.memory_space<vmem>>, vector<1x1x128x128xbf16>
    %146 = vector.shape_cast %145 : vector<1x1x128x128xbf16> to vector<128x128xbf16>
    %cst_157 = arith.constant dense<0.000000e+00> : vector<64x128xf32>
    %147 = tpu.matmul %144, %146, %cst_157 {dimension_numbers = #tpu.dot_dimension_numbers<[1], [0], [0], [1], [0, 0, 1, 1], [], []>} : vector<64x128xbf16>, vector<128x128xbf16>, vector<64x128xf32> -> vector<64x128xf32>
    %148 = arith.addf %143, %147 : vector<64x128xf32>
    %149 = arith.maximumf %124, %148 : vector<64x128xf32>
    %150 = vector.extract_strided_slice %75 {offsets = [0, 0], sizes = [64, 128], strides = [1, 1]} : vector<96x128xbf16> to vector<64x128xbf16>
    %c0_158 = arith.constant 0 : index
    %c1_159 = arith.constant 1 : index
    %c0_160 = arith.constant 0 : index
    %c0_161 = arith.constant 0 : index
    %151 = vector.load %arg5[%c0_158, %c1_159, %c0_160, %c0_161] : memref<5x2x128x128xbf16, #tpu.memory_space<vmem>>, vector<1x1x128x128xbf16>
    %152 = vector.shape_cast %151 : vector<1x1x128x128xbf16> to vector<128x128xbf16>
    %cst_162 = arith.constant dense<0.000000e+00> : vector<64x128xf32>
    %153 = tpu.matmul %150, %152, %cst_162 {dimension_numbers = #tpu.dot_dimension_numbers<[1], [0], [0], [1], [0, 0, 1, 1], [], []>} : vector<64x128xbf16>, vector<128x128xbf16>, vector<64x128xf32> -> vector<64x128xf32>
    %154 = vector.extract_strided_slice %38 {offsets = [16, 0], sizes = [64, 128], strides = [1, 1]} : vector<96x128xbf16> to vector<64x128xbf16>
    %c1_163 = arith.constant 1 : index
    %c1_164 = arith.constant 1 : index
    %c0_165 = arith.constant 0 : index
    %c0_166 = arith.constant 0 : index
    %155 = vector.load %arg5[%c1_163, %c1_164, %c0_165, %c0_166] : memref<5x2x128x128xbf16, #tpu.memory_space<vmem>>, vector<1x1x128x128xbf16>
    %156 = vector.shape_cast %155 : vector<1x1x128x128xbf16> to vector<128x128xbf16>
    %cst_167 = arith.constant dense<0.000000e+00> : vector<64x128xf32>
    %157 = tpu.matmul %154, %156, %cst_167 {dimension_numbers = #tpu.dot_dimension_numbers<[1], [0], [0], [1], [0, 0, 1, 1], [], []>} : vector<64x128xbf16>, vector<128x128xbf16>, vector<64x128xf32> -> vector<64x128xf32>
    %158 = arith.addf %153, %157 : vector<64x128xf32>
    %159 = vector.extract_strided_slice %75 {offsets = [16, 0], sizes = [64, 128], strides = [1, 1]} : vector<96x128xbf16> to vector<64x128xbf16>
    %c2_168 = arith.constant 2 : index
    %c1_169 = arith.constant 1 : index
    %c0_170 = arith.constant 0 : index
    %c0_171 = arith.constant 0 : index
    %160 = vector.load %arg5[%c2_168, %c1_169, %c0_170, %c0_171] : memref<5x2x128x128xbf16, #tpu.memory_space<vmem>>, vector<1x1x128x128xbf16>
    %161 = vector.shape_cast %160 : vector<1x1x128x128xbf16> to vector<128x128xbf16>
    %cst_172 = arith.constant dense<0.000000e+00> : vector<64x128xf32>
    %162 = tpu.matmul %159, %161, %cst_172 {dimension_numbers = #tpu.dot_dimension_numbers<[1], [0], [0], [1], [0, 0, 1, 1], [], []>} : vector<64x128xbf16>, vector<128x128xbf16>, vector<64x128xf32> -> vector<64x128xf32>
    %163 = arith.addf %158, %162 : vector<64x128xf32>
    %164 = vector.extract_strided_slice %38 {offsets = [32, 0], sizes = [64, 128], strides = [1, 1]} : vector<96x128xbf16> to vector<64x128xbf16>
    %c3_173 = arith.constant 3 : index
    %c1_174 = arith.constant 1 : index
    %c0_175 = arith.constant 0 : index
    %c0_176 = arith.constant 0 : index
    %165 = vector.load %arg5[%c3_173, %c1_174, %c0_175, %c0_176] : memref<5x2x128x128xbf16, #tpu.memory_space<vmem>>, vector<1x1x128x128xbf16>
    %166 = vector.shape_cast %165 : vector<1x1x128x128xbf16> to vector<128x128xbf16>
    %cst_177 = arith.constant dense<0.000000e+00> : vector<64x128xf32>
    %167 = tpu.matmul %164, %166, %cst_177 {dimension_numbers = #tpu.dot_dimension_numbers<[1], [0], [0], [1], [0, 0, 1, 1], [], []>} : vector<64x128xbf16>, vector<128x128xbf16>, vector<64x128xf32> -> vector<64x128xf32>
    %168 = arith.addf %163, %167 : vector<64x128xf32>
    %169 = vector.extract_strided_slice %75 {offsets = [32, 0], sizes = [64, 128], strides = [1, 1]} : vector<96x128xbf16> to vector<64x128xbf16>
    %c4_178 = arith.constant 4 : index
    %c1_179 = arith.constant 1 : index
    %c0_180 = arith.constant 0 : index
    %c0_181 = arith.constant 0 : index
    %170 = vector.load %arg5[%c4_178, %c1_179, %c0_180, %c0_181] : memref<5x2x128x128xbf16, #tpu.memory_space<vmem>>, vector<1x1x128x128xbf16>
    %171 = vector.shape_cast %170 : vector<1x1x128x128xbf16> to vector<128x128xbf16>
    %cst_182 = arith.constant dense<0.000000e+00> : vector<64x128xf32>
    %172 = tpu.matmul %169, %171, %cst_182 {dimension_numbers = #tpu.dot_dimension_numbers<[1], [0], [0], [1], [0, 0, 1, 1], [], []>} : vector<64x128xbf16>, vector<128x128xbf16>, vector<64x128xf32> -> vector<64x128xf32>
    %173 = arith.addf %168, %172 : vector<64x128xf32>
    %174 = arith.maximumf %149, %173 : vector<64x128xf32>
    %c0_183 = arith.constant 0 : index
    %c0_184 = arith.constant 0 : index
    %175 = vector.load %arg6[%c0_183, %c0_184] : memref<1x128xf32, #tpu.memory_space<vmem>>, vector<1x128xf32>
    %176 = vector.broadcast %175 : vector<1x128xf32> to vector<64x128xf32>
    %177 = arith.addf %174, %176 : vector<64x128xf32>
    %cst_185 = arith.constant 0.000000e+00 : f32
    %178 = vector.broadcast %cst_185 : f32 to vector<64x128xf32>
    %179 = arith.maximumf %177, %178 : vector<64x128xf32>
    %180 = arith.truncf %179 : vector<64x128xf32> to vector<64x128xbf16>
    %181 = vector.extract_strided_slice %180 {offsets = [0, 0], sizes = [16, 128], strides = [1, 1]} : vector<64x128xbf16> to vector<16x128xbf16>
    %c0_186 = arith.constant 0 : index
    %c0_187 = arith.constant 0 : index
    %c0_188 = arith.constant 0 : index
    %182 = vector.load %arg7[%c0_186, %c0_187, %c0_188] : memref<4x128x64xbf16, #tpu.memory_space<vmem>>, vector<1x128x64xbf16>
    %183 = vector.shape_cast %182 : vector<1x128x64xbf16> to vector<128x64xbf16>
    %cst_189 = arith.constant dense<0.000000e+00> : vector<16x64xf32>
    %184 = tpu.matmul %181, %183, %cst_189 {dimension_numbers = #tpu.dot_dimension_numbers<[1], [0], [0], [1], [0, 0, 1, 1], [], []>} : vector<16x128xbf16>, vector<128x64xbf16>, vector<16x64xf32> -> vector<16x64xf32>
    %185 = vector.extract_strided_slice %180 {offsets = [16, 0], sizes = [16, 128], strides = [1, 1]} : vector<64x128xbf16> to vector<16x128xbf16>
    %c1_190 = arith.constant 1 : index
    %c0_191 = arith.constant 0 : index
    %c0_192 = arith.constant 0 : index
    %186 = vector.load %arg7[%c1_190, %c0_191, %c0_192] : memref<4x128x64xbf16, #tpu.memory_space<vmem>>, vector<1x128x64xbf16>
    %187 = vector.shape_cast %186 : vector<1x128x64xbf16> to vector<128x64xbf16>
    %cst_193 = arith.constant dense<0.000000e+00> : vector<16x64xf32>
    %188 = tpu.matmul %185, %187, %cst_193 {dimension_numbers = #tpu.dot_dimension_numbers<[1], [0], [0], [1], [0, 0, 1, 1], [], []>} : vector<16x128xbf16>, vector<128x64xbf16>, vector<16x64xf32> -> vector<16x64xf32>
    %189 = arith.addf %184, %188 : vector<16x64xf32>
    %190 = vector.extract_strided_slice %180 {offsets = [32, 0], sizes = [16, 128], strides = [1, 1]} : vector<64x128xbf16> to vector<16x128xbf16>
    %c2_194 = arith.constant 2 : index
    %c0_195 = arith.constant 0 : index
    %c0_196 = arith.constant 0 : index
    %191 = vector.load %arg7[%c2_194, %c0_195, %c0_196] : memref<4x128x64xbf16, #tpu.memory_space<vmem>>, vector<1x128x64xbf16>
    %192 = vector.shape_cast %191 : vector<1x128x64xbf16> to vector<128x64xbf16>
    %cst_197 = arith.constant dense<0.000000e+00> : vector<16x64xf32>
    %193 = tpu.matmul %190, %192, %cst_197 {dimension_numbers = #tpu.dot_dimension_numbers<[1], [0], [0], [1], [0, 0, 1, 1], [], []>} : vector<16x128xbf16>, vector<128x64xbf16>, vector<16x64xf32> -> vector<16x64xf32>
    %194 = arith.addf %189, %193 : vector<16x64xf32>
    %195 = vector.extract_strided_slice %180 {offsets = [48, 0], sizes = [16, 128], strides = [1, 1]} : vector<64x128xbf16> to vector<16x128xbf16>
    %c3_198 = arith.constant 3 : index
    %c0_199 = arith.constant 0 : index
    %c0_200 = arith.constant 0 : index
    %196 = vector.load %arg7[%c3_198, %c0_199, %c0_200] : memref<4x128x64xbf16, #tpu.memory_space<vmem>>, vector<1x128x64xbf16>
    %197 = vector.shape_cast %196 : vector<1x128x64xbf16> to vector<128x64xbf16>
    %cst_201 = arith.constant dense<0.000000e+00> : vector<16x64xf32>
    %198 = tpu.matmul %195, %197, %cst_201 {dimension_numbers = #tpu.dot_dimension_numbers<[1], [0], [0], [1], [0, 0, 1, 1], [], []>} : vector<16x128xbf16>, vector<128x64xbf16>, vector<16x64xf32> -> vector<16x64xf32>
    %199 = arith.addf %194, %198 : vector<16x64xf32>
    %c0_202 = arith.constant 0 : index
    %c0_203 = arith.constant 0 : index
    %200 = vector.load %arg8[%c0_202, %c0_203] : memref<1x64xf32, #tpu.memory_space<vmem>>, vector<1x64xf32>
    %201 = vector.broadcast %200 : vector<1x64xf32> to vector<16x64xf32>
    %202 = arith.addf %199, %201 : vector<16x64xf32>
    %cst_204 = arith.constant 0.000000e+00 : f32
    %203 = vector.broadcast %cst_204 : f32 to vector<16x64xf32>
    %204 = arith.maximumf %202, %203 : vector<16x64xf32>
    %205 = arith.truncf %204 : vector<16x64xf32> to vector<16x64xbf16>
    %c0_205 = arith.constant 0 : index
    %c0_206 = arith.constant 0 : index
    %206 = vector.load %arg9[%c0_205, %c0_206] : memref<64x128xbf16, #tpu.memory_space<vmem>>, vector<64x128xbf16>
    %cst_207 = arith.constant dense<0.000000e+00> : vector<16x128xf32>
    %207 = tpu.matmul %205, %206, %cst_207 {dimension_numbers = #tpu.dot_dimension_numbers<[1], [0], [0], [1], [0, 0, 1, 1], [], []>} : vector<16x64xbf16>, vector<64x128xbf16>, vector<16x128xf32> -> vector<16x128xf32>
    %c0_208 = arith.constant 0 : index
    %c0_209 = arith.constant 0 : index
    %208 = vector.load %arg10[%c0_208, %c0_209] : memref<1x128xf32, #tpu.memory_space<vmem>>, vector<1x128xf32>
    %209 = vector.broadcast %208 : vector<1x128xf32> to vector<16x128xf32>
    %210 = arith.addf %207, %209 : vector<16x128xf32>
    %cst_210 = arith.constant dense<0xFF800000> : vector<16xf32>
    %211 = vector.multi_reduction <maximumf>, %210, %cst_210 [1] : vector<16x128xf32> to vector<16xf32>
    %212 = vector.shape_cast %211 : vector<16xf32> to vector<16x1xf32>
    %213 = vector.broadcast %212 : vector<16x1xf32> to vector<16x128xf32>
    %214 = arith.subf %210, %213 : vector<16x128xf32>
    %215 = math.exp %214 : vector<16x128xf32>
    %cst_211 = arith.constant dense<0.000000e+00> : vector<16xf32>
    %216 = vector.multi_reduction <add>, %215, %cst_211 [1] : vector<16x128xf32> to vector<16xf32>
    %217 = vector.shape_cast %216 : vector<16xf32> to vector<16x1xf32>
    %218 = math.log %217 : vector<16x1xf32>
    %219 = vector.broadcast %218 : vector<16x1xf32> to vector<16x128xf32>
    %220 = arith.subf %214, %219 : vector<16x128xf32>
    %c0_212 = arith.constant 0 : index
    %c0_213 = arith.constant 0 : index
    %221 = vector.load %arg11[%c0_212, %c0_213] : memref<16x128xf32, #tpu.memory_space<vmem>>, vector<16x128xf32>
    tpu.vector_store %arg11[%c0_212, %c0_213], %220 {strides = array<i32>} : memref<16x128xf32, #tpu.memory_space<vmem>>, vector<16x128xf32>,
    return
  }
  func.func @transform_0(%arg0: i32) -> (i32, i32) {
    %c0_i32 = arith.constant 0 : i32
    %c0_i32_0 = arith.constant 0 : i32
    return %arg0, %c0_i32 : i32, i32
  }
  func.func @transform_1(%arg0: i32) -> (i32, i32, i32, i32) {
    %c0_i32 = arith.constant 0 : i32
    %c0_i32_0 = arith.constant 0 : i32
    %c0_i32_1 = arith.constant 0 : i32
    %c0_i32_2 = arith.constant 0 : i32
    %c0_i32_3 = arith.constant 0 : i32
    return %c0_i32, %c0_i32_0, %c0_i32_1, %c0_i32_2 : i32, i32, i32, i32
  }
  func.func @transform_2(%arg0: i32) -> (i32, i32, i32, i32) {
    %c0_i32 = arith.constant 0 : i32
    %c0_i32_0 = arith.constant 0 : i32
    %c0_i32_1 = arith.constant 0 : i32
    %c0_i32_2 = arith.constant 0 : i32
    %c0_i32_3 = arith.constant 0 : i32
    return %c0_i32, %c0_i32_0, %c0_i32_1, %c0_i32_2 : i32, i32, i32, i32
  }
  func.func @transform_3(%arg0: i32) -> (i32, i32) {
    %c0_i32 = arith.constant 0 : i32
    %c0_i32_0 = arith.constant 0 : i32
    %c0_i32_1 = arith.constant 0 : i32
    return %c0_i32, %c0_i32_0 : i32, i32
  }
  func.func @transform_4(%arg0: i32) -> (i32, i32, i32, i32) {
    %c0_i32 = arith.constant 0 : i32
    %c0_i32_0 = arith.constant 0 : i32
    %c0_i32_1 = arith.constant 0 : i32
    %c0_i32_2 = arith.constant 0 : i32
    %c0_i32_3 = arith.constant 0 : i32
    return %c0_i32, %c0_i32_0, %c0_i32_1, %c0_i32_2 : i32, i32, i32, i32
  }
  func.func @transform_5(%arg0: i32) -> (i32, i32) {
    %c0_i32 = arith.constant 0 : i32
    %c0_i32_0 = arith.constant 0 : i32
    %c0_i32_1 = arith.constant 0 : i32
    return %c0_i32, %c0_i32_0 : i32, i32
  }
  func.func @transform_6(%arg0: i32) -> (i32, i32, i32) {
    %c0_i32 = arith.constant 0 : i32
    %c0_i32_0 = arith.constant 0 : i32
    %c0_i32_1 = arith.constant 0 : i32
    %c0_i32_2 = arith.constant 0 : i32
    return %c0_i32, %c0_i32_0, %c0_i32_1 : i32, i32, i32
  }
  func.func @transform_7(%arg0: i32) -> (i32, i32) {
    %c0_i32 = arith.constant 0 : i32
    %c0_i32_0 = arith.constant 0 : i32
    %c0_i32_1 = arith.constant 0 : i32
    return %c0_i32, %c0_i32_0 : i32, i32
  }
  func.func @transform_8(%arg0: i32) -> (i32, i32) {
    %c0_i32 = arith.constant 0 : i32
    %c0_i32_0 = arith.constant 0 : i32
    %c0_i32_1 = arith.constant 0 : i32
    return %c0_i32, %c0_i32_0 : i32, i32
  }
  func.func @transform_9(%arg0: i32) -> (i32, i32) {
    %c0_i32 = arith.constant 0 : i32
    %c0_i32_0 = arith.constant 0 : i32
    %c0_i32_1 = arith.constant 0 : i32
    return %c0_i32, %c0_i32_0 : i32, i32
  }
  func.func @transform_10(%arg0: i32) -> (i32, i32) {
    %c0_i32 = arith.constant 0 : i32
    %c0_i32_0 = arith.constant 0 : i32
    return %arg0, %c0_i32 : i32, i32
  }
}

</mosaic_0001>

<llo_original>
// kernel: net_forward.1
$region0: #{net_forward.1}
  #allocation0 [shape = 'u32[]', space=smem, size = 0x4, offset = 0x4, fixed_abs, tag = 'smem constant byte address 0x4 - core index']
  #allocation1 [shape = 'u32[144,128]{1,0:T(1,128)}', space=vmem, size = 0x12000, scoped, tag = 'internal scratch']
  %s0 = inlined_call_operand.vmem [shape: bf16[112,112], index: 0, kind: input, shape index: {}]
  %s1 = inlined_call_operand.vmem [shape: bf16[4,2,112,128], index: 1, kind: input, shape index: {}]
  %s2 = inlined_call_operand.hbm [shape: bf16[4,2,112,128], index: 2, kind: input, shape index: {}]
  %s3 = inlined_call_operand.vmem [shape: f32[1,128], index: 3, kind: input, shape index: {}]
  %s4 = inlined_call_operand.vmem [shape: bf16[5,2,128,128], index: 4, kind: input, shape index: {}]
  %s5 = inlined_call_operand.vmem [shape: f32[1,128], index: 5, kind: input, shape index: {}]
  %s6 = inlined_call_operand.vmem [shape: bf16[4,128,64], index: 6, kind: input, shape index: {}]
  %s7 = inlined_call_operand.vmem [shape: f32[1,64], index: 7, kind: input, shape index: {}]
  %s8 = inlined_call_operand.vmem [shape: bf16[64,128], index: 8, kind: input, shape index: {}]
  %s9 = inlined_call_operand.vmem [shape: f32[1,128], index: 9, kind: input, shape index: {}]
  %s10 = inlined_call_operand.vmem [shape: f32[16,128], index: 10, kind: output, shape index: {}]
  %s11 = sld [smem:[#allocation0]]
  $region54: #{net_forward.1} parent=0
    _
  %s13 = ssub.s32 1, %s11
  %s14 = scalar_select 0, %s13, %s11
  $region1: #{net_forward.1} parent=0
    #allocation2 [shape = 'u8[229376]{0}', space=vmem, size = 0x38000, scoped, tag = 'input window, operand 2, single buffered']
    #allocation3 [shape = 's32[1]{0}', space=sflag, size = 0x4, scoped, tag = 'scoped memory for net_forward.1']
    %15 = vsyncpa [#allocation3], 0
    // Predicated region
    $region2: #{net_forward.1} parent=1 // pred_check
      _
    $region3: #{net_forward.1} parent=1 // pred_check_branch
      %17 = sbr.rel (0) target = $region5
    $region4: #{net_forward.1} parent=1 // pred_region
      _
    $region5: #{net_forward.1} parent=1 // pred_fallthru
      _
    // Predicated region
    $region6: #{net_forward.1} parent=1 // pred_check
      _
    $region7: #{net_forward.1} parent=1 // pred_check_branch
      %19 = sbr.rel (0) target = $region9
    $region8: #{net_forward.1} parent=1 // pred_region
      _
    $region9: #{net_forward.1} parent=1 // pred_fallthru
      _
    // Predicated region
    $region10: #{net_forward.1} parent=1 // pred_check
      _
    $region11: #{net_forward.1} parent=1 // pred_check_branch
      %21 = sbr.rel (0) target = $region13
    $region12: #{net_forward.1} parent=1 // pred_region
      %s23 = ssub.s32 7168, 7168
      %24 = vsyncadd [#allocation3], %s23
      %s25 = sshll.u32 [#allocation2], 4
      %s26 = int_to_ptr.vmem [resolvable:$true] %s25
      %31 = dma.hbm_to_vmem [thread:$0]  %s2, 7168, %s26, [#allocation3], 64, 64, 4
    $region13: #{net_forward.1} parent=1 // pred_fallthru
      _
    // Predicated region
    $region14: #{net_forward.1} parent=1 // pred_check
      _
    $region15: #{net_forward.1} parent=1 // pred_check_branch
      %33 = sbr.rel (0) target = $region17
    $region16: #{net_forward.1} parent=1 // pred_region
      _
    $region17: #{net_forward.1} parent=1 // pred_fallthru
      _
    // Predicated region
    $region18: #{net_forward.1} parent=1 // pred_check
      _
    $region19: #{net_forward.1} parent=1 // pred_check_branch
      %35 = sbr.rel (0) target = $region21
    $region20: #{net_forward.1} parent=1 // pred_region
      _
    $region21: #{net_forward.1} parent=1 // pred_fallthru
      _
    // Predicated region
    $region22: #{net_forward.1} parent=1 // pred_check
      _
    $region23: #{net_forward.1} parent=1 // pred_check_branch
      %37 = sbr.rel (0) target = $region25
    $region24: #{net_forward.1} parent=1 // pred_region
      _
    $region25: #{net_forward.1} parent=1 // pred_fallthru
      _
    // Predicated region
    $region26: #{net_forward.1} parent=1 // pred_check
      _
    $region27: #{net_forward.1} parent=1 // pred_check_branch
      %39 = sbr.rel (0) target = $region29
    $region28: #{net_forward.1} parent=1 // pred_region
      _
    $region29: #{net_forward.1} parent=1 // pred_fallthru
      _
    // Predicated region
    $region30: #{net_forward.1} parent=1 // pred_check
      _
    $region31: #{net_forward.1} parent=1 // pred_check_branch
      %41 = sbr.rel (0) target = $region33
    $region32: #{net_forward.1} parent=1 // pred_region
      _
    $region33: #{net_forward.1} parent=1 // pred_fallthru
      _
    // Predicated region
    $region34: #{net_forward.1} parent=1 // pred_check
      _
    $region35: #{net_forward.1} parent=1 // pred_check_branch
      %43 = sbr.rel (0) target = $region37
    $region36: #{net_forward.1} parent=1 // pred_region
      _
    $region37: #{net_forward.1} parent=1 // pred_fallthru
      _
    // Predicated region
    $region38: #{net_forward.1} parent=1 // pred_check
      _
    $region39: #{net_forward.1} parent=1 // pred_check_branch
      %45 = sbr.rel (0) target = $region41
    $region40: #{net_forward.1} parent=1 // pred_region
      _
    $region41: #{net_forward.1} parent=1 // pred_fallthru
      _
    // Predicated region
    $region42: #{net_forward.1} parent=1 // pred_check
      _
    $region43: #{net_forward.1} parent=1 // pred_check_branch
      %47 = sbr.rel (0) target = $region45
    $region44: #{net_forward.1} parent=1 // pred_region
      %48 = dma.done [#allocation3], 7168
    $region45: #{net_forward.1} parent=1 // pred_fallthru
      _
    %v50 = vld [vmem:[%s0] sm:$0xf]
    %v51 = vld [vmem:[%s0 + $0x4] sm:$0xf]
    %v52 = vld [vmem:[%s0 + $0x8] sm:$0xf]
    %v53 = vld [vmem:[%s0 + $0xc] sm:$0xf]
    %v54 = vld [vmem:[%s0 + $0x10] sm:$0xf]
    %v55 = vld [vmem:[%s0 + $0x14] sm:$0xf]
    %v56 = vld [vmem:[%s0 + $0x18] sm:$0xf]
    %v57 = vld [vmem:[%s0 + $0x1c] sm:$0xf]
    %v58 = vld [vmem:[%s0 + $0x20] sm:$0xf]
    %v59 = vld [vmem:[%s0 + $0x24] sm:$0xf]
    %v60 = vld [vmem:[%s0 + $0x28] sm:$0xf]
    %v61 = vld [vmem:[%s0 + $0x2c] sm:$0xf]
    %v62 = vld [vmem:[%s0 + $0x30] sm:$0xf]
    %v63 = vld [vmem:[%s0 + $0x34] sm:$0xf]
    %v64 = vld [vmem:[%s1] sm:$0xf]
    %v65 = vld [vmem:[%s1 + $0x4] sm:$0xf]
    %v66 = vld [vmem:[%s1 + $0x8] sm:$0xf]
    %v67 = vld [vmem:[%s1 + $0xc] sm:$0xf]
    %v68 = vld [vmem:[%s1 + $0x10] sm:$0xf]
    %v69 = vld [vmem:[%s1 + $0x14] sm:$0xf]
    %v70 = vld [vmem:[%s1 + $0x18] sm:$0xf]
    %v71 = vld [vmem:[%s1 + $0x1c] sm:$0xf]
    %v72 = vld [vmem:[%s1 + $0x20] sm:$0xf]
    %v73 = vld [vmem:[%s1 + $0x24] sm:$0xf]
    %v74 = vld [vmem:[%s1 + $0x28] sm:$0xf]
    %v75 = vld [vmem:[%s1 + $0x2c] sm:$0xf]
    %v76 = vld [vmem:[%s1 + $0x30] sm:$0xf]
    %v77 = vld [vmem:[%s1 + $0x34] sm:$0xf]
    %v78 = vld [vmem:[#allocation2] sm:$0xf]
    %v79 = vld [vmem:[#allocation2 + $0x4] sm:$0xf]
    %v80 = vld [vmem:[#allocation2 + $0x8] sm:$0xf]
    %v81 = vld [vmem:[#allocation2 + $0xc] sm:$0xf]
    %v82 = vld [vmem:[#allocation2 + $0x10] sm:$0xf]
    %v83 = vld [vmem:[#allocation2 + $0x14] sm:$0xf]
    %v84 = vld [vmem:[#allocation2 + $0x18] sm:$0xf]
    %v85 = vld [vmem:[#allocation2 + $0x1c] sm:$0xf]
    %v86 = vld [vmem:[#allocation2 + $0x20] sm:$0xf]
    %v87 = vld [vmem:[#allocation2 + $0x24] sm:$0xf]
    %v88 = vld [vmem:[#allocation2 + $0x28] sm:$0xf]
    %v89 = vld [vmem:[#allocation2 + $0x2c] sm:$0xf]
    %v90 = vld [vmem:[#allocation2 + $0x30] sm:$0xf]
    %v91 = vld [vmem:[#allocation2 + $0x34] sm:$0xf]
    %v104 = vunpack.c.l.b16 %v52
    %v105 = vunpack.c.l.b16 %v53
    %v106 = vunpack.c.l.b16 %v54
    %v107 = vunpack.c.l.b16 %v55
    %v108 = vunpack.c.l.b16 %v56
    %v109 = vunpack.c.l.b16 %v57
    %v110 = vunpack.c.l.b16 %v58
    %v111 = vunpack.c.l.b16 %v59
    %v112 = vunpack.c.l.b16 %v60
    %v113 = vunpack.c.l.b16 %v61
    %v114 = vunpack.c.l.b16 %v62
    %v115 = vunpack.c.l.b16 %v63
    %v116 = vpack.c.b16 %v105, %v104
    %v117 = vpack.c.b16 %v107, %v106
    %v118 = vpack.c.b16 %v109, %v108
    %v119 = vpack.c.b16 %v111, %v110
    %v120 = vpack.c.b16 %v113, %v112
    %v121 = vpack.c.b16 %v115, %v114
    %v136 = vunpack.c.l.b16 %v78
    %v137 = vunpack.c.l.b16 %v79
    %v138 = vunpack.c.l.b16 %v80
    %v139 = vunpack.c.l.b16 %v81
    %v140 = vunpack.c.l.b16 %v82
    %v141 = vunpack.c.l.b16 %v83
    %v142 = vunpack.c.l.b16 %v84
    %v143 = vunpack.c.l.b16 %v85
    %v144 = vunpack.c.l.b16 %v86
    %v145 = vunpack.c.l.b16 %v87
    %v146 = vunpack.c.l.b16 %v88
    %v147 = vunpack.c.l.b16 %v89
    %v148 = vunpack.c.l.b16 %v90
    %v149 = vunpack.c.l.b16 %v91
    %v150 = vpack.c.b16 %v137, %v136
    %v151 = vpack.c.b16 %v139, %v138
    %v152 = vpack.c.b16 %v141, %v140
    %v153 = vpack.c.b16 %v143, %v142
    %v154 = vpack.c.b16 %v145, %v144
    %v155 = vpack.c.b16 %v147, %v146
    %v156 = vpack.c.b16 %v149, %v148
    %vm164 = vcmask 916480
    %v166 = vsel %vm164, %v116, 0
    %v169 = vsel %vm164, %v117, 0
    %v172 = vsel %vm164, %v118, 0
    %v175 = vsel %vm164, %v119, 0
    %v178 = vsel %vm164, %v120, 0
    %v181 = vsel %vm164, %v121, 0
    %183 = vmatprep.subr.bf16.mxu0 0
    %184 = vmatpush1.bf16.msra.mxu0 0
    %185 = vmatprep.subr.bf16.mxu0 0
    %186 = vmatpush1.bf16.msra.mxu0 %v156
    %187 = vmatprep.subr.bf16.mxu0 0
    %188 = vmatpush1.bf16.msra.mxu0 %v155
    %189 = vmatprep.subr.bf16.mxu0 0
    %190 = vmatpush1.bf16.msra.mxu0 %v154
    %191 = vmatprep.subr.bf16.mxu0 0
    %192 = vmatpush1.bf16.msra.mxu0 %v153
    %193 = vmatprep.subr.bf16.mxu0 0
    %194 = vmatpush1.bf16.msra.mxu0 %v152
    %195 = vmatprep.subr.bf16.mxu0 0
    %196 = vmatpush1.bf16.msra.mxu0 %v151
    %197 = vmatprep.subr.bf16.mxu0 0
    %198 = vmatpush1.bf16.msra.mxu0 %v150
    %199 = vmatprep.subr.bf16.mxu0 0
    %200 = vmatpush2.bf16.msra.mxu0 0
    %201 = vmatprep.subr.bf16.mxu0 0
    %202 = vmatpush2.bf16.msra.mxu0 0
    %203 = vmatprep.subr.bf16.mxu0 0
    %204 = vmatpush2.bf16.msra.mxu0 0
    %205 = vmatprep.subr.bf16.mxu0 0
    %206 = vmatpush2.bf16.msra.mxu0 0
    %207 = vmatprep.subr.bf16.mxu0 0
    %208 = vmatpush2.bf16.msra.mxu0 0
    %209 = vmatprep.subr.bf16.mxu0 0
    %210 = vmatpush2.bf16.msra.mxu0 0
    %211 = vmatprep.subr.bf16.mxu0 0
    %212 = vmatpush2.bf16.msra.mxu0 0
    %213 = vmatprep.subr.bf16.mxu0 0
    %214 = vmatpush2.bf16.msra.mxu0 0
    %215 = vmatprep.mubr.bf16.mxu0 0
    %216 = vmatmul.mubr.bf16.gmra.mxu0 %v166
    %v217 = vpop.f32.mrf.mxu0
    %v218 = vadd.f32 0.0, %v217
    %v219 = vpop.f32.mrf.mxu0
    %v220 = vpop.f32.mrf.mxu0
    %v221 = vadd.f32 0.0, %v220
    %v222 = vpop.f32.mrf.mxu0
    %223 = vmatprep.mubr.bf16.mxu0 0
    %224 = vmatmul.mubr.bf16.gmra.mxu0 %v169
    %v225 = vpop.f32.mrf.mxu0
    %v226 = vadd.f32 0.0, %v225
    %v227 = vpop.f32.mrf.mxu0
    %v228 = vpop.f32.mrf.mxu0
    %v229 = vadd.f32 0.0, %v228
    %v230 = vpop.f32.mrf.mxu0
    %231 = vmatprep.mubr.bf16.mxu0 0
    %232 = vmatmul.mubr.bf16.gmra.mxu0 %v172
    %v233 = vpop.f32.mrf.mxu0
    %v234 = vadd.f32 0.0, %v233
    %v235 = vpop.f32.mrf.mxu0
    %v236 = vpop.f32.mrf.mxu0
    %v237 = vadd.f32 0.0, %v236
    %v238 = vpop.f32.mrf.mxu0
    %239 = vmatprep.mubr.bf16.mxu0 0
    %240 = vmatmul.mubr.bf16.gmra.mxu0 %v175
    %v241 = vpop.f32.mrf.mxu0
    %v242 = vadd.f32 0.0, %v241
    %v243 = vpop.f32.mrf.mxu0
    %v244 = vpop.f32.mrf.mxu0
    %v245 = vadd.f32 0.0, %v244
    %v246 = vpop.f32.mrf.mxu0
    %247 = vmatprep.mubr.bf16.mxu0 0
    %248 = vmatmul.mubr.bf16.gmra.mxu0 %v178
    %v249 = vpop.f32.mrf.mxu0
    %v250 = vadd.f32 0.0, %v249
    %v251 = vpop.f32.mrf.mxu0
    %v252 = vpop.f32.mrf.mxu0
    %v253 = vadd.f32 0.0, %v252
    %v254 = vpop.f32.mrf.mxu0
    %255 = vmatprep.mubr.bf16.mxu0 0
    %256 = vmatmul.mubr.bf16.gmra.mxu0 %v181
    %v257 = vpop.f32.mrf.mxu0
    %v258 = vadd.f32 0.0, %v257
    %v259 = vpop.f32.mrf.mxu0
    %v260 = vpop.f32.mrf.mxu0
    %v261 = vadd.f32 0.0, %v260
    %v262 = vpop.f32.mrf.mxu0
    %263 = vdwg.mxu0
    %v266 = vunpack.c.l.b16 %v50
    %v267 = vunpack.c.l.b16 %v51
    %v268 = vpack.c.b16 %v267, %v266
    %v283 = vunpack.c.l.b16 %v64
    %v284 = vunpack.c.l.b16 %v65
    %v285 = vunpack.c.l.b16 %v66
    %v286 = vunpack.c.l.b16 %v67
    %v287 = vunpack.c.l.b16 %v68
    %v288 = vunpack.c.l.b16 %v69
    %v289 = vunpack.c.l.b16 %v70
    %v290 = vunpack.c.l.b16 %v71
    %v291 = vunpack.c.l.b16 %v72
    %v292 = vunpack.c.l.b16 %v73
    %v293 = vunpack.c.l.b16 %v74
    %v294 = vunpack.c.l.b16 %v75
    %v295 = vunpack.c.l.b16 %v76
    %v296 = vunpack.c.l.b16 %v77
    %v297 = vpack.c.b16 %v284, %v283
    %v298 = vpack.c.b16 %v286, %v285
    %v299 = vpack.c.b16 %v288, %v287
    %v300 = vpack.c.b16 %v290, %v289
    %v301 = vpack.c.b16 %v292, %v291
    %v302 = vpack.c.b16 %v294, %v293
    %v303 = vpack.c.b16 %v296, %v295
    %v312 = vsel %vm164, %v268, 0
    %314 = vmatprep.subr.bf16.mxu0 0
    %315 = vmatpush1.bf16.msra.mxu0 0
    %316 = vmatprep.subr.bf16.mxu0 0
    %317 = vmatpush1.bf16.msra.mxu0 %v303
    %318 = vmatprep.subr.bf16.mxu0 0
    %319 = vmatpush1.bf16.msra.mxu0 %v302
    %320 = vmatprep.subr.bf16.mxu0 0
    %321 = vmatpush1.bf16.msra.mxu0 %v301
    %322 = vmatprep.subr.bf16.mxu0 0
    %323 = vmatpush1.bf16.msra.mxu0 %v300
    %324 = vmatprep.subr.bf16.mxu0 0
    %325 = vmatpush1.bf16.msra.mxu0 %v299
    %326 = vmatprep.subr.bf16.mxu0 0
    %327 = vmatpush1.bf16.msra.mxu0 %v298
    %328 = vmatprep.subr.bf16.mxu0 0
    %329 = vmatpush1.bf16.msra.mxu0 %v297
    %330 = vmatprep.subr.bf16.mxu0 0
    %331 = vmatpush2.bf16.msra.mxu0 0
    %332 = vmatprep.subr.bf16.mxu0 0
    %333 = vmatpush2.bf16.msra.mxu0 0
    %334 = vmatprep.subr.bf16.mxu0 0
    %335 = vmatpush2.bf16.msra.mxu0 0
    %336 = vmatprep.subr.bf16.mxu0 0
    %337 = vmatpush2.bf16.msra.mxu0 0
    %338 = vmatprep.subr.bf16.mxu0 0
    %339 = vmatpush2.bf16.msra.mxu0 0
    %340 = vmatprep.subr.bf16.mxu0 0
    %341 = vmatpush2.bf16.msra.mxu0 0
    %342 = vmatprep.subr.bf16.mxu0 0
    %343 = vmatpush2.bf16.msra.mxu0 0
    %344 = vmatprep.subr.bf16.mxu0 0
    %345 = vmatpush2.bf16.msra.mxu0 0
    %346 = vmatprep.mubr.bf16.mxu0 0
    %347 = vmatmul.mubr.bf16.gmra.mxu0 %v312
    %v348 = vpop.f32.mrf.mxu0
    %v349 = vadd.f32 %v218, %v348
    %v350 = vpop.f32.mrf.mxu0
    %v351 = vpop.f32.mrf.mxu0
    %v352 = vadd.f32 %v221, %v351
    %v353 = vpop.f32.mrf.mxu0
    %354 = vmatprep.mubr.bf16.mxu0 0
    %355 = vmatmul.mubr.bf16.gmra.mxu0 %v166
    %v356 = vpop.f32.mrf.mxu0
    %v357 = vadd.f32 %v226, %v356
    %v358 = vpop.f32.mrf.mxu0
    %v359 = vpop.f32.mrf.mxu0
    %v360 = vadd.f32 %v229, %v359
    %v361 = vpop.f32.mrf.mxu0
    %362 = vmatprep.mubr.bf16.mxu0 0
    %363 = vmatmul.mubr.bf16.gmra.mxu0 %v169
    %v364 = vpop.f32.mrf.mxu0
    %v365 = vadd.f32 %v234, %v364
    %v366 = vpop.f32.mrf.mxu0
    %v367 = vpop.f32.mrf.mxu0
    %v368 = vadd.f32 %v237, %v367
    %v369 = vpop.f32.mrf.mxu0
    %370 = vmatprep.mubr.bf16.mxu0 0
    %371 = vmatmul.mubr.bf16.gmra.mxu0 %v172
    %v372 = vpop.f32.mrf.mxu0
    %v373 = vadd.f32 %v242, %v372
    %v374 = vpop.f32.mrf.mxu0
    %v375 = vpop.f32.mrf.mxu0
    %v376 = vadd.f32 %v245, %v375
    %v377 = vpop.f32.mrf.mxu0
    %378 = vmatprep.mubr.bf16.mxu0 0
    %379 = vmatmul.mubr.bf16.gmra.mxu0 %v175
    %v380 = vpop.f32.mrf.mxu0
    %v381 = vadd.f32 %v250, %v380
    %v382 = vpop.f32.mrf.mxu0
    %v383 = vpop.f32.mrf.mxu0
    %v384 = vadd.f32 %v253, %v383
    %v385 = vpop.f32.mrf.mxu0
    %386 = vmatprep.mubr.bf16.mxu0 0
    %387 = vmatmul.mubr.bf16.gmra.mxu0 %v178
    %v388 = vpop.f32.mrf.mxu0
    %v389 = vadd.f32 %v258, %v388
    %v390 = vpop.f32.mrf.mxu0
    %v391 = vpop.f32.mrf.mxu0
    %v392 = vadd.f32 %v261, %v391
    %v393 = vpop.f32.mrf.mxu0
    %394 = vdwg.mxu0
    %s395 = scalar_lea.vmem %s1, 56
    %v396 = vld [vmem:[%s395] sm:$0xf]
    %v397 = vld [vmem:[%s395 + $0x4] sm:$0xf]
    %v398 = vld [vmem:[%s395 + $0x8] sm:$0xf]
    %v399 = vld [vmem:[%s395 + $0xc] sm:$0xf]
    %v400 = vld [vmem:[%s395 + $0x10] sm:$0xf]
    %v401 = vld [vmem:[%s395 + $0x14] sm:$0xf]
    %v402 = vld [vmem:[%s395 + $0x18] sm:$0xf]
    %v403 = vld [vmem:[%s395 + $0x1c] sm:$0xf]
    %v404 = vld [vmem:[%s395 + $0x20] sm:$0xf]
    %v405 = vld [vmem:[%s395 + $0x24] sm:$0xf]
    %v406 = vld [vmem:[%s395 + $0x28] sm:$0xf]
    %v407 = vld [vmem:[%s395 + $0x2c] sm:$0xf]
    %v408 = vld [vmem:[%s395 + $0x30] sm:$0xf]
    %v409 = vld [vmem:[%s395 + $0x34] sm:$0xf]
    %s410 = scalar_lea.vmem [#allocation2], 56
    %v411 = vld [vmem:[%s410] sm:$0xf]
    %v412 = vld [vmem:[%s410 + $0x4] sm:$0xf]
    %v413 = vld [vmem:[%s410 + $0x8] sm:$0xf]
    %v414 = vld [vmem:[%s410 + $0xc] sm:$0xf]
    %v415 = vld [vmem:[%s410 + $0x10] sm:$0xf]
    %v416 = vld [vmem:[%s410 + $0x14] sm:$0xf]
    %v417 = vld [vmem:[%s410 + $0x18] sm:$0xf]
    %v418 = vld [vmem:[%s410 + $0x1c] sm:$0xf]
    %v419 = vld [vmem:[%s410 + $0x20] sm:$0xf]
    %v420 = vld [vmem:[%s410 + $0x24] sm:$0xf]
    %v421 = vld [vmem:[%s410 + $0x28] sm:$0xf]
    %v422 = vld [vmem:[%s410 + $0x2c] sm:$0xf]
    %v423 = vld [vmem:[%s410 + $0x30] sm:$0xf]
    %v424 = vld [vmem:[%s410 + $0x34] sm:$0xf]
    %v439 = vunpack.c.l.b16 %v411
    %v440 = vunpack.c.l.b16 %v412
    %v441 = vunpack.c.l.b16 %v413
    %v442 = vunpack.c.l.b16 %v414
    %v443 = vunpack.c.l.b16 %v415
    %v444 = vunpack.c.l.b16 %v416
    %v445 = vunpack.c.l.b16 %v417
    %v446 = vunpack.c.l.b16 %v418
    %v447 = vunpack.c.l.b16 %v419
    %v448 = vunpack.c.l.b16 %v420
    %v449 = vunpack.c.l.b16 %v421
    %v450 = vunpack.c.l.b16 %v422
    %v451 = vunpack.c.l.b16 %v423
    %v452 = vunpack.c.l.b16 %v424
    %v453 = vpack.c.b16 %v440, %v439
    %v454 = vpack.c.b16 %v442, %v441
    %v455 = vpack.c.b16 %v444, %v443
    %v456 = vpack.c.b16 %v446, %v445
    %v457 = vpack.c.b16 %v448, %v447
    %v458 = vpack.c.b16 %v450, %v449
    %v459 = vpack.c.b16 %v452, %v451
    %467 = vmatprep.subr.bf16.mxu0 0
    %468 = vmatpush1.bf16.msra.mxu0 0
    %469 = vmatprep.subr.bf16.mxu0 0
    %470 = vmatpush1.bf16.msra.mxu0 %v459
    %471 = vmatprep.subr.bf16.mxu0 0
    %472 = vmatpush1.bf16.msra.mxu0 %v458
    %473 = vmatprep.subr.bf16.mxu0 0
    %474 = vmatpush1.bf16.msra.mxu0 %v457
    %475 = vmatprep.subr.bf16.mxu0 0
    %476 = vmatpush1.bf16.msra.mxu0 %v456
    %477 = vmatprep.subr.bf16.mxu0 0
    %478 = vmatpush1.bf16.msra.mxu0 %v455
    %479 = vmatprep.subr.bf16.mxu0 0
    %480 = vmatpush1.bf16.msra.mxu0 %v454
    %481 = vmatprep.subr.bf16.mxu0 0
    %482 = vmatpush1.bf16.msra.mxu0 %v453
    %483 = vmatprep.subr.bf16.mxu0 0
    %484 = vmatpush2.bf16.msra.mxu0 0
    %485 = vmatprep.subr.bf16.mxu0 0
    %486 = vmatpush2.bf16.msra.mxu0 0
    %487 = vmatprep.subr.bf16.mxu0 0
    %488 = vmatpush2.bf16.msra.mxu0 0
    %489 = vmatprep.subr.bf16.mxu0 0
    %490 = vmatpush2.bf16.msra.mxu0 0
    %491 = vmatprep.subr.bf16.mxu0 0
    %492 = vmatpush2.bf16.msra.mxu0 0
    %493 = vmatprep.subr.bf16.mxu0 0
    %494 = vmatpush2.bf16.msra.mxu0 0
    %495 = vmatprep.subr.bf16.mxu0 0
    %496 = vmatpush2.bf16.msra.mxu0 0
    %497 = vmatprep.subr.bf16.mxu0 0
    %498 = vmatpush2.bf16.msra.mxu0 0
    %499 = vmatprep.mubr.bf16.mxu0 0
    %500 = vmatmul.mubr.bf16.gmra.mxu0 %v166
    %v501 = vpop.f32.mrf.mxu0
    %v502 = vadd.f32 0.0, %v501
    %v503 = vpop.f32.mrf.mxu0
    %v504 = vpop.f32.mrf.mxu0
    %v505 = vadd.f32 0.0, %v504
    %v506 = vpop.f32.mrf.mxu0
    %507 = vmatprep.mubr.bf16.mxu0 0
    %508 = vmatmul.mubr.bf16.gmra.mxu0 %v169
    %v509 = vpop.f32.mrf.mxu0
    %v510 = vadd.f32 0.0, %v509
    %v511 = vpop.f32.mrf.mxu0
    %v512 = vpop.f32.mrf.mxu0
    %v513 = vadd.f32 0.0, %v512
    %v514 = vpop.f32.mrf.mxu0
    %515 = vmatprep.mubr.bf16.mxu0 0
    %516 = vmatmul.mubr.bf16.gmra.mxu0 %v172
    %v517 = vpop.f32.mrf.mxu0
    %v518 = vadd.f32 0.0, %v517
    %v519 = vpop.f32.mrf.mxu0
    %v520 = vpop.f32.mrf.mxu0
    %v521 = vadd.f32 0.0, %v520
    %v522 = vpop.f32.mrf.mxu0
    %523 = vmatprep.mubr.bf16.mxu0 0
    %524 = vmatmul.mubr.bf16.gmra.mxu0 %v175
    %v525 = vpop.f32.mrf.mxu0
    %v526 = vadd.f32 0.0, %v525
    %v527 = vpop.f32.mrf.mxu0
    %v528 = vpop.f32.mrf.mxu0
    %v529 = vadd.f32 0.0, %v528
    %v530 = vpop.f32.mrf.mxu0
    %531 = vmatprep.mubr.bf16.mxu0 0
    %532 = vmatmul.mubr.bf16.gmra.mxu0 %v178
    %v533 = vpop.f32.mrf.mxu0
    %v534 = vadd.f32 0.0, %v533
    %v535 = vpop.f32.mrf.mxu0
    %v536 = vpop.f32.mrf.mxu0
    %v537 = vadd.f32 0.0, %v536
    %v538 = vpop.f32.mrf.mxu0
    %539 = vmatprep.mubr.bf16.mxu0 0
    %540 = vmatmul.mubr.bf16.gmra.mxu0 %v181
    %v541 = vpop.f32.mrf.mxu0
    %v542 = vadd.f32 0.0, %v541
    %v543 = vpop.f32.mrf.mxu0
    %v544 = vpop.f32.mrf.mxu0
    %v545 = vadd.f32 0.0, %v544
    %v546 = vpop.f32.mrf.mxu0
    %547 = vdwg.mxu0
    %v562 = vunpack.c.l.b16 %v396
    %v563 = vunpack.c.l.b16 %v397
    %v564 = vunpack.c.l.b16 %v398
    %v565 = vunpack.c.l.b16 %v399
    %v566 = vunpack.c.l.b16 %v400
    %v567 = vunpack.c.l.b16 %v401
    %v568 = vunpack.c.l.b16 %v402
    %v569 = vunpack.c.l.b16 %v403
    %v570 = vunpack.c.l.b16 %v404
    %v571 = vunpack.c.l.b16 %v405
    %v572 = vunpack.c.l.b16 %v406
    %v573 = vunpack.c.l.b16 %v407
    %v574 = vunpack.c.l.b16 %v408
    %v575 = vunpack.c.l.b16 %v409
    %v576 = vpack.c.b16 %v563, %v562
    %v577 = vpack.c.b16 %v565, %v564
    %v578 = vpack.c.b16 %v567, %v566
    %v579 = vpack.c.b16 %v569, %v568
    %v580 = vpack.c.b16 %v571, %v570
    %v581 = vpack.c.b16 %v573, %v572
    %v582 = vpack.c.b16 %v575, %v574
    %590 = vmatprep.subr.bf16.mxu0 0
    %591 = vmatpush1.bf16.msra.mxu0 0
    %592 = vmatprep.subr.bf16.mxu0 0
    %593 = vmatpush1.bf16.msra.mxu0 %v582
    %594 = vmatprep.subr.bf16.mxu0 0
    %595 = vmatpush1.bf16.msra.mxu0 %v581
    %596 = vmatprep.subr.bf16.mxu0 0
    %597 = vmatpush1.bf16.msra.mxu0 %v580
    %598 = vmatprep.subr.bf16.mxu0 0
    %599 = vmatpush1.bf16.msra.mxu0 %v579
    %600 = vmatprep.subr.bf16.mxu0 0
    %601 = vmatpush1.bf16.msra.mxu0 %v578
    %602 = vmatprep.subr.bf16.mxu0 0
    %603 = vmatpush1.bf16.msra.mxu0 %v577
    %604 = vmatprep.subr.bf16.mxu0 0
    %605 = vmatpush1.bf16.msra.mxu0 %v576
    %606 = vmatprep.subr.bf16.mxu0 0
    %607 = vmatpush2.bf16.msra.mxu0 0
    %608 = vmatprep.subr.bf16.mxu0 0
    %609 = vmatpush2.bf16.msra.mxu0 0
    %610 = vmatprep.subr.bf16.mxu0 0
    %611 = vmatpush2.bf16.msra.mxu0 0
    %612 = vmatprep.subr.bf16.mxu0 0
    %613 = vmatpush2.bf16.msra.mxu0 0
    %614 = vmatprep.subr.bf16.mxu0 0
    %615 = vmatpush2.bf16.msra.mxu0 0
    %616 = vmatprep.subr.bf16.mxu0 0
    %617 = vmatpush2.bf16.msra.mxu0 0
    %618 = vmatprep.subr.bf16.mxu0 0
    %619 = vmatpush2.bf16.msra.mxu0 0
    %620 = vmatprep.subr.bf16.mxu0 0
    %621 = vmatpush2.bf16.msra.mxu0 0
    %622 = vmatprep.mubr.bf16.mxu0 0
    %623 = vmatmul.mubr.bf16.gmra.mxu0 %v312
    %v624 = vpop.f32.mrf.mxu0
    %v625 = vadd.f32 %v502, %v624
    %v626 = vpop.f32.mrf.mxu0
    %v627 = vpop.f32.mrf.mxu0
    %v628 = vadd.f32 %v505, %v627
    %v629 = vpop.f32.mrf.mxu0
    %630 = vmatprep.mubr.bf16.mxu0 0
    %631 = vmatmul.mubr.bf16.gmra.mxu0 %v166
    %v632 = vpop.f32.mrf.mxu0
    %v633 = vadd.f32 %v510, %v632
    %v634 = vpop.f32.mrf.mxu0
    %v635 = vpop.f32.mrf.mxu0
    %v636 = vadd.f32 %v513, %v635
    %v637 = vpop.f32.mrf.mxu0
    %638 = vmatprep.mubr.bf16.mxu0 0
    %639 = vmatmul.mubr.bf16.gmra.mxu0 %v169
    %v640 = vpop.f32.mrf.mxu0
    %v641 = vadd.f32 %v518, %v640
    %v642 = vpop.f32.mrf.mxu0
    %v643 = vpop.f32.mrf.mxu0
    %v644 = vadd.f32 %v521, %v643
    %v645 = vpop.f32.mrf.mxu0
    %646 = vmatprep.mubr.bf16.mxu0 0
    %647 = vmatmul.mubr.bf16.gmra.mxu0 %v172
    %v648 = vpop.f32.mrf.mxu0
    %v649 = vadd.f32 %v526, %v648
    %v650 = vpop.f32.mrf.mxu0
    %v651 = vpop.f32.mrf.mxu0
    %v652 = vadd.f32 %v529, %v651
    %v653 = vpop.f32.mrf.mxu0
    %654 = vmatprep.mubr.bf16.mxu0 0
    %655 = vmatmul.mubr.bf16.gmra.mxu0 %v175
    %v656 = vpop.f32.mrf.mxu0
    %v657 = vadd.f32 %v534, %v656
    %v658 = vpop.f32.mrf.mxu0
    %v659 = vpop.f32.mrf.mxu0
    %v660 = vadd.f32 %v537, %v659
    %v661 = vpop.f32.mrf.mxu0
    %662 = vmatprep.mubr.bf16.mxu0 0
    %663 = vmatmul.mubr.bf16.gmra.mxu0 %v178
    %v664 = vpop.f32.mrf.mxu0
    %v665 = vadd.f32 %v542, %v664
    %v666 = vpop.f32.mrf.mxu0
    %v667 = vpop.f32.mrf.mxu0
    %v668 = vadd.f32 %v545, %v667
    %v669 = vpop.f32.mrf.mxu0
    %670 = vdwg.mxu0
    %v671 = vmax.f32 %v349, %v625
    %v672 = vmax.f32 %v352, %v628
    %v673 = vmax.f32 %v357, %v633
    %v674 = vmax.f32 %v360, %v636
    %v675 = vmax.f32 %v365, %v641
    %v676 = vmax.f32 %v368, %v644
    %v677 = vmax.f32 %v373, %v649
    %v678 = vmax.f32 %v376, %v652
    %v679 = vmax.f32 %v381, %v657
    %v680 = vmax.f32 %v384, %v660
    %v681 = vmax.f32 %v389, %v665
    %v682 = vmax.f32 %v392, %v668
    %s683 = scalar_lea.vmem %s1, 112
    %v684 = vld [vmem:[%s683] sm:$0xf]
    %v685 = vld [vmem:[%s683 + $0x4] sm:$0xf]
    %v686 = vld [vmem:[%s683 + $0x8] sm:$0xf]
    %v687 = vld [vmem:[%s683 + $0xc] sm:$0xf]
    %v688 = vld [vmem:[%s683 + $0x10] sm:$0xf]
    %v689 = vld [vmem:[%s683 + $0x14] sm:$0xf]
    %v690 = vld [vmem:[%s683 + $0x18] sm:$0xf]
    %v691 = vld [vmem:[%s683 + $0x1c] sm:$0xf]
    %v692 = vld [vmem:[%s683 + $0x20] sm:$0xf]
    %v693 = vld [vmem:[%s683 + $0x24] sm:$0xf]
    %v694 = vld [vmem:[%s683 + $0x28] sm:$0xf]
    %v695 = vld [vmem:[%s683 + $0x2c] sm:$0xf]
    %v696 = vld [vmem:[%s683 + $0x30] sm:$0xf]
    %v697 = vld [vmem:[%s683 + $0x34] sm:$0xf]
    %s698 = scalar_lea.vmem [#allocation2], 112
    %v699 = vld [vmem:[%s698] sm:$0xf]
    %v700 = vld [vmem:[%s698 + $0x4] sm:$0xf]
    %v701 = vld [vmem:[%s698 + $0x8] sm:$0xf]
    %v702 = vld [vmem:[%s698 + $0xc] sm:$0xf]
    %v703 = vld [vmem:[%s698 + $0x10] sm:$0xf]
    %v704 = vld [vmem:[%s698 + $0x14] sm:$0xf]
    %v705 = vld [vmem:[%s698 + $0x18] sm:$0xf]
    %v706 = vld [vmem:[%s698 + $0x1c] sm:$0xf]
    %v707 = vld [vmem:[%s698 + $0x20] sm:$0xf]
    %v708 = vld [vmem:[%s698 + $0x24] sm:$0xf]
    %v709 = vld [vmem:[%s698 + $0x28] sm:$0xf]
    %v710 = vld [vmem:[%s698 + $0x2c] sm:$0xf]
    %v711 = vld [vmem:[%s698 + $0x30] sm:$0xf]
    %v712 = vld [vmem:[%s698 + $0x34] sm:$0xf]
    %v727 = vunpack.c.l.b16 %v699
    %v728 = vunpack.c.l.b16 %v700
    %v729 = vunpack.c.l.b16 %v701
    %v730 = vunpack.c.l.b16 %v702
    %v731 = vunpack.c.l.b16 %v703
    %v732 = vunpack.c.l.b16 %v704
    %v733 = vunpack.c.l.b16 %v705
    %v734 = vunpack.c.l.b16 %v706
    %v735 = vunpack.c.l.b16 %v707
    %v736 = vunpack.c.l.b16 %v708
    %v737 = vunpack.c.l.b16 %v709
    %v738 = vunpack.c.l.b16 %v710
    %v739 = vunpack.c.l.b16 %v711
    %v740 = vunpack.c.l.b16 %v712
    %v741 = vpack.c.b16 %v728, %v727
    %v742 = vpack.c.b16 %v730, %v729
    %v743 = vpack.c.b16 %v732, %v731
    %v744 = vpack.c.b16 %v734, %v733
    %v745 = vpack.c.b16 %v736, %v735
    %v746 = vpack.c.b16 %v738, %v737
    %v747 = vpack.c.b16 %v740, %v739
    %755 = vmatprep.subr.bf16.mxu0 0
    %756 = vmatpush1.bf16.msra.mxu0 0
    %757 = vmatprep.subr.bf16.mxu0 0
    %758 = vmatpush1.bf16.msra.mxu0 %v747
    %759 = vmatprep.subr.bf16.mxu0 0
    %760 = vmatpush1.bf16.msra.mxu0 %v746
    %761 = vmatprep.subr.bf16.mxu0 0
    %762 = vmatpush1.bf16.msra.mxu0 %v745
    %763 = vmatprep.subr.bf16.mxu0 0
    %764 = vmatpush1.bf16.msra.mxu0 %v744
    %765 = vmatprep.subr.bf16.mxu0 0
    %766 = vmatpush1.bf16.msra.mxu0 %v743
    %767 = vmatprep.subr.bf16.mxu0 0
    %768 = vmatpush1.bf16.msra.mxu0 %v742
    %769 = vmatprep.subr.bf16.mxu0 0
    %770 = vmatpush1.bf16.msra.mxu0 %v741
    %771 = vmatprep.subr.bf16.mxu0 0
    %772 = vmatpush2.bf16.msra.mxu0 0
    %773 = vmatprep.subr.bf16.mxu0 0
    %774 = vmatpush2.bf16.msra.mxu0 0
    %775 = vmatprep.subr.bf16.mxu0 0
    %776 = vmatpush2.bf16.msra.mxu0 0
    %777 = vmatprep.subr.bf16.mxu0 0
    %778 = vmatpush2.bf16.msra.mxu0 0
    %779 = vmatprep.subr.bf16.mxu0 0
    %780 = vmatpush2.bf16.msra.mxu0 0
    %781 = vmatprep.subr.bf16.mxu0 0
    %782 = vmatpush2.bf16.msra.mxu0 0
    %783 = vmatprep.subr.bf16.mxu0 0
    %784 = vmatpush2.bf16.msra.mxu0 0
    %785 = vmatprep.subr.bf16.mxu0 0
    %786 = vmatpush2.bf16.msra.mxu0 0
    %787 = vmatprep.mubr.bf16.mxu0 0
    %788 = vmatmul.mubr.bf16.gmra.mxu0 %v166
    %v789 = vpop.f32.mrf.mxu0
    %v790 = vadd.f32 0.0, %v789
    %v791 = vpop.f32.mrf.mxu0
    %v792 = vpop.f32.mrf.mxu0
    %v793 = vadd.f32 0.0, %v792
    %v794 = vpop.f32.mrf.mxu0
    %795 = vmatprep.mubr.bf16.mxu0 0
    %796 = vmatmul.mubr.bf16.gmra.mxu0 %v169
    %v797 = vpop.f32.mrf.mxu0
    %v798 = vadd.f32 0.0, %v797
    %v799 = vpop.f32.mrf.mxu0
    %v800 = vpop.f32.mrf.mxu0
    %v801 = vadd.f32 0.0, %v800
    %v802 = vpop.f32.mrf.mxu0
    %803 = vmatprep.mubr.bf16.mxu0 0
    %804 = vmatmul.mubr.bf16.gmra.mxu0 %v172
    %v805 = vpop.f32.mrf.mxu0
    %v806 = vadd.f32 0.0, %v805
    %v807 = vpop.f32.mrf.mxu0
    %v808 = vpop.f32.mrf.mxu0
    %v809 = vadd.f32 0.0, %v808
    %v810 = vpop.f32.mrf.mxu0
    %811 = vmatprep.mubr.bf16.mxu0 0
    %812 = vmatmul.mubr.bf16.gmra.mxu0 %v175
    %v813 = vpop.f32.mrf.mxu0
    %v814 = vadd.f32 0.0, %v813
    %v815 = vpop.f32.mrf.mxu0
    %v816 = vpop.f32.mrf.mxu0
    %v817 = vadd.f32 0.0, %v816
    %v818 = vpop.f32.mrf.mxu0
    %819 = vmatprep.mubr.bf16.mxu0 0
    %820 = vmatmul.mubr.bf16.gmra.mxu0 %v178
    %v821 = vpop.f32.mrf.mxu0
    %v822 = vadd.f32 0.0, %v821
    %v823 = vpop.f32.mrf.mxu0
    %v824 = vpop.f32.mrf.mxu0
    %v825 = vadd.f32 0.0, %v824
    %v826 = vpop.f32.mrf.mxu0
    %827 = vmatprep.mubr.bf16.mxu0 0
    %828 = vmatmul.mubr.bf16.gmra.mxu0 %v181
    %v829 = vpop.f32.mrf.mxu0
    %v830 = vadd.f32 0.0, %v829
    %v831 = vpop.f32.mrf.mxu0
    %v832 = vpop.f32.mrf.mxu0
    %v833 = vadd.f32 0.0, %v832
    %v834 = vpop.f32.mrf.mxu0
    %835 = vdwg.mxu0
    %v850 = vunpack.c.l.b16 %v684
    %v851 = vunpack.c.l.b16 %v685
    %v852 = vunpack.c.l.b16 %v686
    %v853 = vunpack.c.l.b16 %v687
    %v854 = vunpack.c.l.b16 %v688
    %v855 = vunpack.c.l.b16 %v689
    %v856 = vunpack.c.l.b16 %v690
    %v857 = vunpack.c.l.b16 %v691
    %v858 = vunpack.c.l.b16 %v692
    %v859 = vunpack.c.l.b16 %v693
    %v860 = vunpack.c.l.b16 %v694
    %v861 = vunpack.c.l.b16 %v695
    %v862 = vunpack.c.l.b16 %v696
    %v863 = vunpack.c.l.b16 %v697
    %v864 = vpack.c.b16 %v851, %v850
    %v865 = vpack.c.b16 %v853, %v852
    %v866 = vpack.c.b16 %v855, %v854
    %v867 = vpack.c.b16 %v857, %v856
    %v868 = vpack.c.b16 %v859, %v858
    %v869 = vpack.c.b16 %v861, %v860
    %v870 = vpack.c.b16 %v863, %v862
    %878 = vmatprep.subr.bf16.mxu0 0
    %879 = vmatpush1.bf16.msra.mxu0 0
    %880 = vmatprep.subr.bf16.mxu0 0
    %881 = vmatpush1.bf16.msra.mxu0 %v870
    %882 = vmatprep.subr.bf16.mxu0 0
    %883 = vmatpush1.bf16.msra.mxu0 %v869
    %884 = vmatprep.subr.bf16.mxu0 0
    %885 = vmatpush1.bf16.msra.mxu0 %v868
    %886 = vmatprep.subr.bf16.mxu0 0
    %887 = vmatpush1.bf16.msra.mxu0 %v867
    %888 = vmatprep.subr.bf16.mxu0 0
    %889 = vmatpush1.bf16.msra.mxu0 %v866
    %890 = vmatprep.subr.bf16.mxu0 0
    %891 = vmatpush1.bf16.msra.mxu0 %v865
    %892 = vmatprep.subr.bf16.mxu0 0
    %893 = vmatpush1.bf16.msra.mxu0 %v864
    %894 = vmatprep.subr.bf16.mxu0 0
    %895 = vmatpush2.bf16.msra.mxu0 0
    %896 = vmatprep.subr.bf16.mxu0 0
    %897 = vmatpush2.bf16.msra.mxu0 0
    %898 = vmatprep.subr.bf16.mxu0 0
    %899 = vmatpush2.bf16.msra.mxu0 0
    %900 = vmatprep.subr.bf16.mxu0 0
    %901 = vmatpush2.bf16.msra.mxu0 0
    %902 = vmatprep.subr.bf16.mxu0 0
    %903 = vmatpush2.bf16.msra.mxu0 0
    %904 = vmatprep.subr.bf16.mxu0 0
    %905 = vmatpush2.bf16.msra.mxu0 0
    %906 = vmatprep.subr.bf16.mxu0 0
    %907 = vmatpush2.bf16.msra.mxu0 0
    %908 = vmatprep.subr.bf16.mxu0 0
    %909 = vmatpush2.bf16.msra.mxu0 0
    %910 = vmatprep.mubr.bf16.mxu0 0
    %911 = vmatmul.mubr.bf16.gmra.mxu0 %v312
    %v912 = vpop.f32.mrf.mxu0
    %v913 = vadd.f32 %v790, %v912
    %v914 = vpop.f32.mrf.mxu0
    %v915 = vpop.f32.mrf.mxu0
    %v916 = vadd.f32 %v793, %v915
    %v917 = vpop.f32.mrf.mxu0
    %918 = vmatprep.mubr.bf16.mxu0 0
    %919 = vmatmul.mubr.bf16.gmra.mxu0 %v166
    %v920 = vpop.f32.mrf.mxu0
    %v921 = vadd.f32 %v798, %v920
    %v922 = vpop.f32.mrf.mxu0
    %v923 = vpop.f32.mrf.mxu0
    %v924 = vadd.f32 %v801, %v923
    %v925 = vpop.f32.mrf.mxu0
    %926 = vmatprep.mubr.bf16.mxu0 0
    %927 = vmatmul.mubr.bf16.gmra.mxu0 %v169
    %v928 = vpop.f32.mrf.mxu0
    %v929 = vadd.f32 %v806, %v928
    %v930 = vpop.f32.mrf.mxu0
    %v931 = vpop.f32.mrf.mxu0
    %v932 = vadd.f32 %v809, %v931
    %v933 = vpop.f32.mrf.mxu0
    %934 = vmatprep.mubr.bf16.mxu0 0
    %935 = vmatmul.mubr.bf16.gmra.mxu0 %v172
    %v936 = vpop.f32.mrf.mxu0
    %v937 = vadd.f32 %v814, %v936
    %v938 = vpop.f32.mrf.mxu0
    %v939 = vpop.f32.mrf.mxu0
    %v940 = vadd.f32 %v817, %v939
    %v941 = vpop.f32.mrf.mxu0
    %942 = vmatprep.mubr.bf16.mxu0 0
    %943 = vmatmul.mubr.bf16.gmra.mxu0 %v175
    %v944 = vpop.f32.mrf.mxu0
    %v945 = vadd.f32 %v822, %v944
    %v946 = vpop.f32.mrf.mxu0
    %v947 = vpop.f32.mrf.mxu0
    %v948 = vadd.f32 %v825, %v947
    %v949 = vpop.f32.mrf.mxu0
    %950 = vmatprep.mubr.bf16.mxu0 0
    %951 = vmatmul.mubr.bf16.gmra.mxu0 %v178
    %v952 = vpop.f32.mrf.mxu0
    %v953 = vadd.f32 %v830, %v952
    %v954 = vpop.f32.mrf.mxu0
    %v955 = vpop.f32.mrf.mxu0
    %v956 = vadd.f32 %v833, %v955
    %v957 = vpop.f32.mrf.mxu0
    %958 = vdwg.mxu0
    %v959 = vmax.f32 %v671, %v913
    %v960 = vmax.f32 %v672, %v916
    %v961 = vmax.f32 %v673, %v921
    %v962 = vmax.f32 %v674, %v924
    %v963 = vmax.f32 %v675, %v929
    %v964 = vmax.f32 %v676, %v932
    %v965 = vmax.f32 %v677, %v937
    %v966 = vmax.f32 %v678, %v940
    %v967 = vmax.f32 %v679, %v945
    %v968 = vmax.f32 %v680, %v948
    %v969 = vmax.f32 %v681, %v953
    %v970 = vmax.f32 %v682, %v956
    %s971 = scalar_lea.vmem %s1, 168
    %v972 = vld [vmem:[%s971] sm:$0xf]
    %v973 = vld [vmem:[%s971 + $0x4] sm:$0xf]
    %v974 = vld [vmem:[%s971 + $0x8] sm:$0xf]
    %v975 = vld [vmem:[%s971 + $0xc] sm:$0xf]
    %v976 = vld [vmem:[%s971 + $0x10] sm:$0xf]
    %v977 = vld [vmem:[%s971 + $0x14] sm:$0xf]
    %v978 = vld [vmem:[%s971 + $0x18] sm:$0xf]
    %v979 = vld [vmem:[%s971 + $0x1c] sm:$0xf]
    %v980 = vld [vmem:[%s971 + $0x20] sm:$0xf]
    %v981 = vld [vmem:[%s971 + $0x24] sm:$0xf]
    %v982 = vld [vmem:[%s971 + $0x28] sm:$0xf]
    %v983 = vld [vmem:[%s971 + $0x2c] sm:$0xf]
    %v984 = vld [vmem:[%s971 + $0x30] sm:$0xf]
    %v985 = vld [vmem:[%s971 + $0x34] sm:$0xf]
    %s986 = scalar_lea.vmem [#allocation2], 168
    %v987 = vld [vmem:[%s986] sm:$0xf]
    %v988 = vld [vmem:[%s986 + $0x4] sm:$0xf]
    %v989 = vld [vmem:[%s986 + $0x8] sm:$0xf]
    %v990 = vld [vmem:[%s986 + $0xc] sm:$0xf]
    %v991 = vld [vmem:[%s986 + $0x10] sm:$0xf]
    %v992 = vld [vmem:[%s986 + $0x14] sm:$0xf]
    %v993 = vld [vmem:[%s986 + $0x18] sm:$0xf]
    %v994 = vld [vmem:[%s986 + $0x1c] sm:$0xf]
    %v995 = vld [vmem:[%s986 + $0x20] sm:$0xf]
    %v996 = vld [vmem:[%s986 + $0x24] sm:$0xf]
    %v997 = vld [vmem:[%s986 + $0x28] sm:$0xf]
    %v998 = vld [vmem:[%s986 + $0x2c] sm:$0xf]
    %v999 = vld [vmem:[%s986 + $0x30] sm:$0xf]
    %v1000 = vld [vmem:[%s986 + $0x34] sm:$0xf]
    %v1015 = vunpack.c.l.b16 %v987
    %v1016 = vunpack.c.l.b16 %v988
    %v1017 = vunpack.c.l.b16 %v989
    %v1018 = vunpack.c.l.b16 %v990
    %v1019 = vunpack.c.l.b16 %v991
    %v1020 = vunpack.c.l.b16 %v992
    %v1021 = vunpack.c.l.b16 %v993
    %v1022 = vunpack.c.l.b16 %v994
    %v1023 = vunpack.c.l.b16 %v995
    %v1024 = vunpack.c.l.b16 %v996
    %v1025 = vunpack.c.l.b16 %v997
    %v1026 = vunpack.c.l.b16 %v998
    %v1027 = vunpack.c.l.b16 %v999
    %v1028 = vunpack.c.l.b16 %v1000
    %v1029 = vpack.c.b16 %v1016, %v1015
    %v1030 = vpack.c.b16 %v1018, %v1017
    %v1031 = vpack.c.b16 %v1020, %v1019
    %v1032 = vpack.c.b16 %v1022, %v1021
    %v1033 = vpack.c.b16 %v1024, %v1023
    %v1034 = vpack.c.b16 %v1026, %v1025
    %v1035 = vpack.c.b16 %v1028, %v1027
    %1043 = vmatprep.subr.bf16.mxu0 0
    %1044 = vmatpush1.bf16.msra.mxu0 0
    %1045 = vmatprep.subr.bf16.mxu0 0
    %1046 = vmatpush1.bf16.msra.mxu0 %v1035
    %1047 = vmatprep.subr.bf16.mxu0 0
    %1048 = vmatpush1.bf16.msra.mxu0 %v1034
    %1049 = vmatprep.subr.bf16.mxu0 0
    %1050 = vmatpush1.bf16.msra.mxu0 %v1033
    %1051 = vmatprep.subr.bf16.mxu0 0
    %1052 = vmatpush1.bf16.msra.mxu0 %v1032
    %1053 = vmatprep.subr.bf16.mxu0 0
    %1054 = vmatpush1.bf16.msra.mxu0 %v1031
    %1055 = vmatprep.subr.bf16.mxu0 0
    %1056 = vmatpush1.bf16.msra.mxu0 %v1030
    %1057 = vmatprep.subr.bf16.mxu0 0
    %1058 = vmatpush1.bf16.msra.mxu0 %v1029
    %1059 = vmatprep.subr.bf16.mxu0 0
    %1060 = vmatpush2.bf16.msra.mxu0 0
    %1061 = vmatprep.subr.bf16.mxu0 0
    %1062 = vmatpush2.bf16.msra.mxu0 0
    %1063 = vmatprep.subr.bf16.mxu0 0
    %1064 = vmatpush2.bf16.msra.mxu0 0
    %1065 = vmatprep.subr.bf16.mxu0 0
    %1066 = vmatpush2.bf16.msra.mxu0 0
    %1067 = vmatprep.subr.bf16.mxu0 0
    %1068 = vmatpush2.bf16.msra.mxu0 0
    %1069 = vmatprep.subr.bf16.mxu0 0
    %1070 = vmatpush2.bf16.msra.mxu0 0
    %1071 = vmatprep.subr.bf16.mxu0 0
    %1072 = vmatpush2.bf16.msra.mxu0 0
    %1073 = vmatprep.subr.bf16.mxu0 0
    %1074 = vmatpush2.bf16.msra.mxu0 0
    %1075 = vmatprep.mubr.bf16.mxu0 0
    %1076 = vmatmul.mubr.bf16.gmra.mxu0 %v166
    %v1077 = vpop.f32.mrf.mxu0
    %v1078 = vadd.f32 0.0, %v1077
    %v1079 = vpop.f32.mrf.mxu0
    %v1080 = vpop.f32.mrf.mxu0
    %v1081 = vadd.f32 0.0, %v1080
    %v1082 = vpop.f32.mrf.mxu0
    %1083 = vmatprep.mubr.bf16.mxu0 0
    %1084 = vmatmul.mubr.bf16.gmra.mxu0 %v169
    %v1085 = vpop.f32.mrf.mxu0
    %v1086 = vadd.f32 0.0, %v1085
    %v1087 = vpop.f32.mrf.mxu0
    %v1088 = vpop.f32.mrf.mxu0
    %v1089 = vadd.f32 0.0, %v1088
    %v1090 = vpop.f32.mrf.mxu0
    %1091 = vmatprep.mubr.bf16.mxu0 0
    %1092 = vmatmul.mubr.bf16.gmra.mxu0 %v172
    %v1093 = vpop.f32.mrf.mxu0
    %v1094 = vadd.f32 0.0, %v1093
    %v1095 = vpop.f32.mrf.mxu0
    %v1096 = vpop.f32.mrf.mxu0
    %v1097 = vadd.f32 0.0, %v1096
    %v1098 = vpop.f32.mrf.mxu0
    %1099 = vmatprep.mubr.bf16.mxu0 0
    %1100 = vmatmul.mubr.bf16.gmra.mxu0 %v175
    %v1101 = vpop.f32.mrf.mxu0
    %v1102 = vadd.f32 0.0, %v1101
    %v1103 = vpop.f32.mrf.mxu0
    %v1104 = vpop.f32.mrf.mxu0
    %v1105 = vadd.f32 0.0, %v1104
    %v1106 = vpop.f32.mrf.mxu0
    %1107 = vmatprep.mubr.bf16.mxu0 0
    %1108 = vmatmul.mubr.bf16.gmra.mxu0 %v178
    %v1109 = vpop.f32.mrf.mxu0
    %v1110 = vadd.f32 0.0, %v1109
    %v1111 = vpop.f32.mrf.mxu0
    %v1112 = vpop.f32.mrf.mxu0
    %v1113 = vadd.f32 0.0, %v1112
    %v1114 = vpop.f32.mrf.mxu0
    %1115 = vmatprep.mubr.bf16.mxu0 0
    %1116 = vmatmul.mubr.bf16.gmra.mxu0 %v181
    %v1117 = vpop.f32.mrf.mxu0
    %v1118 = vadd.f32 0.0, %v1117
    %v1119 = vpop.f32.mrf.mxu0
    %v1120 = vpop.f32.mrf.mxu0
    %v1121 = vadd.f32 0.0, %v1120
    %v1122 = vpop.f32.mrf.mxu0
    %1123 = vdwg.mxu0
    %v1138 = vunpack.c.l.b16 %v972
    %v1139 = vunpack.c.l.b16 %v973
    %v1140 = vunpack.c.l.b16 %v974
    %v1141 = vunpack.c.l.b16 %v975
    %v1142 = vunpack.c.l.b16 %v976
    %v1143 = vunpack.c.l.b16 %v977
    %v1144 = vunpack.c.l.b16 %v978
    %v1145 = vunpack.c.l.b16 %v979
    %v1146 = vunpack.c.l.b16 %v980
    %v1147 = vunpack.c.l.b16 %v981
    %v1148 = vunpack.c.l.b16 %v982
    %v1149 = vunpack.c.l.b16 %v983
    %v1150 = vunpack.c.l.b16 %v984
    %v1151 = vunpack.c.l.b16 %v985
    %v1152 = vpack.c.b16 %v1139, %v1138
    %v1153 = vpack.c.b16 %v1141, %v1140
    %v1154 = vpack.c.b16 %v1143, %v1142
    %v1155 = vpack.c.b16 %v1145, %v1144
    %v1156 = vpack.c.b16 %v1147, %v1146
    %v1157 = vpack.c.b16 %v1149, %v1148
    %v1158 = vpack.c.b16 %v1151, %v1150
    %1166 = vmatprep.subr.bf16.mxu0 0
    %1167 = vmatpush1.bf16.msra.mxu0 0
    %1168 = vmatprep.subr.bf16.mxu0 0
    %1169 = vmatpush1.bf16.msra.mxu0 %v1158
    %1170 = vmatprep.subr.bf16.mxu0 0
    %1171 = vmatpush1.bf16.msra.mxu0 %v1157
    %1172 = vmatprep.subr.bf16.mxu0 0
    %1173 = vmatpush1.bf16.msra.mxu0 %v1156
    %1174 = vmatprep.subr.bf16.mxu0 0
    %1175 = vmatpush1.bf16.msra.mxu0 %v1155
    %1176 = vmatprep.subr.bf16.mxu0 0
    %1177 = vmatpush1.bf16.msra.mxu0 %v1154
    %1178 = vmatprep.subr.bf16.mxu0 0
    %1179 = vmatpush1.bf16.msra.mxu0 %v1153
    %1180 = vmatprep.subr.bf16.mxu0 0
    %1181 = vmatpush1.bf16.msra.mxu0 %v1152
    %1182 = vmatprep.subr.bf16.mxu0 0
    %1183 = vmatpush2.bf16.msra.mxu0 0
    %1184 = vmatprep.subr.bf16.mxu0 0
    %1185 = vmatpush2.bf16.msra.mxu0 0
    %1186 = vmatprep.subr.bf16.mxu0 0
    %1187 = vmatpush2.bf16.msra.mxu0 0
    %1188 = vmatprep.subr.bf16.mxu0 0
    %1189 = vmatpush2.bf16.msra.mxu0 0
    %1190 = vmatprep.subr.bf16.mxu0 0
    %1191 = vmatpush2.bf16.msra.mxu0 0
    %1192 = vmatprep.subr.bf16.mxu0 0
    %1193 = vmatpush2.bf16.msra.mxu0 0
    %1194 = vmatprep.subr.bf16.mxu0 0
    %1195 = vmatpush2.bf16.msra.mxu0 0
    %1196 = vmatprep.subr.bf16.mxu0 0
    %1197 = vmatpush2.bf16.msra.mxu0 0
    %1198 = vmatprep.mubr.bf16.mxu0 0
    %1199 = vmatmul.mubr.bf16.gmra.mxu0 %v312
    %v1200 = vpop.f32.mrf.mxu0
    %v1201 = vadd.f32 %v1078, %v1200
    %v1202 = vpop.f32.mrf.mxu0
    %v1203 = vpop.f32.mrf.mxu0
    %v1204 = vadd.f32 %v1081, %v1203
    %v1205 = vpop.f32.mrf.mxu0
    %1206 = vmatprep.mubr.bf16.mxu0 0
    %1207 = vmatmul.mubr.bf16.gmra.mxu0 %v166
    %v1208 = vpop.f32.mrf.mxu0
    %v1209 = vadd.f32 %v1086, %v1208
    %v1210 = vpop.f32.mrf.mxu0
    %v1211 = vpop.f32.mrf.mxu0
    %v1212 = vadd.f32 %v1089, %v1211
    %v1213 = vpop.f32.mrf.mxu0
    %1214 = vmatprep.mubr.bf16.mxu0 0
    %1215 = vmatmul.mubr.bf16.gmra.mxu0 %v169
    %v1216 = vpop.f32.mrf.mxu0
    %v1217 = vadd.f32 %v1094, %v1216
    %v1218 = vpop.f32.mrf.mxu0
    %v1219 = vpop.f32.mrf.mxu0
    %v1220 = vadd.f32 %v1097, %v1219
    %v1221 = vpop.f32.mrf.mxu0
    %1222 = vmatprep.mubr.bf16.mxu0 0
    %1223 = vmatmul.mubr.bf16.gmra.mxu0 %v172
    %v1224 = vpop.f32.mrf.mxu0
    %v1225 = vadd.f32 %v1102, %v1224
    %v1226 = vpop.f32.mrf.mxu0
    %v1227 = vpop.f32.mrf.mxu0
    %v1228 = vadd.f32 %v1105, %v1227
    %v1229 = vpop.f32.mrf.mxu0
    %1230 = vmatprep.mubr.bf16.mxu0 0
    %1231 = vmatmul.mubr.bf16.gmra.mxu0 %v175
    %v1232 = vpop.f32.mrf.mxu0
    %v1233 = vadd.f32 %v1110, %v1232
    %v1234 = vpop.f32.mrf.mxu0
    %v1235 = vpop.f32.mrf.mxu0
    %v1236 = vadd.f32 %v1113, %v1235
    %v1237 = vpop.f32.mrf.mxu0
    %1238 = vmatprep.mubr.bf16.mxu0 0
    %1239 = vmatmul.mubr.bf16.gmra.mxu0 %v178
    %v1240 = vpop.f32.mrf.mxu0
    %v1241 = vadd.f32 %v1118, %v1240
    %v1242 = vpop.f32.mrf.mxu0
    %v1243 = vpop.f32.mrf.mxu0
    %v1244 = vadd.f32 %v1121, %v1243
    %v1245 = vpop.f32.mrf.mxu0
    %1246 = vdwg.mxu0
    %v1247 = vmax.f32 %v959, %v1201
    %v1248 = vmax.f32 %v960, %v1204
    %v1249 = vmax.f32 %v961, %v1209
    %v1250 = vmax.f32 %v962, %v1212
    %v1251 = vmax.f32 %v963, %v1217
    %v1252 = vmax.f32 %v964, %v1220
    %v1253 = vmax.f32 %v965, %v1225
    %v1254 = vmax.f32 %v966, %v1228
    %v1255 = vmax.f32 %v967, %v1233
    %v1256 = vmax.f32 %v968, %v1236
    %v1257 = vmax.f32 %v969, %v1241
    %v1258 = vmax.f32 %v970, %v1244
    %v1259 = vld [vmem:[%s3] sm:$0x1]
    %v1261 = vlaneseq
    %v1262 = vshrl.u32 %v1261, 7
    %v1263 = vsub.s32 0, %v1262
    %v1264 = vrot.slane %v1259, %v1263
    %v1266 = vadd.f32 %v1247, %v1264
    %v1267 = vadd.f32 %v1248, %v1264
    %v1268 = vadd.f32 %v1249, %v1264
    %v1269 = vadd.f32 %v1250, %v1264
    %v1270 = vadd.f32 %v1251, %v1264
    %v1271 = vadd.f32 %v1252, %v1264
    %v1272 = vadd.f32 %v1253, %v1264
    %v1273 = vadd.f32 %v1254, %v1264
    %v1274 = vadd.f32 %v1255, %v1264
    %v1275 = vadd.f32 %v1256, %v1264
    %v1276 = vadd.f32 %v1257, %v1264
    %v1277 = vadd.f32 %v1258, %v1264
    %v1278 = vmax.f32 %v1266, 0.0
    %v1279 = vmax.f32 %v1267, 0.0
    %v1280 = vmax.f32 %v1268, 0.0
    %v1281 = vmax.f32 %v1269, 0.0
    %v1282 = vmax.f32 %v1270, 0.0
    %v1283 = vmax.f32 %v1271, 0.0
    %v1284 = vmax.f32 %v1272, 0.0
    %v1285 = vmax.f32 %v1273, 0.0
    %v1286 = vmax.f32 %v1274, 0.0
    %v1287 = vmax.f32 %v1275, 0.0
    %v1288 = vmax.f32 %v1276, 0.0
    %v1289 = vmax.f32 %v1277, 0.0
    %v1290 = vpack.c.bf16 %v1279, %v1278
    %v1291 = vpack.c.bf16 %v1281, %v1280
    %v1292 = vpack.c.bf16 %v1283, %v1282
    %v1293 = vpack.c.bf16 %v1285, %v1284
    %v1294 = vpack.c.bf16 %v1287, %v1286
    %v1295 = vpack.c.bf16 %v1289, %v1288
    %s1296 = scalar_lea.vmem %s1, 224
    %v1297 = vld [vmem:[%s1296] sm:$0xf]
    %v1298 = vld [vmem:[%s1296 + $0x4] sm:$0xf]
    %v1299 = vld [vmem:[%s1296 + $0x8] sm:$0xf]
    %v1300 = vld [vmem:[%s1296 + $0xc] sm:$0xf]
    %v1301 = vld [vmem:[%s1296 + $0x10] sm:$0xf]
    %v1302 = vld [vmem:[%s1296 + $0x14] sm:$0xf]
    %v1303 = vld [vmem:[%s1296 + $0x18] sm:$0xf]
    %v1304 = vld [vmem:[%s1296 + $0x1c] sm:$0xf]
    %v1305 = vld [vmem:[%s1296 + $0x20] sm:$0xf]
    %v1306 = vld [vmem:[%s1296 + $0x24] sm:$0xf]
    %v1307 = vld [vmem:[%s1296 + $0x28] sm:$0xf]
    %v1308 = vld [vmem:[%s1296 + $0x2c] sm:$0xf]
    %v1309 = vld [vmem:[%s1296 + $0x30] sm:$0xf]
    %v1310 = vld [vmem:[%s1296 + $0x34] sm:$0xf]
    %s1311 = scalar_lea.vmem [#allocation2], 224
    %v1312 = vld [vmem:[%s1311] sm:$0xf]
    %v1313 = vld [vmem:[%s1311 + $0x4] sm:$0xf]
    %v1314 = vld [vmem:[%s1311 + $0x8] sm:$0xf]
    %v1315 = vld [vmem:[%s1311 + $0xc] sm:$0xf]
    %v1316 = vld [vmem:[%s1311 + $0x10] sm:$0xf]
    %v1317 = vld [vmem:[%s1311 + $0x14] sm:$0xf]
    %v1318 = vld [vmem:[%s1311 + $0x18] sm:$0xf]
    %v1319 = vld [vmem:[%s1311 + $0x1c] sm:$0xf]
    %v1320 = vld [vmem:[%s1311 + $0x20] sm:$0xf]
    %v1321 = vld [vmem:[%s1311 + $0x24] sm:$0xf]
    %v1322 = vld [vmem:[%s1311 + $0x28] sm:$0xf]
    %v1323 = vld [vmem:[%s1311 + $0x2c] sm:$0xf]
    %v1324 = vld [vmem:[%s1311 + $0x30] sm:$0xf]
    %v1325 = vld [vmem:[%s1311 + $0x34] sm:$0xf]
    %v1340 = vunpack.c.l.b16 %v1312
    %v1341 = vunpack.c.l.b16 %v1313
    %v1342 = vunpack.c.l.b16 %v1314
    %v1343 = vunpack.c.l.b16 %v1315
    %v1344 = vunpack.c.l.b16 %v1316
    %v1345 = vunpack.c.l.b16 %v1317
    %v1346 = vunpack.c.l.b16 %v1318
    %v1347 = vunpack.c.l.b16 %v1319
    %v1348 = vunpack.c.l.b16 %v1320
    %v1349 = vunpack.c.l.b16 %v1321
    %v1350 = vunpack.c.l.b16 %v1322
    %v1351 = vunpack.c.l.b16 %v1323
    %v1352 = vunpack.c.l.b16 %v1324
    %v1353 = vunpack.c.l.b16 %v1325
    %v1354 = vpack.c.b16 %v1341, %v1340
    %v1355 = vpack.c.b16 %v1343, %v1342
    %v1356 = vpack.c.b16 %v1345, %v1344
    %v1357 = vpack.c.b16 %v1347, %v1346
    %v1358 = vpack.c.b16 %v1349, %v1348
    %v1359 = vpack.c.b16 %v1351, %v1350
    %v1360 = vpack.c.b16 %v1353, %v1352
    %1368 = vmatprep.subr.bf16.mxu0 0
    %1369 = vmatpush1.bf16.msra.mxu0 0
    %1370 = vmatprep.subr.bf16.mxu0 0
    %1371 = vmatpush1.bf16.msra.mxu0 %v1360
    %1372 = vmatprep.subr.bf16.mxu0 0
    %1373 = vmatpush1.bf16.msra.mxu0 %v1359
    %1374 = vmatprep.subr.bf16.mxu0 0
    %1375 = vmatpush1.bf16.msra.mxu0 %v1358
    %1376 = vmatprep.subr.bf16.mxu0 0
    %1377 = vmatpush1.bf16.msra.mxu0 %v1357
    %1378 = vmatprep.subr.bf16.mxu0 0
    %1379 = vmatpush1.bf16.msra.mxu0 %v1356
    %1380 = vmatprep.subr.bf16.mxu0 0
    %1381 = vmatpush1.bf16.msra.mxu0 %v1355
    %1382 = vmatprep.subr.bf16.mxu0 0
    %1383 = vmatpush1.bf16.msra.mxu0 %v1354
    %1384 = vmatprep.subr.bf16.mxu0 0
    %1385 = vmatpush2.bf16.msra.mxu0 0
    %1386 = vmatprep.subr.bf16.mxu0 0
    %1387 = vmatpush2.bf16.msra.mxu0 0
    %1388 = vmatprep.subr.bf16.mxu0 0
    %1389 = vmatpush2.bf16.msra.mxu0 0
    %1390 = vmatprep.subr.bf16.mxu0 0
    %1391 = vmatpush2.bf16.msra.mxu0 0
    %1392 = vmatprep.subr.bf16.mxu0 0
    %1393 = vmatpush2.bf16.msra.mxu0 0
    %1394 = vmatprep.subr.bf16.mxu0 0
    %1395 = vmatpush2.bf16.msra.mxu0 0
    %1396 = vmatprep.subr.bf16.mxu0 0
    %1397 = vmatpush2.bf16.msra.mxu0 0
    %1398 = vmatprep.subr.bf16.mxu0 0
    %1399 = vmatpush2.bf16.msra.mxu0 0
    %1400 = vmatprep.mubr.bf16.mxu0 0
    %1401 = vmatmul.mubr.bf16.gmra.mxu0 %v166
    %v1402 = vpop.f32.mrf.mxu0
    %v1403 = vadd.f32 0.0, %v1402
    %v1404 = vpop.f32.mrf.mxu0
    %v1405 = vpop.f32.mrf.mxu0
    %v1406 = vadd.f32 0.0, %v1405
    %v1407 = vpop.f32.mrf.mxu0
    %1408 = vmatprep.mubr.bf16.mxu0 0
    %1409 = vmatmul.mubr.bf16.gmra.mxu0 %v169
    %v1410 = vpop.f32.mrf.mxu0
    %v1411 = vadd.f32 0.0, %v1410
    %v1412 = vpop.f32.mrf.mxu0
    %v1413 = vpop.f32.mrf.mxu0
    %v1414 = vadd.f32 0.0, %v1413
    %v1415 = vpop.f32.mrf.mxu0
    %1416 = vmatprep.mubr.bf16.mxu0 0
    %1417 = vmatmul.mubr.bf16.gmra.mxu0 %v172
    %v1418 = vpop.f32.mrf.mxu0
    %v1419 = vadd.f32 0.0, %v1418
    %v1420 = vpop.f32.mrf.mxu0
    %v1421 = vpop.f32.mrf.mxu0
    %v1422 = vadd.f32 0.0, %v1421
    %v1423 = vpop.f32.mrf.mxu0
    %1424 = vmatprep.mubr.bf16.mxu0 0
    %1425 = vmatmul.mubr.bf16.gmra.mxu0 %v175
    %v1426 = vpop.f32.mrf.mxu0
    %v1427 = vadd.f32 0.0, %v1426
    %v1428 = vpop.f32.mrf.mxu0
    %v1429 = vpop.f32.mrf.mxu0
    %v1430 = vadd.f32 0.0, %v1429
    %v1431 = vpop.f32.mrf.mxu0
    %1432 = vmatprep.mubr.bf16.mxu0 0
    %1433 = vmatmul.mubr.bf16.gmra.mxu0 %v178
    %v1434 = vpop.f32.mrf.mxu0
    %v1435 = vadd.f32 0.0, %v1434
    %v1436 = vpop.f32.mrf.mxu0
    %v1437 = vpop.f32.mrf.mxu0
    %v1438 = vadd.f32 0.0, %v1437
    %v1439 = vpop.f32.mrf.mxu0
    %1440 = vmatprep.mubr.bf16.mxu0 0
    %1441 = vmatmul.mubr.bf16.gmra.mxu0 %v181
    %v1442 = vpop.f32.mrf.mxu0
    %v1443 = vadd.f32 0.0, %v1442
    %v1444 = vpop.f32.mrf.mxu0
    %v1445 = vpop.f32.mrf.mxu0
    %v1446 = vadd.f32 0.0, %v1445
    %v1447 = vpop.f32.mrf.mxu0
    %1448 = vdwg.mxu0
    %v1463 = vunpack.c.l.b16 %v1297
    %v1464 = vunpack.c.l.b16 %v1298
    %v1465 = vunpack.c.l.b16 %v1299
    %v1466 = vunpack.c.l.b16 %v1300
    %v1467 = vunpack.c.l.b16 %v1301
    %v1468 = vunpack.c.l.b16 %v1302
    %v1469 = vunpack.c.l.b16 %v1303
    %v1470 = vunpack.c.l.b16 %v1304
    %v1471 = vunpack.c.l.b16 %v1305
    %v1472 = vunpack.c.l.b16 %v1306
    %v1473 = vunpack.c.l.b16 %v1307
    %v1474 = vunpack.c.l.b16 %v1308
    %v1475 = vunpack.c.l.b16 %v1309
    %v1476 = vunpack.c.l.b16 %v1310
    %v1477 = vpack.c.b16 %v1464, %v1463
    %v1478 = vpack.c.b16 %v1466, %v1465
    %v1479 = vpack.c.b16 %v1468, %v1467
    %v1480 = vpack.c.b16 %v1470, %v1469
    %v1481 = vpack.c.b16 %v1472, %v1471
    %v1482 = vpack.c.b16 %v1474, %v1473
    %v1483 = vpack.c.b16 %v1476, %v1475
    %1491 = vmatprep.subr.bf16.mxu0 0
    %1492 = vmatpush1.bf16.msra.mxu0 0
    %1493 = vmatprep.subr.bf16.mxu0 0
    %1494 = vmatpush1.bf16.msra.mxu0 %v1483
    %1495 = vmatprep.subr.bf16.mxu0 0
    %1496 = vmatpush1.bf16.msra.mxu0 %v1482
    %1497 = vmatprep.subr.bf16.mxu0 0
    %1498 = vmatpush1.bf16.msra.mxu0 %v1481
    %1499 = vmatprep.subr.bf16.mxu0 0
    %1500 = vmatpush1.bf16.msra.mxu0 %v1480
    %1501 = vmatprep.subr.bf16.mxu0 0
    %1502 = vmatpush1.bf16.msra.mxu0 %v1479
    %1503 = vmatprep.subr.bf16.mxu0 0
    %1504 = vmatpush1.bf16.msra.mxu0 %v1478
    %1505 = vmatprep.subr.bf16.mxu0 0
    %1506 = vmatpush1.bf16.msra.mxu0 %v1477
    %1507 = vmatprep.subr.bf16.mxu0 0
    %1508 = vmatpush2.bf16.msra.mxu0 0
    %1509 = vmatprep.subr.bf16.mxu0 0
    %1510 = vmatpush2.bf16.msra.mxu0 0
    %1511 = vmatprep.subr.bf16.mxu0 0
    %1512 = vmatpush2.bf16.msra.mxu0 0
    %1513 = vmatprep.subr.bf16.mxu0 0
    %1514 = vmatpush2.bf16.msra.mxu0 0
    %1515 = vmatprep.subr.bf16.mxu0 0
    %1516 = vmatpush2.bf16.msra.mxu0 0
    %1517 = vmatprep.subr.bf16.mxu0 0
    %1518 = vmatpush2.bf16.msra.mxu0 0
    %1519 = vmatprep.subr.bf16.mxu0 0
    %1520 = vmatpush2.bf16.msra.mxu0 0
    %1521 = vmatprep.subr.bf16.mxu0 0
    %1522 = vmatpush2.bf16.msra.mxu0 0
    %1523 = vmatprep.mubr.bf16.mxu0 0
    %1524 = vmatmul.mubr.bf16.gmra.mxu0 %v312
    %v1525 = vpop.f32.mrf.mxu0
    %v1526 = vadd.f32 %v1403, %v1525
    %v1527 = vpop.f32.mrf.mxu0
    %v1528 = vpop.f32.mrf.mxu0
    %v1529 = vadd.f32 %v1406, %v1528
    %v1530 = vpop.f32.mrf.mxu0
    %1531 = vmatprep.mubr.bf16.mxu0 0
    %1532 = vmatmul.mubr.bf16.gmra.mxu0 %v166
    %v1533 = vpop.f32.mrf.mxu0
    %v1534 = vadd.f32 %v1411, %v1533
    %v1535 = vpop.f32.mrf.mxu0
    %v1536 = vpop.f32.mrf.mxu0
    %v1537 = vadd.f32 %v1414, %v1536
    %v1538 = vpop.f32.mrf.mxu0
    %1539 = vmatprep.mubr.bf16.mxu0 0
    %1540 = vmatmul.mubr.bf16.gmra.mxu0 %v169
    %v1541 = vpop.f32.mrf.mxu0
    %v1542 = vadd.f32 %v1419, %v1541
    %v1543 = vpop.f32.mrf.mxu0
    %v1544 = vpop.f32.mrf.mxu0
    %v1545 = vadd.f32 %v1422, %v1544
    %v1546 = vpop.f32.mrf.mxu0
    %1547 = vmatprep.mubr.bf16.mxu0 0
    %1548 = vmatmul.mubr.bf16.gmra.mxu0 %v172
    %v1549 = vpop.f32.mrf.mxu0
    %v1550 = vadd.f32 %v1427, %v1549
    %v1551 = vpop.f32.mrf.mxu0
    %v1552 = vpop.f32.mrf.mxu0
    %v1553 = vadd.f32 %v1430, %v1552
    %v1554 = vpop.f32.mrf.mxu0
    %1555 = vmatprep.mubr.bf16.mxu0 0
    %1556 = vmatmul.mubr.bf16.gmra.mxu0 %v175
    %v1557 = vpop.f32.mrf.mxu0
    %v1558 = vadd.f32 %v1435, %v1557
    %v1559 = vpop.f32.mrf.mxu0
    %v1560 = vpop.f32.mrf.mxu0
    %v1561 = vadd.f32 %v1438, %v1560
    %v1562 = vpop.f32.mrf.mxu0
    %1563 = vmatprep.mubr.bf16.mxu0 0
    %1564 = vmatmul.mubr.bf16.gmra.mxu0 %v178
    %v1565 = vpop.f32.mrf.mxu0
    %v1566 = vadd.f32 %v1443, %v1565
    %v1567 = vpop.f32.mrf.mxu0
    %v1568 = vpop.f32.mrf.mxu0
    %v1569 = vadd.f32 %v1446, %v1568
    %v1570 = vpop.f32.mrf.mxu0
    %1571 = vdwg.mxu0
    %s1572 = scalar_lea.vmem %s1, 280
    %v1573 = vld [vmem:[%s1572] sm:$0xf]
    %v1574 = vld [vmem:[%s1572 + $0x4] sm:$0xf]
    %v1575 = vld [vmem:[%s1572 + $0x8] sm:$0xf]
    %v1576 = vld [vmem:[%s1572 + $0xc] sm:$0xf]
    %v1577 = vld [vmem:[%s1572 + $0x10] sm:$0xf]
    %v1578 = vld [vmem:[%s1572 + $0x14] sm:$0xf]
    %v1579 = vld [vmem:[%s1572 + $0x18] sm:$0xf]
    %v1580 = vld [vmem:[%s1572 + $0x1c] sm:$0xf]
    %v1581 = vld [vmem:[%s1572 + $0x20] sm:$0xf]
    %v1582 = vld [vmem:[%s1572 + $0x24] sm:$0xf]
    %v1583 = vld [vmem:[%s1572 + $0x28] sm:$0xf]
    %v1584 = vld [vmem:[%s1572 + $0x2c] sm:$0xf]
    %v1585 = vld [vmem:[%s1572 + $0x30] sm:$0xf]
    %v1586 = vld [vmem:[%s1572 + $0x34] sm:$0xf]
    %s1587 = scalar_lea.vmem [#allocation2], 280
    %v1588 = vld [vmem:[%s1587] sm:$0xf]
    %v1589 = vld [vmem:[%s1587 + $0x4] sm:$0xf]
    %v1590 = vld [vmem:[%s1587 + $0x8] sm:$0xf]
    %v1591 = vld [vmem:[%s1587 + $0xc] sm:$0xf]
    %v1592 = vld [vmem:[%s1587 + $0x10] sm:$0xf]
    %v1593 = vld [vmem:[%s1587 + $0x14] sm:$0xf]
    %v1594 = vld [vmem:[%s1587 + $0x18] sm:$0xf]
    %v1595 = vld [vmem:[%s1587 + $0x1c] sm:$0xf]
    %v1596 = vld [vmem:[%s1587 + $0x20] sm:$0xf]
    %v1597 = vld [vmem:[%s1587 + $0x24] sm:$0xf]
    %v1598 = vld [vmem:[%s1587 + $0x28] sm:$0xf]
    %v1599 = vld [vmem:[%s1587 + $0x2c] sm:$0xf]
    %v1600 = vld [vmem:[%s1587 + $0x30] sm:$0xf]
    %v1601 = vld [vmem:[%s1587 + $0x34] sm:$0xf]
    %v1616 = vunpack.c.l.b16 %v1588
    %v1617 = vunpack.c.l.b16 %v1589
    %v1618 = vunpack.c.l.b16 %v1590
    %v1619 = vunpack.c.l.b16 %v1591
    %v1620 = vunpack.c.l.b16 %v1592
    %v1621 = vunpack.c.l.b16 %v1593
    %v1622 = vunpack.c.l.b16 %v1594
    %v1623 = vunpack.c.l.b16 %v1595
    %v1624 = vunpack.c.l.b16 %v1596
    %v1625 = vunpack.c.l.b16 %v1597
    %v1626 = vunpack.c.l.b16 %v1598
    %v1627 = vunpack.c.l.b16 %v1599
    %v1628 = vunpack.c.l.b16 %v1600
    %v1629 = vunpack.c.l.b16 %v1601
    %v1630 = vpack.c.b16 %v1617, %v1616
    %v1631 = vpack.c.b16 %v1619, %v1618
    %v1632 = vpack.c.b16 %v1621, %v1620
    %v1633 = vpack.c.b16 %v1623, %v1622
    %v1634 = vpack.c.b16 %v1625, %v1624
    %v1635 = vpack.c.b16 %v1627, %v1626
    %v1636 = vpack.c.b16 %v1629, %v1628
    %1644 = vmatprep.subr.bf16.mxu0 0
    %1645 = vmatpush1.bf16.msra.mxu0 0
    %1646 = vmatprep.subr.bf16.mxu0 0
    %1647 = vmatpush1.bf16.msra.mxu0 %v1636
    %1648 = vmatprep.subr.bf16.mxu0 0
    %1649 = vmatpush1.bf16.msra.mxu0 %v1635
    %1650 = vmatprep.subr.bf16.mxu0 0
    %1651 = vmatpush1.bf16.msra.mxu0 %v1634
    %1652 = vmatprep.subr.bf16.mxu0 0
    %1653 = vmatpush1.bf16.msra.mxu0 %v1633
    %1654 = vmatprep.subr.bf16.mxu0 0
    %1655 = vmatpush1.bf16.msra.mxu0 %v1632
    %1656 = vmatprep.subr.bf16.mxu0 0
    %1657 = vmatpush1.bf16.msra.mxu0 %v1631
    %1658 = vmatprep.subr.bf16.mxu0 0
    %1659 = vmatpush1.bf16.msra.mxu0 %v1630
    %1660 = vmatprep.subr.bf16.mxu0 0
    %1661 = vmatpush2.bf16.msra.mxu0 0
    %1662 = vmatprep.subr.bf16.mxu0 0
    %1663 = vmatpush2.bf16.msra.mxu0 0
    %1664 = vmatprep.subr.bf16.mxu0 0
    %1665 = vmatpush2.bf16.msra.mxu0 0
    %1666 = vmatprep.subr.bf16.mxu0 0
    %1667 = vmatpush2.bf16.msra.mxu0 0
    %1668 = vmatprep.subr.bf16.mxu0 0
    %1669 = vmatpush2.bf16.msra.mxu0 0
    %1670 = vmatprep.subr.bf16.mxu0 0
    %1671 = vmatpush2.bf16.msra.mxu0 0
    %1672 = vmatprep.subr.bf16.mxu0 0
    %1673 = vmatpush2.bf16.msra.mxu0 0
    %1674 = vmatprep.subr.bf16.mxu0 0
    %1675 = vmatpush2.bf16.msra.mxu0 0
    %1676 = vmatprep.mubr.bf16.mxu0 0
    %1677 = vmatmul.mubr.bf16.gmra.mxu0 %v166
    %v1678 = vpop.f32.mrf.mxu0
    %v1679 = vadd.f32 0.0, %v1678
    %v1680 = vpop.f32.mrf.mxu0
    %v1681 = vpop.f32.mrf.mxu0
    %v1682 = vadd.f32 0.0, %v1681
    %v1683 = vpop.f32.mrf.mxu0
    %1684 = vmatprep.mubr.bf16.mxu0 0
    %1685 = vmatmul.mubr.bf16.gmra.mxu0 %v169
    %v1686 = vpop.f32.mrf.mxu0
    %v1687 = vadd.f32 0.0, %v1686
    %v1688 = vpop.f32.mrf.mxu0
    %v1689 = vpop.f32.mrf.mxu0
    %v1690 = vadd.f32 0.0, %v1689
    %v1691 = vpop.f32.mrf.mxu0
    %1692 = vmatprep.mubr.bf16.mxu0 0
    %1693 = vmatmul.mubr.bf16.gmra.mxu0 %v172
    %v1694 = vpop.f32.mrf.mxu0
    %v1695 = vadd.f32 0.0, %v1694
    %v1696 = vpop.f32.mrf.mxu0
    %v1697 = vpop.f32.mrf.mxu0
    %v1698 = vadd.f32 0.0, %v1697
    %v1699 = vpop.f32.mrf.mxu0
    %1700 = vmatprep.mubr.bf16.mxu0 0
    %1701 = vmatmul.mubr.bf16.gmra.mxu0 %v175
    %v1702 = vpop.f32.mrf.mxu0
    %v1703 = vadd.f32 0.0, %v1702
    %v1704 = vpop.f32.mrf.mxu0
    %v1705 = vpop.f32.mrf.mxu0
    %v1706 = vadd.f32 0.0, %v1705
    %v1707 = vpop.f32.mrf.mxu0
    %1708 = vmatprep.mubr.bf16.mxu0 0
    %1709 = vmatmul.mubr.bf16.gmra.mxu0 %v178
    %v1710 = vpop.f32.mrf.mxu0
    %v1711 = vadd.f32 0.0, %v1710
    %v1712 = vpop.f32.mrf.mxu0
    %v1713 = vpop.f32.mrf.mxu0
    %v1714 = vadd.f32 0.0, %v1713
    %v1715 = vpop.f32.mrf.mxu0
    %1716 = vmatprep.mubr.bf16.mxu0 0
    %1717 = vmatmul.mubr.bf16.gmra.mxu0 %v181
    %v1718 = vpop.f32.mrf.mxu0
    %v1719 = vadd.f32 0.0, %v1718
    %v1720 = vpop.f32.mrf.mxu0
    %v1721 = vpop.f32.mrf.mxu0
    %v1722 = vadd.f32 0.0, %v1721
    %v1723 = vpop.f32.mrf.mxu0
    %1724 = vdwg.mxu0
    %v1739 = vunpack.c.l.b16 %v1573
    %v1740 = vunpack.c.l.b16 %v1574
    %v1741 = vunpack.c.l.b16 %v1575
    %v1742 = vunpack.c.l.b16 %v1576
    %v1743 = vunpack.c.l.b16 %v1577
    %v1744 = vunpack.c.l.b16 %v1578
    %v1745 = vunpack.c.l.b16 %v1579
    %v1746 = vunpack.c.l.b16 %v1580
    %v1747 = vunpack.c.l.b16 %v1581
    %v1748 = vunpack.c.l.b16 %v1582
    %v1749 = vunpack.c.l.b16 %v1583
    %v1750 = vunpack.c.l.b16 %v1584
    %v1751 = vunpack.c.l.b16 %v1585
    %v1752 = vunpack.c.l.b16 %v1586
    %v1753 = vpack.c.b16 %v1740, %v1739
    %v1754 = vpack.c.b16 %v1742, %v1741
    %v1755 = vpack.c.b16 %v1744, %v1743
    %v1756 = vpack.c.b16 %v1746, %v1745
    %v1757 = vpack.c.b16 %v1748, %v1747
    %v1758 = vpack.c.b16 %v1750, %v1749
    %v1759 = vpack.c.b16 %v1752, %v1751
    %1767 = vmatprep.subr.bf16.mxu0 0
    %1768 = vmatpush1.bf16.msra.mxu0 0
    %1769 = vmatprep.subr.bf16.mxu0 0
    %1770 = vmatpush1.bf16.msra.mxu0 %v1759
    %1771 = vmatprep.subr.bf16.mxu0 0
    %1772 = vmatpush1.bf16.msra.mxu0 %v1758
    %1773 = vmatprep.subr.bf16.mxu0 0
    %1774 = vmatpush1.bf16.msra.mxu0 %v1757
    %1775 = vmatprep.subr.bf16.mxu0 0
    %1776 = vmatpush1.bf16.msra.mxu0 %v1756
    %1777 = vmatprep.subr.bf16.mxu0 0
    %1778 = vmatpush1.bf16.msra.mxu0 %v1755
    %1779 = vmatprep.subr.bf16.mxu0 0
    %1780 = vmatpush1.bf16.msra.mxu0 %v1754
    %1781 = vmatprep.subr.bf16.mxu0 0
    %1782 = vmatpush1.bf16.msra.mxu0 %v1753
    %1783 = vmatprep.subr.bf16.mxu0 0
    %1784 = vmatpush2.bf16.msra.mxu0 0
    %1785 = vmatprep.subr.bf16.mxu0 0
    %1786 = vmatpush2.bf16.msra.mxu0 0
    %1787 = vmatprep.subr.bf16.mxu0 0
    %1788 = vmatpush2.bf16.msra.mxu0 0
    %1789 = vmatprep.subr.bf16.mxu0 0
    %1790 = vmatpush2.bf16.msra.mxu0 0
    %1791 = vmatprep.subr.bf16.mxu0 0
    %1792 = vmatpush2.bf16.msra.mxu0 0
    %1793 = vmatprep.subr.bf16.mxu0 0
    %1794 = vmatpush2.bf16.msra.mxu0 0
    %1795 = vmatprep.subr.bf16.mxu0 0
    %1796 = vmatpush2.bf16.msra.mxu0 0
    %1797 = vmatprep.subr.bf16.mxu0 0
    %1798 = vmatpush2.bf16.msra.mxu0 0
    %1799 = vmatprep.mubr.bf16.mxu0 0
    %1800 = vmatmul.mubr.bf16.gmra.mxu0 %v312
    %v1801 = vpop.f32.mrf.mxu0
    %v1802 = vadd.f32 %v1679, %v1801
    %v1803 = vpop.f32.mrf.mxu0
    %v1804 = vpop.f32.mrf.mxu0
    %v1805 = vadd.f32 %v1682, %v1804
    %v1806 = vpop.f32.mrf.mxu0
    %1807 = vmatprep.mubr.bf16.mxu0 0
    %1808 = vmatmul.mubr.bf16.gmra.mxu0 %v166
    %v1809 = vpop.f32.mrf.mxu0
    %v1810 = vadd.f32 %v1687, %v1809
    %v1811 = vpop.f32.mrf.mxu0
    %v1812 = vpop.f32.mrf.mxu0
    %v1813 = vadd.f32 %v1690, %v1812
    %v1814 = vpop.f32.mrf.mxu0
    %1815 = vmatprep.mubr.bf16.mxu0 0
    %1816 = vmatmul.mubr.bf16.gmra.mxu0 %v169
    %v1817 = vpop.f32.mrf.mxu0
    %v1818 = vadd.f32 %v1695, %v1817
    %v1819 = vpop.f32.mrf.mxu0
    %v1820 = vpop.f32.mrf.mxu0
    %v1821 = vadd.f32 %v1698, %v1820
    %v1822 = vpop.f32.mrf.mxu0
    %1823 = vmatprep.mubr.bf16.mxu0 0
    %1824 = vmatmul.mubr.bf16.gmra.mxu0 %v172
    %v1825 = vpop.f32.mrf.mxu0
    %v1826 = vadd.f32 %v1703, %v1825
    %v1827 = vpop.f32.mrf.mxu0
    %v1828 = vpop.f32.mrf.mxu0
    %v1829 = vadd.f32 %v1706, %v1828
    %v1830 = vpop.f32.mrf.mxu0
    %1831 = vmatprep.mubr.bf16.mxu0 0
    %1832 = vmatmul.mubr.bf16.gmra.mxu0 %v175
    %v1833 = vpop.f32.mrf.mxu0
    %v1834 = vadd.f32 %v1711, %v1833
    %v1835 = vpop.f32.mrf.mxu0
    %v1836 = vpop.f32.mrf.mxu0
    %v1837 = vadd.f32 %v1714, %v1836
    %v1838 = vpop.f32.mrf.mxu0
    %1839 = vmatprep.mubr.bf16.mxu0 0
    %1840 = vmatmul.mubr.bf16.gmra.mxu0 %v178
    %v1841 = vpop.f32.mrf.mxu0
    %v1842 = vadd.f32 %v1719, %v1841
    %v1843 = vpop.f32.mrf.mxu0
    %v1844 = vpop.f32.mrf.mxu0
    %v1845 = vadd.f32 %v1722, %v1844
    %v1846 = vpop.f32.mrf.mxu0
    %1847 = vdwg.mxu0
    %v1848 = vmax.f32 %v1526, %v1802
    %v1849 = vmax.f32 %v1529, %v1805
    %v1850 = vmax.f32 %v1534, %v1810
    %v1851 = vmax.f32 %v1537, %v1813
    %v1852 = vmax.f32 %v1542, %v1818
    %v1853 = vmax.f32 %v1545, %v1821
    %v1854 = vmax.f32 %v1550, %v1826
    %v1855 = vmax.f32 %v1553, %v1829
    %v1856 = vmax.f32 %v1558, %v1834
    %v1857 = vmax.f32 %v1561, %v1837
    %v1858 = vmax.f32 %v1566, %v1842
    %v1859 = vmax.f32 %v1569, %v1845
    %s1860 = scalar_lea.vmem %s1, 336
    %v1861 = vld [vmem:[%s1860] sm:$0xf]
    %v1862 = vld [vmem:[%s1860 + $0x4] sm:$0xf]
    %v1863 = vld [vmem:[%s1860 + $0x8] sm:$0xf]
    %v1864 = vld [vmem:[%s1860 + $0xc] sm:$0xf]
    %v1865 = vld [vmem:[%s1860 + $0x10] sm:$0xf]
    %v1866 = vld [vmem:[%s1860 + $0x14] sm:$0xf]
    %v1867 = vld [vmem:[%s1860 + $0x18] sm:$0xf]
    %v1868 = vld [vmem:[%s1860 + $0x1c] sm:$0xf]
    %v1869 = vld [vmem:[%s1860 + $0x20] sm:$0xf]
    %v1870 = vld [vmem:[%s1860 + $0x24] sm:$0xf]
    %v1871 = vld [vmem:[%s1860 + $0x28] sm:$0xf]
    %v1872 = vld [vmem:[%s1860 + $0x2c] sm:$0xf]
    %v1873 = vld [vmem:[%s1860 + $0x30] sm:$0xf]
    %v1874 = vld [vmem:[%s1860 + $0x34] sm:$0xf]
    %s1875 = scalar_lea.vmem [#allocation2], 336
    %v1876 = vld [vmem:[%s1875] sm:$0xf]
    %v1877 = vld [vmem:[%s1875 + $0x4] sm:$0xf]
    %v1878 = vld [vmem:[%s1875 + $0x8] sm:$0xf]
    %v1879 = vld [vmem:[%s1875 + $0xc] sm:$0xf]
    %v1880 = vld [vmem:[%s1875 + $0x10] sm:$0xf]
    %v1881 = vld [vmem:[%s1875 + $0x14] sm:$0xf]
    %v1882 = vld [vmem:[%s1875 + $0x18] sm:$0xf]
    %v1883 = vld [vmem:[%s1875 + $0x1c] sm:$0xf]
    %v1884 = vld [vmem:[%s1875 + $0x20] sm:$0xf]
    %v1885 = vld [vmem:[%s1875 + $0x24] sm:$0xf]
    %v1886 = vld [vmem:[%s1875 + $0x28] sm:$0xf]
    %v1887 = vld [vmem:[%s1875 + $0x2c] sm:$0xf]
    %v1888 = vld [vmem:[%s1875 + $0x30] sm:$0xf]
    %v1889 = vld [vmem:[%s1875 + $0x34] sm:$0xf]
    %v1904 = vunpack.c.l.b16 %v1876
    %v1905 = vunpack.c.l.b16 %v1877
    %v1906 = vunpack.c.l.b16 %v1878
    %v1907 = vunpack.c.l.b16 %v1879
    %v1908 = vunpack.c.l.b16 %v1880
    %v1909 = vunpack.c.l.b16 %v1881
    %v1910 = vunpack.c.l.b16 %v1882
    %v1911 = vunpack.c.l.b16 %v1883
    %v1912 = vunpack.c.l.b16 %v1884
    %v1913 = vunpack.c.l.b16 %v1885
    %v1914 = vunpack.c.l.b16 %v1886
    %v1915 = vunpack.c.l.b16 %v1887
    %v1916 = vunpack.c.l.b16 %v1888
    %v1917 = vunpack.c.l.b16 %v1889
    %v1918 = vpack.c.b16 %v1905, %v1904
    %v1919 = vpack.c.b16 %v1907, %v1906
    %v1920 = vpack.c.b16 %v1909, %v1908
    %v1921 = vpack.c.b16 %v1911, %v1910
    %v1922 = vpack.c.b16 %v1913, %v1912
    %v1923 = vpack.c.b16 %v1915, %v1914
    %v1924 = vpack.c.b16 %v1917, %v1916
    %1932 = vmatprep.subr.bf16.mxu0 0
    %1933 = vmatpush1.bf16.msra.mxu0 0
    %1934 = vmatprep.subr.bf16.mxu0 0
    %1935 = vmatpush1.bf16.msra.mxu0 %v1924
    %1936 = vmatprep.subr.bf16.mxu0 0
    %1937 = vmatpush1.bf16.msra.mxu0 %v1923
    %1938 = vmatprep.subr.bf16.mxu0 0
    %1939 = vmatpush1.bf16.msra.mxu0 %v1922
    %1940 = vmatprep.subr.bf16.mxu0 0
    %1941 = vmatpush1.bf16.msra.mxu0 %v1921
    %1942 = vmatprep.subr.bf16.mxu0 0
    %1943 = vmatpush1.bf16.msra.mxu0 %v1920
    %1944 = vmatprep.subr.bf16.mxu0 0
    %1945 = vmatpush1.bf16.msra.mxu0 %v1919
    %1946 = vmatprep.subr.bf16.mxu0 0
    %1947 = vmatpush1.bf16.msra.mxu0 %v1918
    %1948 = vmatprep.subr.bf16.mxu0 0
    %1949 = vmatpush2.bf16.msra.mxu0 0
    %1950 = vmatprep.subr.bf16.mxu0 0
    %1951 = vmatpush2.bf16.msra.mxu0 0
    %1952 = vmatprep.subr.bf16.mxu0 0
    %1953 = vmatpush2.bf16.msra.mxu0 0
    %1954 = vmatprep.subr.bf16.mxu0 0
    %1955 = vmatpush2.bf16.msra.mxu0 0
    %1956 = vmatprep.subr.bf16.mxu0 0
    %1957 = vmatpush2.bf16.msra.mxu0 0
    %1958 = vmatprep.subr.bf16.mxu0 0
    %1959 = vmatpush2.bf16.msra.mxu0 0
    %1960 = vmatprep.subr.bf16.mxu0 0
    %1961 = vmatpush2.bf16.msra.mxu0 0
    %1962 = vmatprep.subr.bf16.mxu0 0
    %1963 = vmatpush2.bf16.msra.mxu0 0
    %1964 = vmatprep.mubr.bf16.mxu0 0
    %1965 = vmatmul.mubr.bf16.gmra.mxu0 %v166
    %v1966 = vpop.f32.mrf.mxu0
    %v1967 = vadd.f32 0.0, %v1966
    %v1968 = vpop.f32.mrf.mxu0
    %v1969 = vpop.f32.mrf.mxu0
    %v1970 = vadd.f32 0.0, %v1969
    %v1971 = vpop.f32.mrf.mxu0
    %1972 = vmatprep.mubr.bf16.mxu0 0
    %1973 = vmatmul.mubr.bf16.gmra.mxu0 %v169
    %v1974 = vpop.f32.mrf.mxu0
    %v1975 = vadd.f32 0.0, %v1974
    %v1976 = vpop.f32.mrf.mxu0
    %v1977 = vpop.f32.mrf.mxu0
    %v1978 = vadd.f32 0.0, %v1977
    %v1979 = vpop.f32.mrf.mxu0
    %1980 = vmatprep.mubr.bf16.mxu0 0
    %1981 = vmatmul.mubr.bf16.gmra.mxu0 %v172
    %v1982 = vpop.f32.mrf.mxu0
    %v1983 = vadd.f32 0.0, %v1982
    %v1984 = vpop.f32.mrf.mxu0
    %v1985 = vpop.f32.mrf.mxu0
    %v1986 = vadd.f32 0.0, %v1985
    %v1987 = vpop.f32.mrf.mxu0
    %1988 = vmatprep.mubr.bf16.mxu0 0
    %1989 = vmatmul.mubr.bf16.gmra.mxu0 %v175
    %v1990 = vpop.f32.mrf.mxu0
    %v1991 = vadd.f32 0.0, %v1990
    %v1992 = vpop.f32.mrf.mxu0
    %v1993 = vpop.f32.mrf.mxu0
    %v1994 = vadd.f32 0.0, %v1993
    %v1995 = vpop.f32.mrf.mxu0
    %1996 = vmatprep.mubr.bf16.mxu0 0
    %1997 = vmatmul.mubr.bf16.gmra.mxu0 %v178
    %v1998 = vpop.f32.mrf.mxu0
    %v1999 = vadd.f32 0.0, %v1998
    %v2000 = vpop.f32.mrf.mxu0
    %v2001 = vpop.f32.mrf.mxu0
    %v2002 = vadd.f32 0.0, %v2001
    %v2003 = vpop.f32.mrf.mxu0
    %2004 = vmatprep.mubr.bf16.mxu0 0
    %2005 = vmatmul.mubr.bf16.gmra.mxu0 %v181
    %v2006 = vpop.f32.mrf.mxu0
    %v2007 = vadd.f32 0.0, %v2006
    %v2008 = vpop.f32.mrf.mxu0
    %v2009 = vpop.f32.mrf.mxu0
    %v2010 = vadd.f32 0.0, %v2009
    %v2011 = vpop.f32.mrf.mxu0
    %2012 = vdwg.mxu0
    %v2027 = vunpack.c.l.b16 %v1861
    %v2028 = vunpack.c.l.b16 %v1862
    %v2029 = vunpack.c.l.b16 %v1863
    %v2030 = vunpack.c.l.b16 %v1864
    %v2031 = vunpack.c.l.b16 %v1865
    %v2032 = vunpack.c.l.b16 %v1866
    %v2033 = vunpack.c.l.b16 %v1867
    %v2034 = vunpack.c.l.b16 %v1868
    %v2035 = vunpack.c.l.b16 %v1869
    %v2036 = vunpack.c.l.b16 %v1870
    %v2037 = vunpack.c.l.b16 %v1871
    %v2038 = vunpack.c.l.b16 %v1872
    %v2039 = vunpack.c.l.b16 %v1873
    %v2040 = vunpack.c.l.b16 %v1874
    %v2041 = vpack.c.b16 %v2028, %v2027
    %v2042 = vpack.c.b16 %v2030, %v2029
    %v2043 = vpack.c.b16 %v2032, %v2031
    %v2044 = vpack.c.b16 %v2034, %v2033
    %v2045 = vpack.c.b16 %v2036, %v2035
    %v2046 = vpack.c.b16 %v2038, %v2037
    %v2047 = vpack.c.b16 %v2040, %v2039
    %2055 = vmatprep.subr.bf16.mxu0 0
    %2056 = vmatpush1.bf16.msra.mxu0 0
    %2057 = vmatprep.subr.bf16.mxu0 0
    %2058 = vmatpush1.bf16.msra.mxu0 %v2047
    %2059 = vmatprep.subr.bf16.mxu0 0
    %2060 = vmatpush1.bf16.msra.mxu0 %v2046
    %2061 = vmatprep.subr.bf16.mxu0 0
    %2062 = vmatpush1.bf16.msra.mxu0 %v2045
    %2063 = vmatprep.subr.bf16.mxu0 0
    %2064 = vmatpush1.bf16.msra.mxu0 %v2044
    %2065 = vmatprep.subr.bf16.mxu0 0
    %2066 = vmatpush1.bf16.msra.mxu0 %v2043
    %2067 = vmatprep.subr.bf16.mxu0 0
    %2068 = vmatpush1.bf16.msra.mxu0 %v2042
    %2069 = vmatprep.subr.bf16.mxu0 0
    %2070 = vmatpush1.bf16.msra.mxu0 %v2041
    %2071 = vmatprep.subr.bf16.mxu0 0
    %2072 = vmatpush2.bf16.msra.mxu0 0
    %2073 = vmatprep.subr.bf16.mxu0 0
    %2074 = vmatpush2.bf16.msra.mxu0 0
    %2075 = vmatprep.subr.bf16.mxu0 0
    %2076 = vmatpush2.bf16.msra.mxu0 0
    %2077 = vmatprep.subr.bf16.mxu0 0
    %2078 = vmatpush2.bf16.msra.mxu0 0
    %2079 = vmatprep.subr.bf16.mxu0 0
    %2080 = vmatpush2.bf16.msra.mxu0 0
    %2081 = vmatprep.subr.bf16.mxu0 0
    %2082 = vmatpush2.bf16.msra.mxu0 0
    %2083 = vmatprep.subr.bf16.mxu0 0
    %2084 = vmatpush2.bf16.msra.mxu0 0
    %2085 = vmatprep.subr.bf16.mxu0 0
    %2086 = vmatpush2.bf16.msra.mxu0 0
    %2087 = vmatprep.mubr.bf16.mxu0 0
    %2088 = vmatmul.mubr.bf16.gmra.mxu0 %v312
    %v2089 = vpop.f32.mrf.mxu0
    %v2090 = vadd.f32 %v1967, %v2089
    %v2091 = vpop.f32.mrf.mxu0
    %v2092 = vpop.f32.mrf.mxu0
    %v2093 = vadd.f32 %v1970, %v2092
    %v2094 = vpop.f32.mrf.mxu0
    %2095 = vmatprep.mubr.bf16.mxu0 0
    %2096 = vmatmul.mubr.bf16.gmra.mxu0 %v166
    %v2097 = vpop.f32.mrf.mxu0
    %v2098 = vadd.f32 %v1975, %v2097
    %v2099 = vpop.f32.mrf.mxu0
    %v2100 = vpop.f32.mrf.mxu0
    %v2101 = vadd.f32 %v1978, %v2100
    %v2102 = vpop.f32.mrf.mxu0
    %2103 = vmatprep.mubr.bf16.mxu0 0
    %2104 = vmatmul.mubr.bf16.gmra.mxu0 %v169
    %v2105 = vpop.f32.mrf.mxu0
    %v2106 = vadd.f32 %v1983, %v2105
    %v2107 = vpop.f32.mrf.mxu0
    %v2108 = vpop.f32.mrf.mxu0
    %v2109 = vadd.f32 %v1986, %v2108
    %v2110 = vpop.f32.mrf.mxu0
    %2111 = vmatprep.mubr.bf16.mxu0 0
    %2112 = vmatmul.mubr.bf16.gmra.mxu0 %v172
    %v2113 = vpop.f32.mrf.mxu0
    %v2114 = vadd.f32 %v1991, %v2113
    %v2115 = vpop.f32.mrf.mxu0
    %v2116 = vpop.f32.mrf.mxu0
    %v2117 = vadd.f32 %v1994, %v2116
    %v2118 = vpop.f32.mrf.mxu0
    %2119 = vmatprep.mubr.bf16.mxu0 0
    %2120 = vmatmul.mubr.bf16.gmra.mxu0 %v175
    %v2121 = vpop.f32.mrf.mxu0
    %v2122 = vadd.f32 %v1999, %v2121
    %v2123 = vpop.f32.mrf.mxu0
    %v2124 = vpop.f32.mrf.mxu0
    %v2125 = vadd.f32 %v2002, %v2124
    %v2126 = vpop.f32.mrf.mxu0
    %2127 = vmatprep.mubr.bf16.mxu0 0
    %2128 = vmatmul.mubr.bf16.gmra.mxu0 %v178
    %v2129 = vpop.f32.mrf.mxu0
    %v2130 = vadd.f32 %v2007, %v2129
    %v2131 = vpop.f32.mrf.mxu0
    %v2132 = vpop.f32.mrf.mxu0
    %v2133 = vadd.f32 %v2010, %v2132
    %v2134 = vpop.f32.mrf.mxu0
    %2135 = vdwg.mxu0
    %v2136 = vmax.f32 %v1848, %v2090
    %v2137 = vmax.f32 %v1849, %v2093
    %v2138 = vmax.f32 %v1850, %v2098
    %v2139 = vmax.f32 %v1851, %v2101
    %v2140 = vmax.f32 %v1852, %v2106
    %v2141 = vmax.f32 %v1853, %v2109
    %v2142 = vmax.f32 %v1854, %v2114
    %v2143 = vmax.f32 %v1855, %v2117
    %v2144 = vmax.f32 %v1856, %v2122
    %v2145 = vmax.f32 %v1857, %v2125
    %v2146 = vmax.f32 %v1858, %v2130
    %v2147 = vmax.f32 %v1859, %v2133
    %s2148 = scalar_lea.vmem %s1, 392
    %v2149 = vld [vmem:[%s2148] sm:$0xf]
    %v2150 = vld [vmem:[%s2148 + $0x4] sm:$0xf]
    %v2151 = vld [vmem:[%s2148 + $0x8] sm:$0xf]
    %v2152 = vld [vmem:[%s2148 + $0xc] sm:$0xf]
    %v2153 = vld [vmem:[%s2148 + $0x10] sm:$0xf]
    %v2154 = vld [vmem:[%s2148 + $0x14] sm:$0xf]
    %v2155 = vld [vmem:[%s2148 + $0x18] sm:$0xf]
    %v2156 = vld [vmem:[%s2148 + $0x1c] sm:$0xf]
    %v2157 = vld [vmem:[%s2148 + $0x20] sm:$0xf]
    %v2158 = vld [vmem:[%s2148 + $0x24] sm:$0xf]
    %v2159 = vld [vmem:[%s2148 + $0x28] sm:$0xf]
    %v2160 = vld [vmem:[%s2148 + $0x2c] sm:$0xf]
    %v2161 = vld [vmem:[%s2148 + $0x30] sm:$0xf]
    %v2162 = vld [vmem:[%s2148 + $0x34] sm:$0xf]
    %s2163 = scalar_lea.vmem [#allocation2], 392
    %v2164 = vld [vmem:[%s2163] sm:$0xf]
    %v2165 = vld [vmem:[%s2163 + $0x4] sm:$0xf]
    %v2166 = vld [vmem:[%s2163 + $0x8] sm:$0xf]
    %v2167 = vld [vmem:[%s2163 + $0xc] sm:$0xf]
    %v2168 = vld [vmem:[%s2163 + $0x10] sm:$0xf]
    %v2169 = vld [vmem:[%s2163 + $0x14] sm:$0xf]
    %v2170 = vld [vmem:[%s2163 + $0x18] sm:$0xf]
    %v2171 = vld [vmem:[%s2163 + $0x1c] sm:$0xf]
    %v2172 = vld [vmem:[%s2163 + $0x20] sm:$0xf]
    %v2173 = vld [vmem:[%s2163 + $0x24] sm:$0xf]
    %v2174 = vld [vmem:[%s2163 + $0x28] sm:$0xf]
    %v2175 = vld [vmem:[%s2163 + $0x2c] sm:$0xf]
    %v2176 = vld [vmem:[%s2163 + $0x30] sm:$0xf]
    %v2177 = vld [vmem:[%s2163 + $0x34] sm:$0xf]
    %v2192 = vunpack.c.l.b16 %v2164
    %v2193 = vunpack.c.l.b16 %v2165
    %v2194 = vunpack.c.l.b16 %v2166
    %v2195 = vunpack.c.l.b16 %v2167
    %v2196 = vunpack.c.l.b16 %v2168
    %v2197 = vunpack.c.l.b16 %v2169
    %v2198 = vunpack.c.l.b16 %v2170
    %v2199 = vunpack.c.l.b16 %v2171
    %v2200 = vunpack.c.l.b16 %v2172
    %v2201 = vunpack.c.l.b16 %v2173
    %v2202 = vunpack.c.l.b16 %v2174
    %v2203 = vunpack.c.l.b16 %v2175
    %v2204 = vunpack.c.l.b16 %v2176
    %v2205 = vunpack.c.l.b16 %v2177
    %v2206 = vpack.c.b16 %v2193, %v2192
    %v2207 = vpack.c.b16 %v2195, %v2194
    %v2208 = vpack.c.b16 %v2197, %v2196
    %v2209 = vpack.c.b16 %v2199, %v2198
    %v2210 = vpack.c.b16 %v2201, %v2200
    %v2211 = vpack.c.b16 %v2203, %v2202
    %v2212 = vpack.c.b16 %v2205, %v2204
    %2220 = vmatprep.subr.bf16.mxu0 0
    %2221 = vmatpush1.bf16.msra.mxu0 0
    %2222 = vmatprep.subr.bf16.mxu0 0
    %2223 = vmatpush1.bf16.msra.mxu0 %v2212
    %2224 = vmatprep.subr.bf16.mxu0 0
    %2225 = vmatpush1.bf16.msra.mxu0 %v2211
    %2226 = vmatprep.subr.bf16.mxu0 0
    %2227 = vmatpush1.bf16.msra.mxu0 %v2210
    %2228 = vmatprep.subr.bf16.mxu0 0
    %2229 = vmatpush1.bf16.msra.mxu0 %v2209
    %2230 = vmatprep.subr.bf16.mxu0 0
    %2231 = vmatpush1.bf16.msra.mxu0 %v2208
    %2232 = vmatprep.subr.bf16.mxu0 0
    %2233 = vmatpush1.bf16.msra.mxu0 %v2207
    %2234 = vmatprep.subr.bf16.mxu0 0
    %2235 = vmatpush1.bf16.msra.mxu0 %v2206
    %2236 = vmatprep.subr.bf16.mxu0 0
    %2237 = vmatpush2.bf16.msra.mxu0 0
    %2238 = vmatprep.subr.bf16.mxu0 0
    %2239 = vmatpush2.bf16.msra.mxu0 0
    %2240 = vmatprep.subr.bf16.mxu0 0
    %2241 = vmatpush2.bf16.msra.mxu0 0
    %2242 = vmatprep.subr.bf16.mxu0 0
    %2243 = vmatpush2.bf16.msra.mxu0 0
    %2244 = vmatprep.subr.bf16.mxu0 0
    %2245 = vmatpush2.bf16.msra.mxu0 0
    %2246 = vmatprep.subr.bf16.mxu0 0
    %2247 = vmatpush2.bf16.msra.mxu0 0
    %2248 = vmatprep.subr.bf16.mxu0 0
    %2249 = vmatpush2.bf16.msra.mxu0 0
    %2250 = vmatprep.subr.bf16.mxu0 0
    %2251 = vmatpush2.bf16.msra.mxu0 0
    %2252 = vmatprep.mubr.bf16.mxu0 0
    %2253 = vmatmul.mubr.bf16.gmra.mxu0 %v166
    %v2254 = vpop.f32.mrf.mxu0
    %v2255 = vadd.f32 0.0, %v2254
    %v2256 = vpop.f32.mrf.mxu0
    %v2257 = vpop.f32.mrf.mxu0
    %v2258 = vadd.f32 0.0, %v2257
    %v2259 = vpop.f32.mrf.mxu0
    %2260 = vmatprep.mubr.bf16.mxu0 0
    %2261 = vmatmul.mubr.bf16.gmra.mxu0 %v169
    %v2262 = vpop.f32.mrf.mxu0
    %v2263 = vadd.f32 0.0, %v2262
    %v2264 = vpop.f32.mrf.mxu0
    %v2265 = vpop.f32.mrf.mxu0
    %v2266 = vadd.f32 0.0, %v2265
    %v2267 = vpop.f32.mrf.mxu0
    %2268 = vmatprep.mubr.bf16.mxu0 0
    %2269 = vmatmul.mubr.bf16.gmra.mxu0 %v172
    %v2270 = vpop.f32.mrf.mxu0
    %v2271 = vadd.f32 0.0, %v2270
    %v2272 = vpop.f32.mrf.mxu0
    %v2273 = vpop.f32.mrf.mxu0
    %v2274 = vadd.f32 0.0, %v2273
    %v2275 = vpop.f32.mrf.mxu0
    %2276 = vmatprep.mubr.bf16.mxu0 0
    %2277 = vmatmul.mubr.bf16.gmra.mxu0 %v175
    %v2278 = vpop.f32.mrf.mxu0
    %v2279 = vadd.f32 0.0, %v2278
    %v2280 = vpop.f32.mrf.mxu0
    %v2281 = vpop.f32.mrf.mxu0
    %v2282 = vadd.f32 0.0, %v2281
    %v2283 = vpop.f32.mrf.mxu0
    %2284 = vmatprep.mubr.bf16.mxu0 0
    %2285 = vmatmul.mubr.bf16.gmra.mxu0 %v178
    %v2286 = vpop.f32.mrf.mxu0
    %v2287 = vadd.f32 0.0, %v2286
    %v2288 = vpop.f32.mrf.mxu0
    %v2289 = vpop.f32.mrf.mxu0
    %v2290 = vadd.f32 0.0, %v2289
    %v2291 = vpop.f32.mrf.mxu0
    %2292 = vmatprep.mubr.bf16.mxu0 0
    %2293 = vmatmul.mubr.bf16.gmra.mxu0 %v181
    %v2294 = vpop.f32.mrf.mxu0
    %v2295 = vadd.f32 0.0, %v2294
    %v2296 = vpop.f32.mrf.mxu0
    %v2297 = vpop.f32.mrf.mxu0
    %v2298 = vadd.f32 0.0, %v2297
    %v2299 = vpop.f32.mrf.mxu0
    %2300 = vdwg.mxu0
    %v2315 = vunpack.c.l.b16 %v2149
    %v2316 = vunpack.c.l.b16 %v2150
    %v2317 = vunpack.c.l.b16 %v2151
    %v2318 = vunpack.c.l.b16 %v2152
    %v2319 = vunpack.c.l.b16 %v2153
    %v2320 = vunpack.c.l.b16 %v2154
    %v2321 = vunpack.c.l.b16 %v2155
    %v2322 = vunpack.c.l.b16 %v2156
    %v2323 = vunpack.c.l.b16 %v2157
    %v2324 = vunpack.c.l.b16 %v2158
    %v2325 = vunpack.c.l.b16 %v2159
    %v2326 = vunpack.c.l.b16 %v2160
    %v2327 = vunpack.c.l.b16 %v2161
    %v2328 = vunpack.c.l.b16 %v2162
    %v2329 = vpack.c.b16 %v2316, %v2315
    %v2330 = vpack.c.b16 %v2318, %v2317
    %v2331 = vpack.c.b16 %v2320, %v2319
    %v2332 = vpack.c.b16 %v2322, %v2321
    %v2333 = vpack.c.b16 %v2324, %v2323
    %v2334 = vpack.c.b16 %v2326, %v2325
    %v2335 = vpack.c.b16 %v2328, %v2327
    %2343 = vmatprep.subr.bf16.mxu0 0
    %2344 = vmatpush1.bf16.msra.mxu0 0
    %2345 = vmatprep.subr.bf16.mxu0 0
    %2346 = vmatpush1.bf16.msra.mxu0 %v2335
    %2347 = vmatprep.subr.bf16.mxu0 0
    %2348 = vmatpush1.bf16.msra.mxu0 %v2334
    %2349 = vmatprep.subr.bf16.mxu0 0
    %2350 = vmatpush1.bf16.msra.mxu0 %v2333
    %2351 = vmatprep.subr.bf16.mxu0 0
    %2352 = vmatpush1.bf16.msra.mxu0 %v2332
    %2353 = vmatprep.subr.bf16.mxu0 0
    %2354 = vmatpush1.bf16.msra.mxu0 %v2331
    %2355 = vmatprep.subr.bf16.mxu0 0
    %2356 = vmatpush1.bf16.msra.mxu0 %v2330
    %2357 = vmatprep.subr.bf16.mxu0 0
    %2358 = vmatpush1.bf16.msra.mxu0 %v2329
    %2359 = vmatprep.subr.bf16.mxu0 0
    %2360 = vmatpush2.bf16.msra.mxu0 0
    %2361 = vmatprep.subr.bf16.mxu0 0
    %2362 = vmatpush2.bf16.msra.mxu0 0
    %2363 = vmatprep.subr.bf16.mxu0 0
    %2364 = vmatpush2.bf16.msra.mxu0 0
    %2365 = vmatprep.subr.bf16.mxu0 0
    %2366 = vmatpush2.bf16.msra.mxu0 0
    %2367 = vmatprep.subr.bf16.mxu0 0
    %2368 = vmatpush2.bf16.msra.mxu0 0
    %2369 = vmatprep.subr.bf16.mxu0 0
    %2370 = vmatpush2.bf16.msra.mxu0 0
    %2371 = vmatprep.subr.bf16.mxu0 0
    %2372 = vmatpush2.bf16.msra.mxu0 0
    %2373 = vmatprep.subr.bf16.mxu0 0
    %2374 = vmatpush2.bf16.msra.mxu0 0
    %2375 = vmatprep.mubr.bf16.mxu0 0
    %2376 = vmatmul.mubr.bf16.gmra.mxu0 %v312
    %v2377 = vpop.f32.mrf.mxu0
    %v2378 = vadd.f32 %v2255, %v2377
    %v2379 = vpop.f32.mrf.mxu0
    %v2380 = vpop.f32.mrf.mxu0
    %v2381 = vadd.f32 %v2258, %v2380
    %v2382 = vpop.f32.mrf.mxu0
    %2383 = vmatprep.mubr.bf16.mxu0 0
    %2384 = vmatmul.mubr.bf16.gmra.mxu0 %v166
    %v2385 = vpop.f32.mrf.mxu0
    %v2386 = vadd.f32 %v2263, %v2385
    %v2387 = vpop.f32.mrf.mxu0
    %v2388 = vpop.f32.mrf.mxu0
    %v2389 = vadd.f32 %v2266, %v2388
    %v2390 = vpop.f32.mrf.mxu0
    %2391 = vmatprep.mubr.bf16.mxu0 0
    %2392 = vmatmul.mubr.bf16.gmra.mxu0 %v169
    %v2393 = vpop.f32.mrf.mxu0
    %v2394 = vadd.f32 %v2271, %v2393
    %v2395 = vpop.f32.mrf.mxu0
    %v2396 = vpop.f32.mrf.mxu0
    %v2397 = vadd.f32 %v2274, %v2396
    %v2398 = vpop.f32.mrf.mxu0
    %2399 = vmatprep.mubr.bf16.mxu0 0
    %2400 = vmatmul.mubr.bf16.gmra.mxu0 %v172
    %v2401 = vpop.f32.mrf.mxu0
    %v2402 = vadd.f32 %v2279, %v2401
    %v2403 = vpop.f32.mrf.mxu0
    %v2404 = vpop.f32.mrf.mxu0
    %v2405 = vadd.f32 %v2282, %v2404
    %v2406 = vpop.f32.mrf.mxu0
    %2407 = vmatprep.mubr.bf16.mxu0 0
    %2408 = vmatmul.mubr.bf16.gmra.mxu0 %v175
    %v2409 = vpop.f32.mrf.mxu0
    %v2410 = vadd.f32 %v2287, %v2409
    %v2411 = vpop.f32.mrf.mxu0
    %v2412 = vpop.f32.mrf.mxu0
    %v2413 = vadd.f32 %v2290, %v2412
    %v2414 = vpop.f32.mrf.mxu0
    %2415 = vmatprep.mubr.bf16.mxu0 0
    %2416 = vmatmul.mubr.bf16.gmra.mxu0 %v178
    %v2417 = vpop.f32.mrf.mxu0
    %v2418 = vadd.f32 %v2295, %v2417
    %v2419 = vpop.f32.mrf.mxu0
    %v2420 = vpop.f32.mrf.mxu0
    %v2421 = vadd.f32 %v2298, %v2420
    %v2422 = vpop.f32.mrf.mxu0
    %2423 = vdwg.mxu0
    %v2424 = vmax.f32 %v2136, %v2378
    %v2425 = vmax.f32 %v2137, %v2381
    %v2426 = vmax.f32 %v2138, %v2386
    %v2427 = vmax.f32 %v2139, %v2389
    %v2428 = vmax.f32 %v2140, %v2394
    %v2429 = vmax.f32 %v2141, %v2397
    %v2430 = vmax.f32 %v2142, %v2402
    %v2431 = vmax.f32 %v2143, %v2405
    %v2432 = vmax.f32 %v2144, %v2410
    %v2433 = vmax.f32 %v2145, %v2413
    %v2434 = vmax.f32 %v2146, %v2418
    %v2435 = vmax.f32 %v2147, %v2421
    %v2436 = vadd.f32 %v2424, %v1264
    %v2437 = vadd.f32 %v2425, %v1264
    %v2438 = vadd.f32 %v2426, %v1264
    %v2439 = vadd.f32 %v2427, %v1264
    %v2440 = vadd.f32 %v2428, %v1264
    %v2441 = vadd.f32 %v2429, %v1264
    %v2442 = vadd.f32 %v2430, %v1264
    %v2443 = vadd.f32 %v2431, %v1264
    %v2444 = vadd.f32 %v2432, %v1264
    %v2445 = vadd.f32 %v2433, %v1264
    %v2446 = vadd.f32 %v2434, %v1264
    %v2447 = vadd.f32 %v2435, %v1264
    %v2448 = vmax.f32 %v2436, 0.0
    %v2449 = vmax.f32 %v2437, 0.0
    %v2450 = vmax.f32 %v2438, 0.0
    %v2451 = vmax.f32 %v2439, 0.0
    %v2452 = vmax.f32 %v2440, 0.0
    %v2453 = vmax.f32 %v2441, 0.0
    %v2454 = vmax.f32 %v2442, 0.0
    %v2455 = vmax.f32 %v2443, 0.0
    %v2456 = vmax.f32 %v2444, 0.0
    %v2457 = vmax.f32 %v2445, 0.0
    %v2458 = vmax.f32 %v2446, 0.0
    %v2459 = vmax.f32 %v2447, 0.0
    %v2460 = vpack.c.bf16 %v2449, %v2448
    %v2461 = vpack.c.bf16 %v2451, %v2450
    %v2462 = vpack.c.bf16 %v2453, %v2452
    %v2463 = vpack.c.bf16 %v2455, %v2454
    %v2464 = vpack.c.bf16 %v2457, %v2456
    %v2465 = vpack.c.bf16 %v2459, %v2458
    %v2466 = vld [vmem:[%s4] sm:$0xf]
    %v2467 = vld [vmem:[%s4 + $0x4] sm:$0xf]
    %v2468 = vld [vmem:[%s4 + $0x8] sm:$0xf]
    %v2469 = vld [vmem:[%s4 + $0xc] sm:$0xf]
    %v2470 = vld [vmem:[%s4 + $0x10] sm:$0xf]
    %v2471 = vld [vmem:[%s4 + $0x14] sm:$0xf]
    %v2472 = vld [vmem:[%s4 + $0x18] sm:$0xf]
    %v2473 = vld [vmem:[%s4 + $0x1c] sm:$0xf]
    %v2474 = vld [vmem:[%s4 + $0x20] sm:$0xf]
    %v2475 = vld [vmem:[%s4 + $0x24] sm:$0xf]
    %v2476 = vld [vmem:[%s4 + $0x28] sm:$0xf]
    %v2477 = vld [vmem:[%s4 + $0x2c] sm:$0xf]
    %v2478 = vld [vmem:[%s4 + $0x30] sm:$0xf]
    %v2479 = vld [vmem:[%s4 + $0x34] sm:$0xf]
    %v2480 = vld [vmem:[%s4 + $0x38] sm:$0xf]
    %v2481 = vld [vmem:[%s4 + $0x3c] sm:$0xf]
    %s2482 = scalar_lea.vmem %s4, 128
    %v2483 = vld [vmem:[%s2482] sm:$0xf]
    %v2484 = vld [vmem:[%s2482 + $0x4] sm:$0xf]
    %v2485 = vld [vmem:[%s2482 + $0x8] sm:$0xf]
    %v2486 = vld [vmem:[%s2482 + $0xc] sm:$0xf]
    %v2487 = vld [vmem:[%s2482 + $0x10] sm:$0xf]
    %v2488 = vld [vmem:[%s2482 + $0x14] sm:$0xf]
    %v2489 = vld [vmem:[%s2482 + $0x18] sm:$0xf]
    %v2490 = vld [vmem:[%s2482 + $0x1c] sm:$0xf]
    %v2491 = vld [vmem:[%s2482 + $0x20] sm:$0xf]
    %v2492 = vld [vmem:[%s2482 + $0x24] sm:$0xf]
    %v2493 = vld [vmem:[%s2482 + $0x28] sm:$0xf]
    %v2494 = vld [vmem:[%s2482 + $0x2c] sm:$0xf]
    %v2495 = vld [vmem:[%s2482 + $0x30] sm:$0xf]
    %v2496 = vld [vmem:[%s2482 + $0x34] sm:$0xf]
    %v2497 = vld [vmem:[%s2482 + $0x38] sm:$0xf]
    %v2498 = vld [vmem:[%s2482 + $0x3c] sm:$0xf]
    %v2515 = vunpack.c.l.b16 %v2483
    %v2516 = vunpack.c.l.b16 %v2484
    %v2517 = vunpack.c.l.b16 %v2485
    %v2518 = vunpack.c.l.b16 %v2486
    %v2519 = vunpack.c.l.b16 %v2487
    %v2520 = vunpack.c.l.b16 %v2488
    %v2521 = vunpack.c.l.b16 %v2489
    %v2522 = vunpack.c.l.b16 %v2490
    %v2523 = vunpack.c.l.b16 %v2491
    %v2524 = vunpack.c.l.b16 %v2492
    %v2525 = vunpack.c.l.b16 %v2493
    %v2526 = vunpack.c.l.b16 %v2494
    %v2527 = vunpack.c.l.b16 %v2495
    %v2528 = vunpack.c.l.b16 %v2496
    %v2529 = vunpack.c.l.b16 %v2497
    %v2530 = vunpack.c.l.b16 %v2498
    %v2531 = vpack.c.b16 %v2516, %v2515
    %v2532 = vpack.c.b16 %v2518, %v2517
    %v2533 = vpack.c.b16 %v2520, %v2519
    %v2534 = vpack.c.b16 %v2522, %v2521
    %v2535 = vpack.c.b16 %v2524, %v2523
    %v2536 = vpack.c.b16 %v2526, %v2525
    %v2537 = vpack.c.b16 %v2528, %v2527
    %v2538 = vpack.c.b16 %v2530, %v2529
    %2547 = vmatprep.subr.bf16.mxu0 0
    %2548 = vmatpush1.bf16.msra.mxu0 %v2538
    %2549 = vmatprep.subr.bf16.mxu0 0
    %2550 = vmatpush1.bf16.msra.mxu0 %v2537
    %2551 = vmatprep.subr.bf16.mxu0 0
    %2552 = vmatpush1.bf16.msra.mxu0 %v2536
    %2553 = vmatprep.subr.bf16.mxu0 0
    %2554 = vmatpush1.bf16.msra.mxu0 %v2535
    %2555 = vmatprep.subr.bf16.mxu0 0
    %2556 = vmatpush1.bf16.msra.mxu0 %v2534
    %2557 = vmatprep.subr.bf16.mxu0 0
    %2558 = vmatpush1.bf16.msra.mxu0 %v2533
    %2559 = vmatprep.subr.bf16.mxu0 0
    %2560 = vmatpush1.bf16.msra.mxu0 %v2532
    %2561 = vmatprep.subr.bf16.mxu0 0
    %2562 = vmatpush1.bf16.msra.mxu0 %v2531
    %2563 = vmatprep.subr.bf16.mxu0 0
    %2564 = vmatpush2.bf16.msra.mxu0 0
    %2565 = vmatprep.subr.bf16.mxu0 0
    %2566 = vmatpush2.bf16.msra.mxu0 0
    %2567 = vmatprep.subr.bf16.mxu0 0
    %2568 = vmatpush2.bf16.msra.mxu0 0
    %2569 = vmatprep.subr.bf16.mxu0 0
    %2570 = vmatpush2.bf16.msra.mxu0 0
    %2571 = vmatprep.subr.bf16.mxu0 0
    %2572 = vmatpush2.bf16.msra.mxu0 0
    %2573 = vmatprep.subr.bf16.mxu0 0
    %2574 = vmatpush2.bf16.msra.mxu0 0
    %2575 = vmatprep.subr.bf16.mxu0 0
    %2576 = vmatpush2.bf16.msra.mxu0 0
    %2577 = vmatprep.subr.bf16.mxu0 0
    %2578 = vmatpush2.bf16.msra.mxu0 0
    %2579 = vmatprep.mubr.bf16.mxu0 0
    %2580 = vmatmul.mubr.bf16.gmra.mxu0 %v2460
    %v2581 = vpop.f32.mrf.mxu0
    %v2582 = vadd.f32 0.0, %v2581
    %v2583 = vpop.f32.mrf.mxu0
    %v2584 = vpop.f32.mrf.mxu0
    %v2585 = vadd.f32 0.0, %v2584
    %v2586 = vpop.f32.mrf.mxu0
    %2587 = vmatprep.mubr.bf16.mxu0 0
    %2588 = vmatmul.mubr.bf16.gmra.mxu0 %v2461
    %v2589 = vpop.f32.mrf.mxu0
    %v2590 = vadd.f32 0.0, %v2589
    %v2591 = vpop.f32.mrf.mxu0
    %v2592 = vpop.f32.mrf.mxu0
    %v2593 = vadd.f32 0.0, %v2592
    %v2594 = vpop.f32.mrf.mxu0
    %2595 = vmatprep.mubr.bf16.mxu0 0
    %2596 = vmatmul.mubr.bf16.gmra.mxu0 %v2462
    %v2597 = vpop.f32.mrf.mxu0
    %v2598 = vadd.f32 0.0, %v2597
    %v2599 = vpop.f32.mrf.mxu0
    %v2600 = vpop.f32.mrf.mxu0
    %v2601 = vadd.f32 0.0, %v2600
    %v2602 = vpop.f32.mrf.mxu0
    %2603 = vmatprep.mubr.bf16.mxu0 0
    %2604 = vmatmul.mubr.bf16.gmra.mxu0 %v2463
    %v2605 = vpop.f32.mrf.mxu0
    %v2606 = vadd.f32 0.0, %v2605
    %v2607 = vpop.f32.mrf.mxu0
    %v2608 = vpop.f32.mrf.mxu0
    %v2609 = vadd.f32 0.0, %v2608
    %v2610 = vpop.f32.mrf.mxu0
    %2611 = vdwg.mxu0
    %v2628 = vunpack.c.l.b16 %v2466
    %v2629 = vunpack.c.l.b16 %v2467
    %v2630 = vunpack.c.l.b16 %v2468
    %v2631 = vunpack.c.l.b16 %v2469
    %v2632 = vunpack.c.l.b16 %v2470
    %v2633 = vunpack.c.l.b16 %v2471
    %v2634 = vunpack.c.l.b16 %v2472
    %v2635 = vunpack.c.l.b16 %v2473
    %v2636 = vunpack.c.l.b16 %v2474
    %v2637 = vunpack.c.l.b16 %v2475
    %v2638 = vunpack.c.l.b16 %v2476
    %v2639 = vunpack.c.l.b16 %v2477
    %v2640 = vunpack.c.l.b16 %v2478
    %v2641 = vunpack.c.l.b16 %v2479
    %v2642 = vunpack.c.l.b16 %v2480
    %v2643 = vunpack.c.l.b16 %v2481
    %v2644 = vpack.c.b16 %v2629, %v2628
    %v2645 = vpack.c.b16 %v2631, %v2630
    %v2646 = vpack.c.b16 %v2633, %v2632
    %v2647 = vpack.c.b16 %v2635, %v2634
    %v2648 = vpack.c.b16 %v2637, %v2636
    %v2649 = vpack.c.b16 %v2639, %v2638
    %v2650 = vpack.c.b16 %v2641, %v2640
    %v2651 = vpack.c.b16 %v2643, %v2642
    %2660 = vmatprep.subr.bf16.mxu0 0
    %2661 = vmatpush1.bf16.msra.mxu0 %v2651
    %2662 = vmatprep.subr.bf16.mxu0 0
    %2663 = vmatpush1.bf16.msra.mxu0 %v2650
    %2664 = vmatprep.subr.bf16.mxu0 0
    %2665 = vmatpush1.bf16.msra.mxu0 %v2649
    %2666 = vmatprep.subr.bf16.mxu0 0
    %2667 = vmatpush1.bf16.msra.mxu0 %v2648
    %2668 = vmatprep.subr.bf16.mxu0 0
    %2669 = vmatpush1.bf16.msra.mxu0 %v2647
    %2670 = vmatprep.subr.bf16.mxu0 0
    %2671 = vmatpush1.bf16.msra.mxu0 %v2646
    %2672 = vmatprep.subr.bf16.mxu0 0
    %2673 = vmatpush1.bf16.msra.mxu0 %v2645
    %2674 = vmatprep.subr.bf16.mxu0 0
    %2675 = vmatpush1.bf16.msra.mxu0 %v2644
    %2676 = vmatprep.subr.bf16.mxu0 0
    %2677 = vmatpush2.bf16.msra.mxu0 0
    %2678 = vmatprep.subr.bf16.mxu0 0
    %2679 = vmatpush2.bf16.msra.mxu0 0
    %2680 = vmatprep.subr.bf16.mxu0 0
    %2681 = vmatpush2.bf16.msra.mxu0 0
    %2682 = vmatprep.subr.bf16.mxu0 0
    %2683 = vmatpush2.bf16.msra.mxu0 0
    %2684 = vmatprep.subr.bf16.mxu0 0
    %2685 = vmatpush2.bf16.msra.mxu0 0
    %2686 = vmatprep.subr.bf16.mxu0 0
    %2687 = vmatpush2.bf16.msra.mxu0 0
    %2688 = vmatprep.subr.bf16.mxu0 0
    %2689 = vmatpush2.bf16.msra.mxu0 0
    %2690 = vmatprep.subr.bf16.mxu0 0
    %2691 = vmatpush2.bf16.msra.mxu0 0
    %2692 = vmatprep.mubr.bf16.mxu0 0
    %2693 = vmatmul.mubr.bf16.gmra.mxu0 %v1290
    %v2694 = vpop.f32.mrf.mxu0
    %v2695 = vadd.f32 %v2582, %v2694
    %v2696 = vpop.f32.mrf.mxu0
    %v2697 = vpop.f32.mrf.mxu0
    %v2698 = vadd.f32 %v2585, %v2697
    %v2699 = vpop.f32.mrf.mxu0
    %2700 = vmatprep.mubr.bf16.mxu0 0
    %2701 = vmatmul.mubr.bf16.gmra.mxu0 %v1291
    %v2702 = vpop.f32.mrf.mxu0
    %v2703 = vadd.f32 %v2590, %v2702
    %v2704 = vpop.f32.mrf.mxu0
    %v2705 = vpop.f32.mrf.mxu0
    %v2706 = vadd.f32 %v2593, %v2705
    %v2707 = vpop.f32.mrf.mxu0
    %2708 = vmatprep.mubr.bf16.mxu0 0
    %2709 = vmatmul.mubr.bf16.gmra.mxu0 %v1292
    %v2710 = vpop.f32.mrf.mxu0
    %v2711 = vadd.f32 %v2598, %v2710
    %v2712 = vpop.f32.mrf.mxu0
    %v2713 = vpop.f32.mrf.mxu0
    %v2714 = vadd.f32 %v2601, %v2713
    %v2715 = vpop.f32.mrf.mxu0
    %2716 = vmatprep.mubr.bf16.mxu0 0
    %2717 = vmatmul.mubr.bf16.gmra.mxu0 %v1293
    %v2718 = vpop.f32.mrf.mxu0
    %v2719 = vadd.f32 %v2606, %v2718
    %v2720 = vpop.f32.mrf.mxu0
    %v2721 = vpop.f32.mrf.mxu0
    %v2722 = vadd.f32 %v2609, %v2721
    %v2723 = vpop.f32.mrf.mxu0
    %2724 = vdwg.mxu0
    %s2725 = scalar_lea.vmem %s4, 256
    %v2726 = vld [vmem:[%s2725] sm:$0xf]
    %v2727 = vld [vmem:[%s2725 + $0x4] sm:$0xf]
    %v2728 = vld [vmem:[%s2725 + $0x8] sm:$0xf]
    %v2729 = vld [vmem:[%s2725 + $0xc] sm:$0xf]
    %v2730 = vld [vmem:[%s2725 + $0x10] sm:$0xf]
    %v2731 = vld [vmem:[%s2725 + $0x14] sm:$0xf]
    %v2732 = vld [vmem:[%s2725 + $0x18] sm:$0xf]
    %v2733 = vld [vmem:[%s2725 + $0x1c] sm:$0xf]
    %v2734 = vld [vmem:[%s2725 + $0x20] sm:$0xf]
    %v2735 = vld [vmem:[%s2725 + $0x24] sm:$0xf]
    %v2736 = vld [vmem:[%s2725 + $0x28] sm:$0xf]
    %v2737 = vld [vmem:[%s2725 + $0x2c] sm:$0xf]
    %v2738 = vld [vmem:[%s2725 + $0x30] sm:$0xf]
    %v2739 = vld [vmem:[%s2725 + $0x34] sm:$0xf]
    %v2740 = vld [vmem:[%s2725 + $0x38] sm:$0xf]
    %v2741 = vld [vmem:[%s2725 + $0x3c] sm:$0xf]
    %v2758 = vunpack.c.l.b16 %v2726
    %v2759 = vunpack.c.l.b16 %v2727
    %v2760 = vunpack.c.l.b16 %v2728
    %v2761 = vunpack.c.l.b16 %v2729
    %v2762 = vunpack.c.l.b16 %v2730
    %v2763 = vunpack.c.l.b16 %v2731
    %v2764 = vunpack.c.l.b16 %v2732
    %v2765 = vunpack.c.l.b16 %v2733
    %v2766 = vunpack.c.l.b16 %v2734
    %v2767 = vunpack.c.l.b16 %v2735
    %v2768 = vunpack.c.l.b16 %v2736
    %v2769 = vunpack.c.l.b16 %v2737
    %v2770 = vunpack.c.l.b16 %v2738
    %v2771 = vunpack.c.l.b16 %v2739
    %v2772 = vunpack.c.l.b16 %v2740
    %v2773 = vunpack.c.l.b16 %v2741
    %v2774 = vpack.c.b16 %v2759, %v2758
    %v2775 = vpack.c.b16 %v2761, %v2760
    %v2776 = vpack.c.b16 %v2763, %v2762
    %v2777 = vpack.c.b16 %v2765, %v2764
    %v2778 = vpack.c.b16 %v2767, %v2766
    %v2779 = vpack.c.b16 %v2769, %v2768
    %v2780 = vpack.c.b16 %v2771, %v2770
    %v2781 = vpack.c.b16 %v2773, %v2772
    %2790 = vmatprep.subr.bf16.mxu0 0
    %2791 = vmatpush1.bf16.msra.mxu0 %v2781
    %2792 = vmatprep.subr.bf16.mxu0 0
    %2793 = vmatpush1.bf16.msra.mxu0 %v2780
    %2794 = vmatprep.subr.bf16.mxu0 0
    %2795 = vmatpush1.bf16.msra.mxu0 %v2779
    %2796 = vmatprep.subr.bf16.mxu0 0
    %2797 = vmatpush1.bf16.msra.mxu0 %v2778
    %2798 = vmatprep.subr.bf16.mxu0 0
    %2799 = vmatpush1.bf16.msra.mxu0 %v2777
    %2800 = vmatprep.subr.bf16.mxu0 0
    %2801 = vmatpush1.bf16.msra.mxu0 %v2776
    %2802 = vmatprep.subr.bf16.mxu0 0
    %2803 = vmatpush1.bf16.msra.mxu0 %v2775
    %2804 = vmatprep.subr.bf16.mxu0 0
    %2805 = vmatpush1.bf16.msra.mxu0 %v2774
    %2806 = vmatprep.subr.bf16.mxu0 0
    %2807 = vmatpush2.bf16.msra.mxu0 0
    %2808 = vmatprep.subr.bf16.mxu0 0
    %2809 = vmatpush2.bf16.msra.mxu0 0
    %2810 = vmatprep.subr.bf16.mxu0 0
    %2811 = vmatpush2.bf16.msra.mxu0 0
    %2812 = vmatprep.subr.bf16.mxu0 0
    %2813 = vmatpush2.bf16.msra.mxu0 0
    %2814 = vmatprep.subr.bf16.mxu0 0
    %2815 = vmatpush2.bf16.msra.mxu0 0
    %2816 = vmatprep.subr.bf16.mxu0 0
    %2817 = vmatpush2.bf16.msra.mxu0 0
    %2818 = vmatprep.subr.bf16.mxu0 0
    %2819 = vmatpush2.bf16.msra.mxu0 0
    %2820 = vmatprep.subr.bf16.mxu0 0
    %2821 = vmatpush2.bf16.msra.mxu0 0
    %2822 = vmatprep.mubr.bf16.mxu0 0
    %2823 = vmatmul.mubr.bf16.gmra.mxu0 %v1291
    %v2824 = vpop.f32.mrf.mxu0
    %v2825 = vadd.f32 0.0, %v2824
    %v2826 = vpop.f32.mrf.mxu0
    %v2827 = vpop.f32.mrf.mxu0
    %v2828 = vadd.f32 0.0, %v2827
    %v2829 = vpop.f32.mrf.mxu0
    %2830 = vmatprep.mubr.bf16.mxu0 0
    %2831 = vmatmul.mubr.bf16.gmra.mxu0 %v1292
    %v2832 = vpop.f32.mrf.mxu0
    %v2833 = vadd.f32 0.0, %v2832
    %v2834 = vpop.f32.mrf.mxu0
    %v2835 = vpop.f32.mrf.mxu0
    %v2836 = vadd.f32 0.0, %v2835
    %v2837 = vpop.f32.mrf.mxu0
    %2838 = vmatprep.mubr.bf16.mxu0 0
    %2839 = vmatmul.mubr.bf16.gmra.mxu0 %v1293
    %v2840 = vpop.f32.mrf.mxu0
    %v2841 = vadd.f32 0.0, %v2840
    %v2842 = vpop.f32.mrf.mxu0
    %v2843 = vpop.f32.mrf.mxu0
    %v2844 = vadd.f32 0.0, %v2843
    %v2845 = vpop.f32.mrf.mxu0
    %2846 = vmatprep.mubr.bf16.mxu0 0
    %2847 = vmatmul.mubr.bf16.gmra.mxu0 %v1294
    %v2848 = vpop.f32.mrf.mxu0
    %v2849 = vadd.f32 0.0, %v2848
    %v2850 = vpop.f32.mrf.mxu0
    %v2851 = vpop.f32.mrf.mxu0
    %v2852 = vadd.f32 0.0, %v2851
    %v2853 = vpop.f32.mrf.mxu0
    %2854 = vdwg.mxu0
    %v2855 = vadd.f32 %v2695, %v2825
    %v2856 = vadd.f32 %v2698, %v2828
    %v2857 = vadd.f32 %v2703, %v2833
    %v2858 = vadd.f32 %v2706, %v2836
    %v2859 = vadd.f32 %v2711, %v2841
    %v2860 = vadd.f32 %v2714, %v2844
    %v2861 = vadd.f32 %v2719, %v2849
    %v2862 = vadd.f32 %v2722, %v2852
    %s2863 = scalar_lea.vmem %s4, 384
    %v2864 = vld [vmem:[%s2863] sm:$0xf]
    %v2865 = vld [vmem:[%s2863 + $0x4] sm:$0xf]
    %v2866 = vld [vmem:[%s2863 + $0x8] sm:$0xf]
    %v2867 = vld [vmem:[%s2863 + $0xc] sm:$0xf]
    %v2868 = vld [vmem:[%s2863 + $0x10] sm:$0xf]
    %v2869 = vld [vmem:[%s2863 + $0x14] sm:$0xf]
    %v2870 = vld [vmem:[%s2863 + $0x18] sm:$0xf]
    %v2871 = vld [vmem:[%s2863 + $0x1c] sm:$0xf]
    %v2872 = vld [vmem:[%s2863 + $0x20] sm:$0xf]
    %v2873 = vld [vmem:[%s2863 + $0x24] sm:$0xf]
    %v2874 = vld [vmem:[%s2863 + $0x28] sm:$0xf]
    %v2875 = vld [vmem:[%s2863 + $0x2c] sm:$0xf]
    %v2876 = vld [vmem:[%s2863 + $0x30] sm:$0xf]
    %v2877 = vld [vmem:[%s2863 + $0x34] sm:$0xf]
    %v2878 = vld [vmem:[%s2863 + $0x38] sm:$0xf]
    %v2879 = vld [vmem:[%s2863 + $0x3c] sm:$0xf]
    %v2896 = vunpack.c.l.b16 %v2864
    %v2897 = vunpack.c.l.b16 %v2865
    %v2898 = vunpack.c.l.b16 %v2866
    %v2899 = vunpack.c.l.b16 %v2867
    %v2900 = vunpack.c.l.b16 %v2868
    %v2901 = vunpack.c.l.b16 %v2869
    %v2902 = vunpack.c.l.b16 %v2870
    %v2903 = vunpack.c.l.b16 %v2871
    %v2904 = vunpack.c.l.b16 %v2872
    %v2905 = vunpack.c.l.b16 %v2873
    %v2906 = vunpack.c.l.b16 %v2874
    %v2907 = vunpack.c.l.b16 %v2875
    %v2908 = vunpack.c.l.b16 %v2876
    %v2909 = vunpack.c.l.b16 %v2877
    %v2910 = vunpack.c.l.b16 %v2878
    %v2911 = vunpack.c.l.b16 %v2879
    %v2912 = vpack.c.b16 %v2897, %v2896
    %v2913 = vpack.c.b16 %v2899, %v2898
    %v2914 = vpack.c.b16 %v2901, %v2900
    %v2915 = vpack.c.b16 %v2903, %v2902
    %v2916 = vpack.c.b16 %v2905, %v2904
    %v2917 = vpack.c.b16 %v2907, %v2906
    %v2918 = vpack.c.b16 %v2909, %v2908
    %v2919 = vpack.c.b16 %v2911, %v2910
    %2928 = vmatprep.subr.bf16.mxu0 0
    %2929 = vmatpush1.bf16.msra.mxu0 %v2919
    %2930 = vmatprep.subr.bf16.mxu0 0
    %2931 = vmatpush1.bf16.msra.mxu0 %v2918
    %2932 = vmatprep.subr.bf16.mxu0 0
    %2933 = vmatpush1.bf16.msra.mxu0 %v2917
    %2934 = vmatprep.subr.bf16.mxu0 0
    %2935 = vmatpush1.bf16.msra.mxu0 %v2916
    %2936 = vmatprep.subr.bf16.mxu0 0
    %2937 = vmatpush1.bf16.msra.mxu0 %v2915
    %2938 = vmatprep.subr.bf16.mxu0 0
    %2939 = vmatpush1.bf16.msra.mxu0 %v2914
    %2940 = vmatprep.subr.bf16.mxu0 0
    %2941 = vmatpush1.bf16.msra.mxu0 %v2913
    %2942 = vmatprep.subr.bf16.mxu0 0
    %2943 = vmatpush1.bf16.msra.mxu0 %v2912
    %2944 = vmatprep.subr.bf16.mxu0 0
    %2945 = vmatpush2.bf16.msra.mxu0 0
    %2946 = vmatprep.subr.bf16.mxu0 0
    %2947 = vmatpush2.bf16.msra.mxu0 0
    %2948 = vmatprep.subr.bf16.mxu0 0
    %2949 = vmatpush2.bf16.msra.mxu0 0
    %2950 = vmatprep.subr.bf16.mxu0 0
    %2951 = vmatpush2.bf16.msra.mxu0 0
    %2952 = vmatprep.subr.bf16.mxu0 0
    %2953 = vmatpush2.bf16.msra.mxu0 0
    %2954 = vmatprep.subr.bf16.mxu0 0
    %2955 = vmatpush2.bf16.msra.mxu0 0
    %2956 = vmatprep.subr.bf16.mxu0 0
    %2957 = vmatpush2.bf16.msra.mxu0 0
    %2958 = vmatprep.subr.bf16.mxu0 0
    %2959 = vmatpush2.bf16.msra.mxu0 0
    %2960 = vmatprep.mubr.bf16.mxu0 0
    %2961 = vmatmul.mubr.bf16.gmra.mxu0 %v2461
    %v2962 = vpop.f32.mrf.mxu0
    %v2963 = vadd.f32 0.0, %v2962
    %v2964 = vpop.f32.mrf.mxu0
    %v2965 = vpop.f32.mrf.mxu0
    %v2966 = vadd.f32 0.0, %v2965
    %v2967 = vpop.f32.mrf.mxu0
    %2968 = vmatprep.mubr.bf16.mxu0 0
    %2969 = vmatmul.mubr.bf16.gmra.mxu0 %v2462
    %v2970 = vpop.f32.mrf.mxu0
    %v2971 = vadd.f32 0.0, %v2970
    %v2972 = vpop.f32.mrf.mxu0
    %v2973 = vpop.f32.mrf.mxu0
    %v2974 = vadd.f32 0.0, %v2973
    %v2975 = vpop.f32.mrf.mxu0
    %2976 = vmatprep.mubr.bf16.mxu0 0
    %2977 = vmatmul.mubr.bf16.gmra.mxu0 %v2463
    %v2978 = vpop.f32.mrf.mxu0
    %v2979 = vadd.f32 0.0, %v2978
    %v2980 = vpop.f32.mrf.mxu0
    %v2981 = vpop.f32.mrf.mxu0
    %v2982 = vadd.f32 0.0, %v2981
    %v2983 = vpop.f32.mrf.mxu0
    %2984 = vmatprep.mubr.bf16.mxu0 0
    %2985 = vmatmul.mubr.bf16.gmra.mxu0 %v2464
    %v2986 = vpop.f32.mrf.mxu0
    %v2987 = vadd.f32 0.0, %v2986
    %v2988 = vpop.f32.mrf.mxu0
    %v2989 = vpop.f32.mrf.mxu0
    %v2990 = vadd.f32 0.0, %v2989
    %v2991 = vpop.f32.mrf.mxu0
    %2992 = vdwg.mxu0
    %v2993 = vadd.f32 %v2855, %v2963
    %v2994 = vadd.f32 %v2856, %v2966
    %v2995 = vadd.f32 %v2857, %v2971
    %v2996 = vadd.f32 %v2858, %v2974
    %v2997 = vadd.f32 %v2859, %v2979
    %v2998 = vadd.f32 %v2860, %v2982
    %v2999 = vadd.f32 %v2861, %v2987
    %v3000 = vadd.f32 %v2862, %v2990
    %s3001 = scalar_lea.vmem %s4, 512
    %v3002 = vld [vmem:[%s3001] sm:$0xf]
    %v3003 = vld [vmem:[%s3001 + $0x4] sm:$0xf]
    %v3004 = vld [vmem:[%s3001 + $0x8] sm:$0xf]
    %v3005 = vld [vmem:[%s3001 + $0xc] sm:$0xf]
    %v3006 = vld [vmem:[%s3001 + $0x10] sm:$0xf]
    %v3007 = vld [vmem:[%s3001 + $0x14] sm:$0xf]
    %v3008 = vld [vmem:[%s3001 + $0x18] sm:$0xf]
    %v3009 = vld [vmem:[%s3001 + $0x1c] sm:$0xf]
    %v3010 = vld [vmem:[%s3001 + $0x20] sm:$0xf]
    %v3011 = vld [vmem:[%s3001 + $0x24] sm:$0xf]
    %v3012 = vld [vmem:[%s3001 + $0x28] sm:$0xf]
    %v3013 = vld [vmem:[%s3001 + $0x2c] sm:$0xf]
    %v3014 = vld [vmem:[%s3001 + $0x30] sm:$0xf]
    %v3015 = vld [vmem:[%s3001 + $0x34] sm:$0xf]
    %v3016 = vld [vmem:[%s3001 + $0x38] sm:$0xf]
    %v3017 = vld [vmem:[%s3001 + $0x3c] sm:$0xf]
    %v3034 = vunpack.c.l.b16 %v3002
    %v3035 = vunpack.c.l.b16 %v3003
    %v3036 = vunpack.c.l.b16 %v3004
    %v3037 = vunpack.c.l.b16 %v3005
    %v3038 = vunpack.c.l.b16 %v3006
    %v3039 = vunpack.c.l.b16 %v3007
    %v3040 = vunpack.c.l.b16 %v3008
    %v3041 = vunpack.c.l.b16 %v3009
    %v3042 = vunpack.c.l.b16 %v3010
    %v3043 = vunpack.c.l.b16 %v3011
    %v3044 = vunpack.c.l.b16 %v3012
    %v3045 = vunpack.c.l.b16 %v3013
    %v3046 = vunpack.c.l.b16 %v3014
    %v3047 = vunpack.c.l.b16 %v3015
    %v3048 = vunpack.c.l.b16 %v3016
    %v3049 = vunpack.c.l.b16 %v3017
    %v3050 = vpack.c.b16 %v3035, %v3034
    %v3051 = vpack.c.b16 %v3037, %v3036
    %v3052 = vpack.c.b16 %v3039, %v3038
    %v3053 = vpack.c.b16 %v3041, %v3040
    %v3054 = vpack.c.b16 %v3043, %v3042
    %v3055 = vpack.c.b16 %v3045, %v3044
    %v3056 = vpack.c.b16 %v3047, %v3046
    %v3057 = vpack.c.b16 %v3049, %v3048
    %3066 = vmatprep.subr.bf16.mxu0 0
    %3067 = vmatpush1.bf16.msra.mxu0 %v3057
    %3068 = vmatprep.subr.bf16.mxu0 0
    %3069 = vmatpush1.bf16.msra.mxu0 %v3056
    %3070 = vmatprep.subr.bf16.mxu0 0
    %3071 = vmatpush1.bf16.msra.mxu0 %v3055
    %3072 = vmatprep.subr.bf16.mxu0 0
    %3073 = vmatpush1.bf16.msra.mxu0 %v3054
    %3074 = vmatprep.subr.bf16.mxu0 0
    %3075 = vmatpush1.bf16.msra.mxu0 %v3053
    %3076 = vmatprep.subr.bf16.mxu0 0
    %3077 = vmatpush1.bf16.msra.mxu0 %v3052
    %3078 = vmatprep.subr.bf16.mxu0 0
    %3079 = vmatpush1.bf16.msra.mxu0 %v3051
    %3080 = vmatprep.subr.bf16.mxu0 0
    %3081 = vmatpush1.bf16.msra.mxu0 %v3050
    %3082 = vmatprep.subr.bf16.mxu0 0
    %3083 = vmatpush2.bf16.msra.mxu0 0
    %3084 = vmatprep.subr.bf16.mxu0 0
    %3085 = vmatpush2.bf16.msra.mxu0 0
    %3086 = vmatprep.subr.bf16.mxu0 0
    %3087 = vmatpush2.bf16.msra.mxu0 0
    %3088 = vmatprep.subr.bf16.mxu0 0
    %3089 = vmatpush2.bf16.msra.mxu0 0
    %3090 = vmatprep.subr.bf16.mxu0 0
    %3091 = vmatpush2.bf16.msra.mxu0 0
    %3092 = vmatprep.subr.bf16.mxu0 0
    %3093 = vmatpush2.bf16.msra.mxu0 0
    %3094 = vmatprep.subr.bf16.mxu0 0
    %3095 = vmatpush2.bf16.msra.mxu0 0
    %3096 = vmatprep.subr.bf16.mxu0 0
    %3097 = vmatpush2.bf16.msra.mxu0 0
    %3098 = vmatprep.mubr.bf16.mxu0 0
    %3099 = vmatmul.mubr.bf16.gmra.mxu0 %v1292
    %v3100 = vpop.f32.mrf.mxu0
    %v3101 = vadd.f32 0.0, %v3100
    %v3102 = vpop.f32.mrf.mxu0
    %v3103 = vpop.f32.mrf.mxu0
    %v3104 = vadd.f32 0.0, %v3103
    %v3105 = vpop.f32.mrf.mxu0
    %3106 = vmatprep.mubr.bf16.mxu0 0
    %3107 = vmatmul.mubr.bf16.gmra.mxu0 %v1293
    %v3108 = vpop.f32.mrf.mxu0
    %v3109 = vadd.f32 0.0, %v3108
    %v3110 = vpop.f32.mrf.mxu0
    %v3111 = vpop.f32.mrf.mxu0
    %v3112 = vadd.f32 0.0, %v3111
    %v3113 = vpop.f32.mrf.mxu0
    %3114 = vmatprep.mubr.bf16.mxu0 0
    %3115 = vmatmul.mubr.bf16.gmra.mxu0 %v1294
    %v3116 = vpop.f32.mrf.mxu0
    %v3117 = vadd.f32 0.0, %v3116
    %v3118 = vpop.f32.mrf.mxu0
    %v3119 = vpop.f32.mrf.mxu0
    %v3120 = vadd.f32 0.0, %v3119
    %v3121 = vpop.f32.mrf.mxu0
    %3122 = vmatprep.mubr.bf16.mxu0 0
    %3123 = vmatmul.mubr.bf16.gmra.mxu0 %v1295
    %v3124 = vpop.f32.mrf.mxu0
    %v3125 = vadd.f32 0.0, %v3124
    %v3126 = vpop.f32.mrf.mxu0
    %v3127 = vpop.f32.mrf.mxu0
    %v3128 = vadd.f32 0.0, %v3127
    %v3129 = vpop.f32.mrf.mxu0
    %3130 = vdwg.mxu0
    %v3131 = vadd.f32 %v2993, %v3101
    %v3132 = vadd.f32 %v2994, %v3104
    %v3133 = vadd.f32 %v2995, %v3109
    %v3134 = vadd.f32 %v2996, %v3112
    %v3135 = vadd.f32 %v2997, %v3117
    %v3136 = vadd.f32 %v2998, %v3120
    %v3137 = vadd.f32 %v2999, %v3125
    %v3138 = vadd.f32 %v3000, %v3128
    %s3139 = scalar_lea.vmem %s4, 64
    %v3140 = vld [vmem:[%s3139] sm:$0xf]
    %v3141 = vld [vmem:[%s3139 + $0x4] sm:$0xf]
    %v3142 = vld [vmem:[%s3139 + $0x8] sm:$0xf]
    %v3143 = vld [vmem:[%s3139 + $0xc] sm:$0xf]
    %v3144 = vld [vmem:[%s3139 + $0x10] sm:$0xf]
    %v3145 = vld [vmem:[%s3139 + $0x14] sm:$0xf]
    %v3146 = vld [vmem:[%s3139 + $0x18] sm:$0xf]
    %v3147 = vld [vmem:[%s3139 + $0x1c] sm:$0xf]
    %v3148 = vld [vmem:[%s3139 + $0x20] sm:$0xf]
    %v3149 = vld [vmem:[%s3139 + $0x24] sm:$0xf]
    %v3150 = vld [vmem:[%s3139 + $0x28] sm:$0xf]
    %v3151 = vld [vmem:[%s3139 + $0x2c] sm:$0xf]
    %v3152 = vld [vmem:[%s3139 + $0x30] sm:$0xf]
    %v3153 = vld [vmem:[%s3139 + $0x34] sm:$0xf]
    %v3154 = vld [vmem:[%s3139 + $0x38] sm:$0xf]
    %v3155 = vld [vmem:[%s3139 + $0x3c] sm:$0xf]
    %s3156 = scalar_lea.vmem %s4, 192
    %v3157 = vld [vmem:[%s3156] sm:$0xf]
    %v3158 = vld [vmem:[%s3156 + $0x4] sm:$0xf]
    %v3159 = vld [vmem:[%s3156 + $0x8] sm:$0xf]
    %v3160 = vld [vmem:[%s3156 + $0xc] sm:$0xf]
    %v3161 = vld [vmem:[%s3156 + $0x10] sm:$0xf]
    %v3162 = vld [vmem:[%s3156 + $0x14] sm:$0xf]
    %v3163 = vld [vmem:[%s3156 + $0x18] sm:$0xf]
    %v3164 = vld [vmem:[%s3156 + $0x1c] sm:$0xf]
    %v3165 = vld [vmem:[%s3156 + $0x20] sm:$0xf]
    %v3166 = vld [vmem:[%s3156 + $0x24] sm:$0xf]
    %v3167 = vld [vmem:[%s3156 + $0x28] sm:$0xf]
    %v3168 = vld [vmem:[%s3156 + $0x2c] sm:$0xf]
    %v3169 = vld [vmem:[%s3156 + $0x30] sm:$0xf]
    %v3170 = vld [vmem:[%s3156 + $0x34] sm:$0xf]
    %v3171 = vld [vmem:[%s3156 + $0x38] sm:$0xf]
    %v3172 = vld [vmem:[%s3156 + $0x3c] sm:$0xf]
    %v3189 = vunpack.c.l.b16 %v3157
    %v3190 = vunpack.c.l.b16 %v3158
    %v3191 = vunpack.c.l.b16 %v3159
    %v3192 = vunpack.c.l.b16 %v3160
    %v3193 = vunpack.c.l.b16 %v3161
    %v3194 = vunpack.c.l.b16 %v3162
    %v3195 = vunpack.c.l.b16 %v3163
    %v3196 = vunpack.c.l.b16 %v3164
    %v3197 = vunpack.c.l.b16 %v3165
    %v3198 = vunpack.c.l.b16 %v3166
    %v3199 = vunpack.c.l.b16 %v3167
    %v3200 = vunpack.c.l.b16 %v3168
    %v3201 = vunpack.c.l.b16 %v3169
    %v3202 = vunpack.c.l.b16 %v3170
    %v3203 = vunpack.c.l.b16 %v3171
    %v3204 = vunpack.c.l.b16 %v3172
    %v3205 = vpack.c.b16 %v3190, %v3189
    %v3206 = vpack.c.b16 %v3192, %v3191
    %v3207 = vpack.c.b16 %v3194, %v3193
    %v3208 = vpack.c.b16 %v3196, %v3195
    %v3209 = vpack.c.b16 %v3198, %v3197
    %v3210 = vpack.c.b16 %v3200, %v3199
    %v3211 = vpack.c.b16 %v3202, %v3201
    %v3212 = vpack.c.b16 %v3204, %v3203
    %3221 = vmatprep.subr.bf16.mxu0 0
    %3222 = vmatpush1.bf16.msra.mxu0 %v3212
    %3223 = vmatprep.subr.bf16.mxu0 0
    %3224 = vmatpush1.bf16.msra.mxu0 %v3211
    %3225 = vmatprep.subr.bf16.mxu0 0
    %3226 = vmatpush1.bf16.msra.mxu0 %v3210
    %3227 = vmatprep.subr.bf16.mxu0 0
    %3228 = vmatpush1.bf16.msra.mxu0 %v3209
    %3229 = vmatprep.subr.bf16.mxu0 0
    %3230 = vmatpush1.bf16.msra.mxu0 %v3208
    %3231 = vmatprep.subr.bf16.mxu0 0
    %3232 = vmatpush1.bf16.msra.mxu0 %v3207
    %3233 = vmatprep.subr.bf16.mxu0 0
    %3234 = vmatpush1.bf16.msra.mxu0 %v3206
    %3235 = vmatprep.subr.bf16.mxu0 0
    %3236 = vmatpush1.bf16.msra.mxu0 %v3205
    %3237 = vmatprep.subr.bf16.mxu0 0
    %3238 = vmatpush2.bf16.msra.mxu0 0
    %3239 = vmatprep.subr.bf16.mxu0 0
    %3240 = vmatpush2.bf16.msra.mxu0 0
    %3241 = vmatprep.subr.bf16.mxu0 0
    %3242 = vmatpush2.bf16.msra.mxu0 0
    %3243 = vmatprep.subr.bf16.mxu0 0
    %3244 = vmatpush2.bf16.msra.mxu0 0
    %3245 = vmatprep.subr.bf16.mxu0 0
    %3246 = vmatpush2.bf16.msra.mxu0 0
    %3247 = vmatprep.subr.bf16.mxu0 0
    %3248 = vmatpush2.bf16.msra.mxu0 0
    %3249 = vmatprep.subr.bf16.mxu0 0
    %3250 = vmatpush2.bf16.msra.mxu0 0
    %3251 = vmatprep.subr.bf16.mxu0 0
    %3252 = vmatpush2.bf16.msra.mxu0 0
    %3253 = vmatprep.mubr.bf16.mxu0 0
    %3254 = vmatmul.mubr.bf16.gmra.mxu0 %v2460
    %v3255 = vpop.f32.mrf.mxu0
    %v3256 = vadd.f32 0.0, %v3255
    %v3257 = vpop.f32.mrf.mxu0
    %v3258 = vpop.f32.mrf.mxu0
    %v3259 = vadd.f32 0.0, %v3258
    %v3260 = vpop.f32.mrf.mxu0
    %3261 = vmatprep.mubr.bf16.mxu0 0
    %3262 = vmatmul.mubr.bf16.gmra.mxu0 %v2461
    %v3263 = vpop.f32.mrf.mxu0
    %v3264 = vadd.f32 0.0, %v3263
    %v3265 = vpop.f32.mrf.mxu0
    %v3266 = vpop.f32.mrf.mxu0
    %v3267 = vadd.f32 0.0, %v3266
    %v3268 = vpop.f32.mrf.mxu0
    %3269 = vmatprep.mubr.bf16.mxu0 0
    %3270 = vmatmul.mubr.bf16.gmra.mxu0 %v2462
    %v3271 = vpop.f32.mrf.mxu0
    %v3272 = vadd.f32 0.0, %v3271
    %v3273 = vpop.f32.mrf.mxu0
    %v3274 = vpop.f32.mrf.mxu0
    %v3275 = vadd.f32 0.0, %v3274
    %v3276 = vpop.f32.mrf.mxu0
    %3277 = vmatprep.mubr.bf16.mxu0 0
    %3278 = vmatmul.mubr.bf16.gmra.mxu0 %v2463
    %v3279 = vpop.f32.mrf.mxu0
    %v3280 = vadd.f32 0.0, %v3279
    %v3281 = vpop.f32.mrf.mxu0
    %v3282 = vpop.f32.mrf.mxu0
    %v3283 = vadd.f32 0.0, %v3282
    %v3284 = vpop.f32.mrf.mxu0
    %3285 = vdwg.mxu0
    %v3302 = vunpack.c.l.b16 %v3140
    %v3303 = vunpack.c.l.b16 %v3141
    %v3304 = vunpack.c.l.b16 %v3142
    %v3305 = vunpack.c.l.b16 %v3143
    %v3306 = vunpack.c.l.b16 %v3144
    %v3307 = vunpack.c.l.b16 %v3145
    %v3308 = vunpack.c.l.b16 %v3146
    %v3309 = vunpack.c.l.b16 %v3147
    %v3310 = vunpack.c.l.b16 %v3148
    %v3311 = vunpack.c.l.b16 %v3149
    %v3312 = vunpack.c.l.b16 %v3150
    %v3313 = vunpack.c.l.b16 %v3151
    %v3314 = vunpack.c.l.b16 %v3152
    %v3315 = vunpack.c.l.b16 %v3153
    %v3316 = vunpack.c.l.b16 %v3154
    %v3317 = vunpack.c.l.b16 %v3155
    %v3318 = vpack.c.b16 %v3303, %v3302
    %v3319 = vpack.c.b16 %v3305, %v3304
    %v3320 = vpack.c.b16 %v3307, %v3306
    %v3321 = vpack.c.b16 %v3309, %v3308
    %v3322 = vpack.c.b16 %v3311, %v3310
    %v3323 = vpack.c.b16 %v3313, %v3312
    %v3324 = vpack.c.b16 %v3315, %v3314
    %v3325 = vpack.c.b16 %v3317, %v3316
    %3334 = vmatprep.subr.bf16.mxu0 0
    %3335 = vmatpush1.bf16.msra.mxu0 %v3325
    %3336 = vmatprep.subr.bf16.mxu0 0
    %3337 = vmatpush1.bf16.msra.mxu0 %v3324
    %3338 = vmatprep.subr.bf16.mxu0 0
    %3339 = vmatpush1.bf16.msra.mxu0 %v3323
    %3340 = vmatprep.subr.bf16.mxu0 0
    %3341 = vmatpush1.bf16.msra.mxu0 %v3322
    %3342 = vmatprep.subr.bf16.mxu0 0
    %3343 = vmatpush1.bf16.msra.mxu0 %v3321
    %3344 = vmatprep.subr.bf16.mxu0 0
    %3345 = vmatpush1.bf16.msra.mxu0 %v3320
    %3346 = vmatprep.subr.bf16.mxu0 0
    %3347 = vmatpush1.bf16.msra.mxu0 %v3319
    %3348 = vmatprep.subr.bf16.mxu0 0
    %3349 = vmatpush1.bf16.msra.mxu0 %v3318
    %3350 = vmatprep.subr.bf16.mxu0 0
    %3351 = vmatpush2.bf16.msra.mxu0 0
    %3352 = vmatprep.subr.bf16.mxu0 0
    %3353 = vmatpush2.bf16.msra.mxu0 0
    %3354 = vmatprep.subr.bf16.mxu0 0
    %3355 = vmatpush2.bf16.msra.mxu0 0
    %3356 = vmatprep.subr.bf16.mxu0 0
    %3357 = vmatpush2.bf16.msra.mxu0 0
    %3358 = vmatprep.subr.bf16.mxu0 0
    %3359 = vmatpush2.bf16.msra.mxu0 0
    %3360 = vmatprep.subr.bf16.mxu0 0
    %3361 = vmatpush2.bf16.msra.mxu0 0
    %3362 = vmatprep.subr.bf16.mxu0 0
    %3363 = vmatpush2.bf16.msra.mxu0 0
    %3364 = vmatprep.subr.bf16.mxu0 0
    %3365 = vmatpush2.bf16.msra.mxu0 0
    %3366 = vmatprep.mubr.bf16.mxu0 0
    %3367 = vmatmul.mubr.bf16.gmra.mxu0 %v1290
    %v3368 = vpop.f32.mrf.mxu0
    %v3369 = vadd.f32 %v3256, %v3368
    %v3370 = vpop.f32.mrf.mxu0
    %v3371 = vpop.f32.mrf.mxu0
    %v3372 = vadd.f32 %v3259, %v3371
    %v3373 = vpop.f32.mrf.mxu0
    %3374 = vmatprep.mubr.bf16.mxu0 0
    %3375 = vmatmul.mubr.bf16.gmra.mxu0 %v1291
    %v3376 = vpop.f32.mrf.mxu0
    %v3377 = vadd.f32 %v3264, %v3376
    %v3378 = vpop.f32.mrf.mxu0
    %v3379 = vpop.f32.mrf.mxu0
    %v3380 = vadd.f32 %v3267, %v3379
    %v3381 = vpop.f32.mrf.mxu0
    %3382 = vmatprep.mubr.bf16.mxu0 0
    %3383 = vmatmul.mubr.bf16.gmra.mxu0 %v1292
    %v3384 = vpop.f32.mrf.mxu0
    %v3385 = vadd.f32 %v3272, %v3384
    %v3386 = vpop.f32.mrf.mxu0
    %v3387 = vpop.f32.mrf.mxu0
    %v3388 = vadd.f32 %v3275, %v3387
    %v3389 = vpop.f32.mrf.mxu0
    %3390 = vmatprep.mubr.bf16.mxu0 0
    %3391 = vmatmul.mubr.bf16.gmra.mxu0 %v1293
    %v3392 = vpop.f32.mrf.mxu0
    %v3393 = vadd.f32 %v3280, %v3392
    %v3394 = vpop.f32.mrf.mxu0
    %v3395 = vpop.f32.mrf.mxu0
    %v3396 = vadd.f32 %v3283, %v3395
    %v3397 = vpop.f32.mrf.mxu0
    %3398 = vdwg.mxu0
    %s3399 = scalar_lea.vmem %s4, 320
    %v3400 = vld [vmem:[%s3399] sm:$0xf]
    %v3401 = vld [vmem:[%s3399 + $0x4] sm:$0xf]
    %v3402 = vld [vmem:[%s3399 + $0x8] sm:$0xf]
    %v3403 = vld [vmem:[%s3399 + $0xc] sm:$0xf]
    %v3404 = vld [vmem:[%s3399 + $0x10] sm:$0xf]
    %v3405 = vld [vmem:[%s3399 + $0x14] sm:$0xf]
    %v3406 = vld [vmem:[%s3399 + $0x18] sm:$0xf]
    %v3407 = vld [vmem:[%s3399 + $0x1c] sm:$0xf]
    %v3408 = vld [vmem:[%s3399 + $0x20] sm:$0xf]
    %v3409 = vld [vmem:[%s3399 + $0x24] sm:$0xf]
    %v3410 = vld [vmem:[%s3399 + $0x28] sm:$0xf]
    %v3411 = vld [vmem:[%s3399 + $0x2c] sm:$0xf]
    %v3412 = vld [vmem:[%s3399 + $0x30] sm:$0xf]
    %v3413 = vld [vmem:[%s3399 + $0x34] sm:$0xf]
    %v3414 = vld [vmem:[%s3399 + $0x38] sm:$0xf]
    %v3415 = vld [vmem:[%s3399 + $0x3c] sm:$0xf]
    %v3432 = vunpack.c.l.b16 %v3400
    %v3433 = vunpack.c.l.b16 %v3401
    %v3434 = vunpack.c.l.b16 %v3402
    %v3435 = vunpack.c.l.b16 %v3403
    %v3436 = vunpack.c.l.b16 %v3404
    %v3437 = vunpack.c.l.b16 %v3405
    %v3438 = vunpack.c.l.b16 %v3406
    %v3439 = vunpack.c.l.b16 %v3407
    %v3440 = vunpack.c.l.b16 %v3408
    %v3441 = vunpack.c.l.b16 %v3409
    %v3442 = vunpack.c.l.b16 %v3410
    %v3443 = vunpack.c.l.b16 %v3411
    %v3444 = vunpack.c.l.b16 %v3412
    %v3445 = vunpack.c.l.b16 %v3413
    %v3446 = vunpack.c.l.b16 %v3414
    %v3447 = vunpack.c.l.b16 %v3415
    %v3448 = vpack.c.b16 %v3433, %v3432
    %v3449 = vpack.c.b16 %v3435, %v3434
    %v3450 = vpack.c.b16 %v3437, %v3436
    %v3451 = vpack.c.b16 %v3439, %v3438
    %v3452 = vpack.c.b16 %v3441, %v3440
    %v3453 = vpack.c.b16 %v3443, %v3442
    %v3454 = vpack.c.b16 %v3445, %v3444
    %v3455 = vpack.c.b16 %v3447, %v3446
    %3464 = vmatprep.subr.bf16.mxu0 0
    %3465 = vmatpush1.bf16.msra.mxu0 %v3455
    %3466 = vmatprep.subr.bf16.mxu0 0
    %3467 = vmatpush1.bf16.msra.mxu0 %v3454
    %3468 = vmatprep.subr.bf16.mxu0 0
    %3469 = vmatpush1.bf16.msra.mxu0 %v3453
    %3470 = vmatprep.subr.bf16.mxu0 0
    %3471 = vmatpush1.bf16.msra.mxu0 %v3452
    %3472 = vmatprep.subr.bf16.mxu0 0
    %3473 = vmatpush1.bf16.msra.mxu0 %v3451
    %3474 = vmatprep.subr.bf16.mxu0 0
    %3475 = vmatpush1.bf16.msra.mxu0 %v3450
    %3476 = vmatprep.subr.bf16.mxu0 0
    %3477 = vmatpush1.bf16.msra.mxu0 %v3449
    %3478 = vmatprep.subr.bf16.mxu0 0
    %3479 = vmatpush1.bf16.msra.mxu0 %v3448
    %3480 = vmatprep.subr.bf16.mxu0 0
    %3481 = vmatpush2.bf16.msra.mxu0 0
    %3482 = vmatprep.subr.bf16.mxu0 0
    %3483 = vmatpush2.bf16.msra.mxu0 0
    %3484 = vmatprep.subr.bf16.mxu0 0
    %3485 = vmatpush2.bf16.msra.mxu0 0
    %3486 = vmatprep.subr.bf16.mxu0 0
    %3487 = vmatpush2.bf16.msra.mxu0 0
    %3488 = vmatprep.subr.bf16.mxu0 0
    %3489 = vmatpush2.bf16.msra.mxu0 0
    %3490 = vmatprep.subr.bf16.mxu0 0
    %3491 = vmatpush2.bf16.msra.mxu0 0
    %3492 = vmatprep.subr.bf16.mxu0 0
    %3493 = vmatpush2.bf16.msra.mxu0 0
    %3494 = vmatprep.subr.bf16.mxu0 0
    %3495 = vmatpush2.bf16.msra.mxu0 0
    %3496 = vmatprep.mubr.bf16.mxu0 0
    %3497 = vmatmul.mubr.bf16.gmra.mxu0 %v1291
    %v3498 = vpop.f32.mrf.mxu0
    %v3499 = vadd.f32 0.0, %v3498
    %v3500 = vpop.f32.mrf.mxu0
    %v3501 = vpop.f32.mrf.mxu0
    %v3502 = vadd.f32 0.0, %v3501
    %v3503 = vpop.f32.mrf.mxu0
    %3504 = vmatprep.mubr.bf16.mxu0 0
    %3505 = vmatmul.mubr.bf16.gmra.mxu0 %v1292
    %v3506 = vpop.f32.mrf.mxu0
    %v3507 = vadd.f32 0.0, %v3506
    %v3508 = vpop.f32.mrf.mxu0
    %v3509 = vpop.f32.mrf.mxu0
    %v3510 = vadd.f32 0.0, %v3509
    %v3511 = vpop.f32.mrf.mxu0
    %3512 = vmatprep.mubr.bf16.mxu0 0
    %3513 = vmatmul.mubr.bf16.gmra.mxu0 %v1293
    %v3514 = vpop.f32.mrf.mxu0
    %v3515 = vadd.f32 0.0, %v3514
    %v3516 = vpop.f32.mrf.mxu0
    %v3517 = vpop.f32.mrf.mxu0
    %v3518 = vadd.f32 0.0, %v3517
    %v3519 = vpop.f32.mrf.mxu0
    %3520 = vmatprep.mubr.bf16.mxu0 0
    %3521 = vmatmul.mubr.bf16.gmra.mxu0 %v1294
    %v3522 = vpop.f32.mrf.mxu0
    %v3523 = vadd.f32 0.0, %v3522
    %v3524 = vpop.f32.mrf.mxu0
    %v3525 = vpop.f32.mrf.mxu0
    %v3526 = vadd.f32 0.0, %v3525
    %v3527 = vpop.f32.mrf.mxu0
    %3528 = vdwg.mxu0
    %v3529 = vadd.f32 %v3369, %v3499
    %v3530 = vadd.f32 %v3372, %v3502
    %v3531 = vadd.f32 %v3377, %v3507
    %v3532 = vadd.f32 %v3380, %v3510
    %v3533 = vadd.f32 %v3385, %v3515
    %v3534 = vadd.f32 %v3388, %v3518
    %v3535 = vadd.f32 %v3393, %v3523
    %v3536 = vadd.f32 %v3396, %v3526
    %s3537 = scalar_lea.vmem %s4, 448
    %v3538 = vld [vmem:[%s3537] sm:$0xf]
    %v3539 = vld [vmem:[%s3537 + $0x4] sm:$0xf]
    %v3540 = vld [vmem:[%s3537 + $0x8] sm:$0xf]
    %v3541 = vld [vmem:[%s3537 + $0xc] sm:$0xf]
    %v3542 = vld [vmem:[%s3537 + $0x10] sm:$0xf]
    %v3543 = vld [vmem:[%s3537 + $0x14] sm:$0xf]
    %v3544 = vld [vmem:[%s3537 + $0x18] sm:$0xf]
    %v3545 = vld [vmem:[%s3537 + $0x1c] sm:$0xf]
    %v3546 = vld [vmem:[%s3537 + $0x20] sm:$0xf]
    %v3547 = vld [vmem:[%s3537 + $0x24] sm:$0xf]
    %v3548 = vld [vmem:[%s3537 + $0x28] sm:$0xf]
    %v3549 = vld [vmem:[%s3537 + $0x2c] sm:$0xf]
    %v3550 = vld [vmem:[%s3537 + $0x30] sm:$0xf]
    %v3551 = vld [vmem:[%s3537 + $0x34] sm:$0xf]
    %v3552 = vld [vmem:[%s3537 + $0x38] sm:$0xf]
    %v3553 = vld [vmem:[%s3537 + $0x3c] sm:$0xf]
    %v3570 = vunpack.c.l.b16 %v3538
    %v3571 = vunpack.c.l.b16 %v3539
    %v3572 = vunpack.c.l.b16 %v3540
    %v3573 = vunpack.c.l.b16 %v3541
    %v3574 = vunpack.c.l.b16 %v3542
    %v3575 = vunpack.c.l.b16 %v3543
    %v3576 = vunpack.c.l.b16 %v3544
    %v3577 = vunpack.c.l.b16 %v3545
    %v3578 = vunpack.c.l.b16 %v3546
    %v3579 = vunpack.c.l.b16 %v3547
    %v3580 = vunpack.c.l.b16 %v3548
    %v3581 = vunpack.c.l.b16 %v3549
    %v3582 = vunpack.c.l.b16 %v3550
    %v3583 = vunpack.c.l.b16 %v3551
    %v3584 = vunpack.c.l.b16 %v3552
    %v3585 = vunpack.c.l.b16 %v3553
    %v3586 = vpack.c.b16 %v3571, %v3570
    %v3587 = vpack.c.b16 %v3573, %v3572
    %v3588 = vpack.c.b16 %v3575, %v3574
    %v3589 = vpack.c.b16 %v3577, %v3576
    %v3590 = vpack.c.b16 %v3579, %v3578
    %v3591 = vpack.c.b16 %v3581, %v3580
    %v3592 = vpack.c.b16 %v3583, %v3582
    %v3593 = vpack.c.b16 %v3585, %v3584
    %3602 = vmatprep.subr.bf16.mxu0 0
    %3603 = vmatpush1.bf16.msra.mxu0 %v3593
    %3604 = vmatprep.subr.bf16.mxu0 0
    %3605 = vmatpush1.bf16.msra.mxu0 %v3592
    %3606 = vmatprep.subr.bf16.mxu0 0
    %3607 = vmatpush1.bf16.msra.mxu0 %v3591
    %3608 = vmatprep.subr.bf16.mxu0 0
    %3609 = vmatpush1.bf16.msra.mxu0 %v3590
    %3610 = vmatprep.subr.bf16.mxu0 0
    %3611 = vmatpush1.bf16.msra.mxu0 %v3589
    %3612 = vmatprep.subr.bf16.mxu0 0
    %3613 = vmatpush1.bf16.msra.mxu0 %v3588
    %3614 = vmatprep.subr.bf16.mxu0 0
    %3615 = vmatpush1.bf16.msra.mxu0 %v3587
    %3616 = vmatprep.subr.bf16.mxu0 0
    %3617 = vmatpush1.bf16.msra.mxu0 %v3586
    %3618 = vmatprep.subr.bf16.mxu0 0
    %3619 = vmatpush2.bf16.msra.mxu0 0
    %3620 = vmatprep.subr.bf16.mxu0 0
    %3621 = vmatpush2.bf16.msra.mxu0 0
    %3622 = vmatprep.subr.bf16.mxu0 0
    %3623 = vmatpush2.bf16.msra.mxu0 0
    %3624 = vmatprep.subr.bf16.mxu0 0
    %3625 = vmatpush2.bf16.msra.mxu0 0
    %3626 = vmatprep.subr.bf16.mxu0 0
    %3627 = vmatpush2.bf16.msra.mxu0 0
    %3628 = vmatprep.subr.bf16.mxu0 0
    %3629 = vmatpush2.bf16.msra.mxu0 0
    %3630 = vmatprep.subr.bf16.mxu0 0
    %3631 = vmatpush2.bf16.msra.mxu0 0
    %3632 = vmatprep.subr.bf16.mxu0 0
    %3633 = vmatpush2.bf16.msra.mxu0 0
    %3634 = vmatprep.mubr.bf16.mxu0 0
    %3635 = vmatmul.mubr.bf16.gmra.mxu0 %v2461
    %v3636 = vpop.f32.mrf.mxu0
    %v3637 = vadd.f32 0.0, %v3636
    %v3638 = vpop.f32.mrf.mxu0
    %v3639 = vpop.f32.mrf.mxu0
    %v3640 = vadd.f32 0.0, %v3639
    %v3641 = vpop.f32.mrf.mxu0
    %3642 = vmatprep.mubr.bf16.mxu0 0
    %3643 = vmatmul.mubr.bf16.gmra.mxu0 %v2462
    %v3644 = vpop.f32.mrf.mxu0
    %v3645 = vadd.f32 0.0, %v3644
    %v3646 = vpop.f32.mrf.mxu0
    %v3647 = vpop.f32.mrf.mxu0
    %v3648 = vadd.f32 0.0, %v3647
    %v3649 = vpop.f32.mrf.mxu0
    %3650 = vmatprep.mubr.bf16.mxu0 0
    %3651 = vmatmul.mubr.bf16.gmra.mxu0 %v2463
    %v3652 = vpop.f32.mrf.mxu0
    %v3653 = vadd.f32 0.0, %v3652
    %v3654 = vpop.f32.mrf.mxu0
    %v3655 = vpop.f32.mrf.mxu0
    %v3656 = vadd.f32 0.0, %v3655
    %v3657 = vpop.f32.mrf.mxu0
    %3658 = vmatprep.mubr.bf16.mxu0 0
    %3659 = vmatmul.mubr.bf16.gmra.mxu0 %v2464
    %v3660 = vpop.f32.mrf.mxu0
    %v3661 = vadd.f32 0.0, %v3660
    %v3662 = vpop.f32.mrf.mxu0
    %v3663 = vpop.f32.mrf.mxu0
    %v3664 = vadd.f32 0.0, %v3663
    %v3665 = vpop.f32.mrf.mxu0
    %3666 = vdwg.mxu0
    %v3667 = vadd.f32 %v3529, %v3637
    %v3668 = vadd.f32 %v3530, %v3640
    %v3669 = vadd.f32 %v3531, %v3645
    %v3670 = vadd.f32 %v3532, %v3648
    %v3671 = vadd.f32 %v3533, %v3653
    %v3672 = vadd.f32 %v3534, %v3656
    %v3673 = vadd.f32 %v3535, %v3661
    %v3674 = vadd.f32 %v3536, %v3664
    %s3675 = scalar_lea.vmem %s4, 576
    %v3676 = vld [vmem:[%s3675] sm:$0xf]
    %v3677 = vld [vmem:[%s3675 + $0x4] sm:$0xf]
    %v3678 = vld [vmem:[%s3675 + $0x8] sm:$0xf]
    %v3679 = vld [vmem:[%s3675 + $0xc] sm:$0xf]
    %v3680 = vld [vmem:[%s3675 + $0x10] sm:$0xf]
    %v3681 = vld [vmem:[%s3675 + $0x14] sm:$0xf]
    %v3682 = vld [vmem:[%s3675 + $0x18] sm:$0xf]
    %v3683 = vld [vmem:[%s3675 + $0x1c] sm:$0xf]
    %v3684 = vld [vmem:[%s3675 + $0x20] sm:$0xf]
    %v3685 = vld [vmem:[%s3675 + $0x24] sm:$0xf]
    %v3686 = vld [vmem:[%s3675 + $0x28] sm:$0xf]
    %v3687 = vld [vmem:[%s3675 + $0x2c] sm:$0xf]
    %v3688 = vld [vmem:[%s3675 + $0x30] sm:$0xf]
    %v3689 = vld [vmem:[%s3675 + $0x34] sm:$0xf]
    %v3690 = vld [vmem:[%s3675 + $0x38] sm:$0xf]
    %v3691 = vld [vmem:[%s3675 + $0x3c] sm:$0xf]
    %v3708 = vunpack.c.l.b16 %v3676
    %v3709 = vunpack.c.l.b16 %v3677
    %v3710 = vunpack.c.l.b16 %v3678
    %v3711 = vunpack.c.l.b16 %v3679
    %v3712 = vunpack.c.l.b16 %v3680
    %v3713 = vunpack.c.l.b16 %v3681
    %v3714 = vunpack.c.l.b16 %v3682
    %v3715 = vunpack.c.l.b16 %v3683
    %v3716 = vunpack.c.l.b16 %v3684
    %v3717 = vunpack.c.l.b16 %v3685
    %v3718 = vunpack.c.l.b16 %v3686
    %v3719 = vunpack.c.l.b16 %v3687
    %v3720 = vunpack.c.l.b16 %v3688
    %v3721 = vunpack.c.l.b16 %v3689
    %v3722 = vunpack.c.l.b16 %v3690
    %v3723 = vunpack.c.l.b16 %v3691
    %v3724 = vpack.c.b16 %v3709, %v3708
    %v3725 = vpack.c.b16 %v3711, %v3710
    %v3726 = vpack.c.b16 %v3713, %v3712
    %v3727 = vpack.c.b16 %v3715, %v3714
    %v3728 = vpack.c.b16 %v3717, %v3716
    %v3729 = vpack.c.b16 %v3719, %v3718
    %v3730 = vpack.c.b16 %v3721, %v3720
    %v3731 = vpack.c.b16 %v3723, %v3722
    %3740 = vmatprep.subr.bf16.mxu0 0
    %3741 = vmatpush1.bf16.msra.mxu0 %v3731
    %3742 = vmatprep.subr.bf16.mxu0 0
    %3743 = vmatpush1.bf16.msra.mxu0 %v3730
    %3744 = vmatprep.subr.bf16.mxu0 0
    %3745 = vmatpush1.bf16.msra.mxu0 %v3729
    %3746 = vmatprep.subr.bf16.mxu0 0
    %3747 = vmatpush1.bf16.msra.mxu0 %v3728
    %3748 = vmatprep.subr.bf16.mxu0 0
    %3749 = vmatpush1.bf16.msra.mxu0 %v3727
    %3750 = vmatprep.subr.bf16.mxu0 0
    %3751 = vmatpush1.bf16.msra.mxu0 %v3726
    %3752 = vmatprep.subr.bf16.mxu0 0
    %3753 = vmatpush1.bf16.msra.mxu0 %v3725
    %3754 = vmatprep.subr.bf16.mxu0 0
    %3755 = vmatpush1.bf16.msra.mxu0 %v3724
    %3756 = vmatprep.subr.bf16.mxu0 0
    %3757 = vmatpush2.bf16.msra.mxu0 0
    %3758 = vmatprep.subr.bf16.mxu0 0
    %3759 = vmatpush2.bf16.msra.mxu0 0
    %3760 = vmatprep.subr.bf16.mxu0 0
    %3761 = vmatpush2.bf16.msra.mxu0 0
    %3762 = vmatprep.subr.bf16.mxu0 0
    %3763 = vmatpush2.bf16.msra.mxu0 0
    %3764 = vmatprep.subr.bf16.mxu0 0
    %3765 = vmatpush2.bf16.msra.mxu0 0
    %3766 = vmatprep.subr.bf16.mxu0 0
    %3767 = vmatpush2.bf16.msra.mxu0 0
    %3768 = vmatprep.subr.bf16.mxu0 0
    %3769 = vmatpush2.bf16.msra.mxu0 0
    %3770 = vmatprep.subr.bf16.mxu0 0
    %3771 = vmatpush2.bf16.msra.mxu0 0
    %3772 = vmatprep.mubr.bf16.mxu0 0
    %3773 = vmatmul.mubr.bf16.gmra.mxu0 %v1292
    %v3774 = vpop.f32.mrf.mxu0
    %v3775 = vadd.f32 0.0, %v3774
    %v3776 = vpop.f32.mrf.mxu0
    %v3777 = vpop.f32.mrf.mxu0
    %v3778 = vadd.f32 0.0, %v3777
    %v3779 = vpop.f32.mrf.mxu0
    %3780 = vmatprep.mubr.bf16.mxu0 0
    %3781 = vmatmul.mubr.bf16.gmra.mxu0 %v1293
    %v3782 = vpop.f32.mrf.mxu0
    %v3783 = vadd.f32 0.0, %v3782
    %v3784 = vpop.f32.mrf.mxu0
    %v3785 = vpop.f32.mrf.mxu0
    %v3786 = vadd.f32 0.0, %v3785
    %v3787 = vpop.f32.mrf.mxu0
    %3788 = vmatprep.mubr.bf16.mxu0 0
    %3789 = vmatmul.mubr.bf16.gmra.mxu0 %v1294
    %v3790 = vpop.f32.mrf.mxu0
    %v3791 = vadd.f32 0.0, %v3790
    %v3792 = vpop.f32.mrf.mxu0
    %v3793 = vpop.f32.mrf.mxu0
    %v3794 = vadd.f32 0.0, %v3793
    %v3795 = vpop.f32.mrf.mxu0
    %3796 = vmatprep.mubr.bf16.mxu0 0
    %3797 = vmatmul.mubr.bf16.gmra.mxu0 %v1295
    %v3798 = vpop.f32.mrf.mxu0
    %v3799 = vadd.f32 0.0, %v3798
    %v3800 = vpop.f32.mrf.mxu0
    %v3801 = vpop.f32.mrf.mxu0
    %v3802 = vadd.f32 0.0, %v3801
    %v3803 = vpop.f32.mrf.mxu0
    %3804 = vdwg.mxu0
    %v3805 = vadd.f32 %v3667, %v3775
    %v3806 = vadd.f32 %v3668, %v3778
    %v3807 = vadd.f32 %v3669, %v3783
    %v3808 = vadd.f32 %v3670, %v3786
    %v3809 = vadd.f32 %v3671, %v3791
    %v3810 = vadd.f32 %v3672, %v3794
    %v3811 = vadd.f32 %v3673, %v3799
    %v3812 = vadd.f32 %v3674, %v3802
    %v3813 = vmax.f32 %v3131, %v3805
    %v3814 = vmax.f32 %v3132, %v3806
    %v3815 = vmax.f32 %v3133, %v3807
    %v3816 = vmax.f32 %v3134, %v3808
    %v3817 = vmax.f32 %v3135, %v3809
    %v3818 = vmax.f32 %v3136, %v3810
    %v3819 = vmax.f32 %v3137, %v3811
    %v3820 = vmax.f32 %v3138, %v3812
    %3821 = vmatprep.subr.bf16.mxu0 0
    %3822 = vmatpush1.bf16.msra.mxu0 %v2538
    %3823 = vmatprep.subr.bf16.mxu0 0
    %3824 = vmatpush1.bf16.msra.mxu0 %v2537
    %3825 = vmatprep.subr.bf16.mxu0 0
    %3826 = vmatpush1.bf16.msra.mxu0 %v2536
    %3827 = vmatprep.subr.bf16.mxu0 0
    %3828 = vmatpush1.bf16.msra.mxu0 %v2535
    %3829 = vmatprep.subr.bf16.mxu0 0
    %3830 = vmatpush1.bf16.msra.mxu0 %v2534
    %3831 = vmatprep.subr.bf16.mxu0 0
    %3832 = vmatpush1.bf16.msra.mxu0 %v2533
    %3833 = vmatprep.subr.bf16.mxu0 0
    %3834 = vmatpush1.bf16.msra.mxu0 %v2532
    %3835 = vmatprep.subr.bf16.mxu0 0
    %3836 = vmatpush1.bf16.msra.mxu0 %v2531
    %3837 = vmatprep.subr.bf16.mxu0 0
    %3838 = vmatpush2.bf16.msra.mxu0 0
    %3839 = vmatprep.subr.bf16.mxu0 0
    %3840 = vmatpush2.bf16.msra.mxu0 0
    %3841 = vmatprep.subr.bf16.mxu0 0
    %3842 = vmatpush2.bf16.msra.mxu0 0
    %3843 = vmatprep.subr.bf16.mxu0 0
    %3844 = vmatpush2.bf16.msra.mxu0 0
    %3845 = vmatprep.subr.bf16.mxu0 0
    %3846 = vmatpush2.bf16.msra.mxu0 0
    %3847 = vmatprep.subr.bf16.mxu0 0
    %3848 = vmatpush2.bf16.msra.mxu0 0
    %3849 = vmatprep.subr.bf16.mxu0 0
    %3850 = vmatpush2.bf16.msra.mxu0 0
    %3851 = vmatprep.subr.bf16.mxu0 0
    %3852 = vmatpush2.bf16.msra.mxu0 0
    %3853 = vmatprep.mubr.bf16.mxu0 0
    %3854 = vmatmul.mubr.bf16.gmra.mxu0 %v1291
    %v3855 = vpop.f32.mrf.mxu0
    %v3856 = vadd.f32 0.0, %v3855
    %v3857 = vpop.f32.mrf.mxu0
    %v3858 = vpop.f32.mrf.mxu0
    %v3859 = vadd.f32 0.0, %v3858
    %v3860 = vpop.f32.mrf.mxu0
    %3861 = vmatprep.mubr.bf16.mxu0 0
    %3862 = vmatmul.mubr.bf16.gmra.mxu0 %v1292
    %v3863 = vpop.f32.mrf.mxu0
    %v3864 = vadd.f32 0.0, %v3863
    %v3865 = vpop.f32.mrf.mxu0
    %v3866 = vpop.f32.mrf.mxu0
    %v3867 = vadd.f32 0.0, %v3866
    %v3868 = vpop.f32.mrf.mxu0
    %3869 = vmatprep.mubr.bf16.mxu0 0
    %3870 = vmatmul.mubr.bf16.gmra.mxu0 %v1293
    %v3871 = vpop.f32.mrf.mxu0
    %v3872 = vadd.f32 0.0, %v3871
    %v3873 = vpop.f32.mrf.mxu0
    %v3874 = vpop.f32.mrf.mxu0
    %v3875 = vadd.f32 0.0, %v3874
    %v3876 = vpop.f32.mrf.mxu0
    %3877 = vmatprep.mubr.bf16.mxu0 0
    %3878 = vmatmul.mubr.bf16.gmra.mxu0 %v1294
    %v3879 = vpop.f32.mrf.mxu0
    %v3880 = vadd.f32 0.0, %v3879
    %v3881 = vpop.f32.mrf.mxu0
    %v3882 = vpop.f32.mrf.mxu0
    %v3883 = vadd.f32 0.0, %v3882
    %v3884 = vpop.f32.mrf.mxu0
    %3885 = vdwg.mxu0
    %3886 = vmatprep.subr.bf16.mxu0 0
    %3887 = vmatpush1.bf16.msra.mxu0 %v2651
    %3888 = vmatprep.subr.bf16.mxu0 0
    %3889 = vmatpush1.bf16.msra.mxu0 %v2650
    %3890 = vmatprep.subr.bf16.mxu0 0
    %3891 = vmatpush1.bf16.msra.mxu0 %v2649
    %3892 = vmatprep.subr.bf16.mxu0 0
    %3893 = vmatpush1.bf16.msra.mxu0 %v2648
    %3894 = vmatprep.subr.bf16.mxu0 0
    %3895 = vmatpush1.bf16.msra.mxu0 %v2647
    %3896 = vmatprep.subr.bf16.mxu0 0
    %3897 = vmatpush1.bf16.msra.mxu0 %v2646
    %3898 = vmatprep.subr.bf16.mxu0 0
    %3899 = vmatpush1.bf16.msra.mxu0 %v2645
    %3900 = vmatprep.subr.bf16.mxu0 0
    %3901 = vmatpush1.bf16.msra.mxu0 %v2644
    %3902 = vmatprep.subr.bf16.mxu0 0
    %3903 = vmatpush2.bf16.msra.mxu0 0
    %3904 = vmatprep.subr.bf16.mxu0 0
    %3905 = vmatpush2.bf16.msra.mxu0 0
    %3906 = vmatprep.subr.bf16.mxu0 0
    %3907 = vmatpush2.bf16.msra.mxu0 0
    %3908 = vmatprep.subr.bf16.mxu0 0
    %3909 = vmatpush2.bf16.msra.mxu0 0
    %3910 = vmatprep.subr.bf16.mxu0 0
    %3911 = vmatpush2.bf16.msra.mxu0 0
    %3912 = vmatprep.subr.bf16.mxu0 0
    %3913 = vmatpush2.bf16.msra.mxu0 0
    %3914 = vmatprep.subr.bf16.mxu0 0
    %3915 = vmatpush2.bf16.msra.mxu0 0
    %3916 = vmatprep.subr.bf16.mxu0 0
    %3917 = vmatpush2.bf16.msra.mxu0 0
    %3918 = vmatprep.mubr.bf16.mxu0 0
    %3919 = vmatmul.mubr.bf16.gmra.mxu0 %v2460
    %v3920 = vpop.f32.mrf.mxu0
    %v3921 = vadd.f32 %v3856, %v3920
    %v3922 = vpop.f32.mrf.mxu0
    %v3923 = vpop.f32.mrf.mxu0
    %v3924 = vadd.f32 %v3859, %v3923
    %v3925 = vpop.f32.mrf.mxu0
    %3926 = vmatprep.mubr.bf16.mxu0 0
    %3927 = vmatmul.mubr.bf16.gmra.mxu0 %v2461
    %v3928 = vpop.f32.mrf.mxu0
    %v3929 = vadd.f32 %v3864, %v3928
    %v3930 = vpop.f32.mrf.mxu0
    %v3931 = vpop.f32.mrf.mxu0
    %v3932 = vadd.f32 %v3867, %v3931
    %v3933 = vpop.f32.mrf.mxu0
    %3934 = vmatprep.mubr.bf16.mxu0 0
    %3935 = vmatmul.mubr.bf16.gmra.mxu0 %v2462
    %v3936 = vpop.f32.mrf.mxu0
    %v3937 = vadd.f32 %v3872, %v3936
    %v3938 = vpop.f32.mrf.mxu0
    %v3939 = vpop.f32.mrf.mxu0
    %v3940 = vadd.f32 %v3875, %v3939
    %v3941 = vpop.f32.mrf.mxu0
    %3942 = vmatprep.mubr.bf16.mxu0 0
    %3943 = vmatmul.mubr.bf16.gmra.mxu0 %v2463
    %v3944 = vpop.f32.mrf.mxu0
    %v3945 = vadd.f32 %v3880, %v3944
    %v3946 = vpop.f32.mrf.mxu0
    %v3947 = vpop.f32.mrf.mxu0
    %v3948 = vadd.f32 %v3883, %v3947
    %v3949 = vpop.f32.mrf.mxu0
    %3950 = vdwg.mxu0
    %3951 = vmatprep.subr.bf16.mxu0 0
    %3952 = vmatpush1.bf16.msra.mxu0 %v2781
    %3953 = vmatprep.subr.bf16.mxu0 0
    %3954 = vmatpush1.bf16.msra.mxu0 %v2780
    %3955 = vmatprep.subr.bf16.mxu0 0
    %3956 = vmatpush1.bf16.msra.mxu0 %v2779
    %3957 = vmatprep.subr.bf16.mxu0 0
    %3958 = vmatpush1.bf16.msra.mxu0 %v2778
    %3959 = vmatprep.subr.bf16.mxu0 0
    %3960 = vmatpush1.bf16.msra.mxu0 %v2777
    %3961 = vmatprep.subr.bf16.mxu0 0
    %3962 = vmatpush1.bf16.msra.mxu0 %v2776
    %3963 = vmatprep.subr.bf16.mxu0 0
    %3964 = vmatpush1.bf16.msra.mxu0 %v2775
    %3965 = vmatprep.subr.bf16.mxu0 0
    %3966 = vmatpush1.bf16.msra.mxu0 %v2774
    %3967 = vmatprep.subr.bf16.mxu0 0
    %3968 = vmatpush2.bf16.msra.mxu0 0
    %3969 = vmatprep.subr.bf16.mxu0 0
    %3970 = vmatpush2.bf16.msra.mxu0 0
    %3971 = vmatprep.subr.bf16.mxu0 0
    %3972 = vmatpush2.bf16.msra.mxu0 0
    %3973 = vmatprep.subr.bf16.mxu0 0
    %3974 = vmatpush2.bf16.msra.mxu0 0
    %3975 = vmatprep.subr.bf16.mxu0 0
    %3976 = vmatpush2.bf16.msra.mxu0 0
    %3977 = vmatprep.subr.bf16.mxu0 0
    %3978 = vmatpush2.bf16.msra.mxu0 0
    %3979 = vmatprep.subr.bf16.mxu0 0
    %3980 = vmatpush2.bf16.msra.mxu0 0
    %3981 = vmatprep.subr.bf16.mxu0 0
    %3982 = vmatpush2.bf16.msra.mxu0 0
    %3983 = vmatprep.mubr.bf16.mxu0 0
    %3984 = vmatmul.mubr.bf16.gmra.mxu0 %v2461
    %v3985 = vpop.f32.mrf.mxu0
    %v3986 = vadd.f32 0.0, %v3985
    %v3987 = vpop.f32.mrf.mxu0
    %v3988 = vpop.f32.mrf.mxu0
    %v3989 = vadd.f32 0.0, %v3988
    %v3990 = vpop.f32.mrf.mxu0
    %3991 = vmatprep.mubr.bf16.mxu0 0
    %3992 = vmatmul.mubr.bf16.gmra.mxu0 %v2462
    %v3993 = vpop.f32.mrf.mxu0
    %v3994 = vadd.f32 0.0, %v3993
    %v3995 = vpop.f32.mrf.mxu0
    %v3996 = vpop.f32.mrf.mxu0
    %v3997 = vadd.f32 0.0, %v3996
    %v3998 = vpop.f32.mrf.mxu0
    %3999 = vmatprep.mubr.bf16.mxu0 0
    %4000 = vmatmul.mubr.bf16.gmra.mxu0 %v2463
    %v4001 = vpop.f32.mrf.mxu0
    %v4002 = vadd.f32 0.0, %v4001
    %v4003 = vpop.f32.mrf.mxu0
    %v4004 = vpop.f32.mrf.mxu0
    %v4005 = vadd.f32 0.0, %v4004
    %v4006 = vpop.f32.mrf.mxu0
    %4007 = vmatprep.mubr.bf16.mxu0 0
    %4008 = vmatmul.mubr.bf16.gmra.mxu0 %v2464
    %v4009 = vpop.f32.mrf.mxu0
    %v4010 = vadd.f32 0.0, %v4009
    %v4011 = vpop.f32.mrf.mxu0
    %v4012 = vpop.f32.mrf.mxu0
    %v4013 = vadd.f32 0.0, %v4012
    %v4014 = vpop.f32.mrf.mxu0
    %4015 = vdwg.mxu0
    %v4016 = vadd.f32 %v3921, %v3986
    %v4017 = vadd.f32 %v3924, %v3989
    %v4018 = vadd.f32 %v3929, %v3994
    %v4019 = vadd.f32 %v3932, %v3997
    %v4020 = vadd.f32 %v3937, %v4002
    %v4021 = vadd.f32 %v3940, %v4005
    %v4022 = vadd.f32 %v3945, %v4010
    %v4023 = vadd.f32 %v3948, %v4013
    %4024 = vmatprep.subr.bf16.mxu0 0
    %4025 = vmatpush1.bf16.msra.mxu0 %v2919
    %4026 = vmatprep.subr.bf16.mxu0 0
    %4027 = vmatpush1.bf16.msra.mxu0 %v2918
    %4028 = vmatprep.subr.bf16.mxu0 0
    %4029 = vmatpush1.bf16.msra.mxu0 %v2917
    %4030 = vmatprep.subr.bf16.mxu0 0
    %4031 = vmatpush1.bf16.msra.mxu0 %v2916
    %4032 = vmatprep.subr.bf16.mxu0 0
    %4033 = vmatpush1.bf16.msra.mxu0 %v2915
    %4034 = vmatprep.subr.bf16.mxu0 0
    %4035 = vmatpush1.bf16.msra.mxu0 %v2914
    %4036 = vmatprep.subr.bf16.mxu0 0
    %4037 = vmatpush1.bf16.msra.mxu0 %v2913
    %4038 = vmatprep.subr.bf16.mxu0 0
    %4039 = vmatpush1.bf16.msra.mxu0 %v2912
    %4040 = vmatprep.subr.bf16.mxu0 0
    %4041 = vmatpush2.bf16.msra.mxu0 0
    %4042 = vmatprep.subr.bf16.mxu0 0
    %4043 = vmatpush2.bf16.msra.mxu0 0
    %4044 = vmatprep.subr.bf16.mxu0 0
    %4045 = vmatpush2.bf16.msra.mxu0 0
    %4046 = vmatprep.subr.bf16.mxu0 0
    %4047 = vmatpush2.bf16.msra.mxu0 0
    %4048 = vmatprep.subr.bf16.mxu0 0
    %4049 = vmatpush2.bf16.msra.mxu0 0
    %4050 = vmatprep.subr.bf16.mxu0 0
    %4051 = vmatpush2.bf16.msra.mxu0 0
    %4052 = vmatprep.subr.bf16.mxu0 0
    %4053 = vmatpush2.bf16.msra.mxu0 0
    %4054 = vmatprep.subr.bf16.mxu0 0
    %4055 = vmatpush2.bf16.msra.mxu0 0
    %4056 = vmatprep.mubr.bf16.mxu0 0
    %4057 = vmatmul.mubr.bf16.gmra.mxu0 %v1292
    %v4058 = vpop.f32.mrf.mxu0
    %v4059 = vadd.f32 0.0, %v4058
    %v4060 = vpop.f32.mrf.mxu0
    %v4061 = vpop.f32.mrf.mxu0
    %v4062 = vadd.f32 0.0, %v4061
    %v4063 = vpop.f32.mrf.mxu0
    %4064 = vmatprep.mubr.bf16.mxu0 0
    %4065 = vmatmul.mubr.bf16.gmra.mxu0 %v1293
    %v4066 = vpop.f32.mrf.mxu0
    %v4067 = vadd.f32 0.0, %v4066
    %v4068 = vpop.f32.mrf.mxu0
    %v4069 = vpop.f32.mrf.mxu0
    %v4070 = vadd.f32 0.0, %v4069
    %v4071 = vpop.f32.mrf.mxu0
    %4072 = vmatprep.mubr.bf16.mxu0 0
    %4073 = vmatmul.mubr.bf16.gmra.mxu0 %v1294
    %v4074 = vpop.f32.mrf.mxu0
    %v4075 = vadd.f32 0.0, %v4074
    %v4076 = vpop.f32.mrf.mxu0
    %v4077 = vpop.f32.mrf.mxu0
    %v4078 = vadd.f32 0.0, %v4077
    %v4079 = vpop.f32.mrf.mxu0
    %4080 = vmatprep.mubr.bf16.mxu0 0
    %4081 = vmatmul.mubr.bf16.gmra.mxu0 %v1295
    %v4082 = vpop.f32.mrf.mxu0
    %v4083 = vadd.f32 0.0, %v4082
    %v4084 = vpop.f32.mrf.mxu0
    %v4085 = vpop.f32.mrf.mxu0
    %v4086 = vadd.f32 0.0, %v4085
    %v4087 = vpop.f32.mrf.mxu0
    %4088 = vdwg.mxu0
    %v4089 = vadd.f32 %v4016, %v4059
    %v4090 = vadd.f32 %v4017, %v4062
    %v4091 = vadd.f32 %v4018, %v4067
    %v4092 = vadd.f32 %v4019, %v4070
    %v4093 = vadd.f32 %v4020, %v4075
    %v4094 = vadd.f32 %v4021, %v4078
    %v4095 = vadd.f32 %v4022, %v4083
    %v4096 = vadd.f32 %v4023, %v4086
    %4097 = vmatprep.subr.bf16.mxu0 0
    %4098 = vmatpush1.bf16.msra.mxu0 %v3057
    %4099 = vmatprep.subr.bf16.mxu0 0
    %4100 = vmatpush1.bf16.msra.mxu0 %v3056
    %4101 = vmatprep.subr.bf16.mxu0 0
    %4102 = vmatpush1.bf16.msra.mxu0 %v3055
    %4103 = vmatprep.subr.bf16.mxu0 0
    %4104 = vmatpush1.bf16.msra.mxu0 %v3054
    %4105 = vmatprep.subr.bf16.mxu0 0
    %4106 = vmatpush1.bf16.msra.mxu0 %v3053
    %4107 = vmatprep.subr.bf16.mxu0 0
    %4108 = vmatpush1.bf16.msra.mxu0 %v3052
    %4109 = vmatprep.subr.bf16.mxu0 0
    %4110 = vmatpush1.bf16.msra.mxu0 %v3051
    %4111 = vmatprep.subr.bf16.mxu0 0
    %4112 = vmatpush1.bf16.msra.mxu0 %v3050
    %4113 = vmatprep.subr.bf16.mxu0 0
    %4114 = vmatpush2.bf16.msra.mxu0 0
    %4115 = vmatprep.subr.bf16.mxu0 0
    %4116 = vmatpush2.bf16.msra.mxu0 0
    %4117 = vmatprep.subr.bf16.mxu0 0
    %4118 = vmatpush2.bf16.msra.mxu0 0
    %4119 = vmatprep.subr.bf16.mxu0 0
    %4120 = vmatpush2.bf16.msra.mxu0 0
    %4121 = vmatprep.subr.bf16.mxu0 0
    %4122 = vmatpush2.bf16.msra.mxu0 0
    %4123 = vmatprep.subr.bf16.mxu0 0
    %4124 = vmatpush2.bf16.msra.mxu0 0
    %4125 = vmatprep.subr.bf16.mxu0 0
    %4126 = vmatpush2.bf16.msra.mxu0 0
    %4127 = vmatprep.subr.bf16.mxu0 0
    %4128 = vmatpush2.bf16.msra.mxu0 0
    %4129 = vmatprep.mubr.bf16.mxu0 0
    %4130 = vmatmul.mubr.bf16.gmra.mxu0 %v2462
    %v4131 = vpop.f32.mrf.mxu0
    %v4132 = vadd.f32 0.0, %v4131
    %v4133 = vpop.f32.mrf.mxu0
    %v4134 = vpop.f32.mrf.mxu0
    %v4135 = vadd.f32 0.0, %v4134
    %v4136 = vpop.f32.mrf.mxu0
    %4137 = vmatprep.mubr.bf16.mxu0 0
    %4138 = vmatmul.mubr.bf16.gmra.mxu0 %v2463
    %v4139 = vpop.f32.mrf.mxu0
    %v4140 = vadd.f32 0.0, %v4139
    %v4141 = vpop.f32.mrf.mxu0
    %v4142 = vpop.f32.mrf.mxu0
    %v4143 = vadd.f32 0.0, %v4142
    %v4144 = vpop.f32.mrf.mxu0
    %4145 = vmatprep.mubr.bf16.mxu0 0
    %4146 = vmatmul.mubr.bf16.gmra.mxu0 %v2464
    %v4147 = vpop.f32.mrf.mxu0
    %v4148 = vadd.f32 0.0, %v4147
    %v4149 = vpop.f32.mrf.mxu0
    %v4150 = vpop.f32.mrf.mxu0
    %v4151 = vadd.f32 0.0, %v4150
    %v4152 = vpop.f32.mrf.mxu0
    %4153 = vmatprep.mubr.bf16.mxu0 0
    %4154 = vmatmul.mubr.bf16.gmra.mxu0 %v2465
    %v4155 = vpop.f32.mrf.mxu0
    %v4156 = vadd.f32 0.0, %v4155
    %v4157 = vpop.f32.mrf.mxu0
    %v4158 = vpop.f32.mrf.mxu0
    %v4159 = vadd.f32 0.0, %v4158
    %v4160 = vpop.f32.mrf.mxu0
    %4161 = vdwg.mxu0
    %v4162 = vadd.f32 %v4089, %v4132
    %v4163 = vadd.f32 %v4090, %v4135
    %v4164 = vadd.f32 %v4091, %v4140
    %v4165 = vadd.f32 %v4092, %v4143
    %v4166 = vadd.f32 %v4093, %v4148
    %v4167 = vadd.f32 %v4094, %v4151
    %v4168 = vadd.f32 %v4095, %v4156
    %v4169 = vadd.f32 %v4096, %v4159
    %v4170 = vmax.f32 %v3813, %v4162
    %v4171 = vmax.f32 %v3814, %v4163
    %v4172 = vmax.f32 %v3815, %v4164
    %v4173 = vmax.f32 %v3816, %v4165
    %v4174 = vmax.f32 %v3817, %v4166
    %v4175 = vmax.f32 %v3818, %v4167
    %v4176 = vmax.f32 %v3819, %v4168
    %v4177 = vmax.f32 %v3820, %v4169
    %4178 = vmatprep.subr.bf16.mxu0 0
    %4179 = vmatpush1.bf16.msra.mxu0 %v3212
    %4180 = vmatprep.subr.bf16.mxu0 0
    %4181 = vmatpush1.bf16.msra.mxu0 %v3211
    %4182 = vmatprep.subr.bf16.mxu0 0
    %4183 = vmatpush1.bf16.msra.mxu0 %v3210
    %4184 = vmatprep.subr.bf16.mxu0 0
    %4185 = vmatpush1.bf16.msra.mxu0 %v3209
    %4186 = vmatprep.subr.bf16.mxu0 0
    %4187 = vmatpush1.bf16.msra.mxu0 %v3208
    %4188 = vmatprep.subr.bf16.mxu0 0
    %4189 = vmatpush1.bf16.msra.mxu0 %v3207
    %4190 = vmatprep.subr.bf16.mxu0 0
    %4191 = vmatpush1.bf16.msra.mxu0 %v3206
    %4192 = vmatprep.subr.bf16.mxu0 0
    %4193 = vmatpush1.bf16.msra.mxu0 %v3205
    %4194 = vmatprep.subr.bf16.mxu0 0
    %4195 = vmatpush2.bf16.msra.mxu0 0
    %4196 = vmatprep.subr.bf16.mxu0 0
    %4197 = vmatpush2.bf16.msra.mxu0 0
    %4198 = vmatprep.subr.bf16.mxu0 0
    %4199 = vmatpush2.bf16.msra.mxu0 0
    %4200 = vmatprep.subr.bf16.mxu0 0
    %4201 = vmatpush2.bf16.msra.mxu0 0
    %4202 = vmatprep.subr.bf16.mxu0 0
    %4203 = vmatpush2.bf16.msra.mxu0 0
    %4204 = vmatprep.subr.bf16.mxu0 0
    %4205 = vmatpush2.bf16.msra.mxu0 0
    %4206 = vmatprep.subr.bf16.mxu0 0
    %4207 = vmatpush2.bf16.msra.mxu0 0
    %4208 = vmatprep.subr.bf16.mxu0 0
    %4209 = vmatpush2.bf16.msra.mxu0 0
    %4210 = vmatprep.mubr.bf16.mxu0 0
    %4211 = vmatmul.mubr.bf16.gmra.mxu0 %v1291
    %v4212 = vpop.f32.mrf.mxu0
    %v4213 = vadd.f32 0.0, %v4212
    %v4214 = vpop.f32.mrf.mxu0
    %v4215 = vpop.f32.mrf.mxu0
    %v4216 = vadd.f32 0.0, %v4215
    %v4217 = vpop.f32.mrf.mxu0
    %4218 = vmatprep.mubr.bf16.mxu0 0
    %4219 = vmatmul.mubr.bf16.gmra.mxu0 %v1292
    %v4220 = vpop.f32.mrf.mxu0
    %v4221 = vadd.f32 0.0, %v4220
    %v4222 = vpop.f32.mrf.mxu0
    %v4223 = vpop.f32.mrf.mxu0
    %v4224 = vadd.f32 0.0, %v4223
    %v4225 = vpop.f32.mrf.mxu0
    %4226 = vmatprep.mubr.bf16.mxu0 0
    %4227 = vmatmul.mubr.bf16.gmra.mxu0 %v1293
    %v4228 = vpop.f32.mrf.mxu0
    %v4229 = vadd.f32 0.0, %v4228
    %v4230 = vpop.f32.mrf.mxu0
    %v4231 = vpop.f32.mrf.mxu0
    %v4232 = vadd.f32 0.0, %v4231
    %v4233 = vpop.f32.mrf.mxu0
    %4234 = vmatprep.mubr.bf16.mxu0 0
    %4235 = vmatmul.mubr.bf16.gmra.mxu0 %v1294
    %v4236 = vpop.f32.mrf.mxu0
    %v4237 = vadd.f32 0.0, %v4236
    %v4238 = vpop.f32.mrf.mxu0
    %v4239 = vpop.f32.mrf.mxu0
    %v4240 = vadd.f32 0.0, %v4239
    %v4241 = vpop.f32.mrf.mxu0
    %4242 = vdwg.mxu0
    %4243 = vmatprep.subr.bf16.mxu0 0
    %4244 = vmatpush1.bf16.msra.mxu0 %v3325
    %4245 = vmatprep.subr.bf16.mxu0 0
    %4246 = vmatpush1.bf16.msra.mxu0 %v3324
    %4247 = vmatprep.subr.bf16.mxu0 0
    %4248 = vmatpush1.bf16.msra.mxu0 %v3323
    %4249 = vmatprep.subr.bf16.mxu0 0
    %4250 = vmatpush1.bf16.msra.mxu0 %v3322
    %4251 = vmatprep.subr.bf16.mxu0 0
    %4252 = vmatpush1.bf16.msra.mxu0 %v3321
    %4253 = vmatprep.subr.bf16.mxu0 0
    %4254 = vmatpush1.bf16.msra.mxu0 %v3320
    %4255 = vmatprep.subr.bf16.mxu0 0
    %4256 = vmatpush1.bf16.msra.mxu0 %v3319
    %4257 = vmatprep.subr.bf16.mxu0 0
    %4258 = vmatpush1.bf16.msra.mxu0 %v3318
    %4259 = vmatprep.subr.bf16.mxu0 0
    %4260 = vmatpush2.bf16.msra.mxu0 0
    %4261 = vmatprep.subr.bf16.mxu0 0
    %4262 = vmatpush2.bf16.msra.mxu0 0
    %4263 = vmatprep.subr.bf16.mxu0 0
    %4264 = vmatpush2.bf16.msra.mxu0 0
    %4265 = vmatprep.subr.bf16.mxu0 0
    %4266 = vmatpush2.bf16.msra.mxu0 0
    %4267 = vmatprep.subr.bf16.mxu0 0
    %4268 = vmatpush2.bf16.msra.mxu0 0
    %4269 = vmatprep.subr.bf16.mxu0 0
    %4270 = vmatpush2.bf16.msra.mxu0 0
    %4271 = vmatprep.subr.bf16.mxu0 0
    %4272 = vmatpush2.bf16.msra.mxu0 0
    %4273 = vmatprep.subr.bf16.mxu0 0
    %4274 = vmatpush2.bf16.msra.mxu0 0
    %4275 = vmatprep.mubr.bf16.mxu0 0
    %4276 = vmatmul.mubr.bf16.gmra.mxu0 %v2460
    %v4277 = vpop.f32.mrf.mxu0
    %v4278 = vadd.f32 %v4213, %v4277
    %v4279 = vpop.f32.mrf.mxu0
    %v4280 = vpop.f32.mrf.mxu0
    %v4281 = vadd.f32 %v4216, %v4280
    %v4282 = vpop.f32.mrf.mxu0
    %4283 = vmatprep.mubr.bf16.mxu0 0
    %4284 = vmatmul.mubr.bf16.gmra.mxu0 %v2461
    %v4285 = vpop.f32.mrf.mxu0
    %v4286 = vadd.f32 %v4221, %v4285
    %v4287 = vpop.f32.mrf.mxu0
    %v4288 = vpop.f32.mrf.mxu0
    %v4289 = vadd.f32 %v4224, %v4288
    %v4290 = vpop.f32.mrf.mxu0
    %4291 = vmatprep.mubr.bf16.mxu0 0
    %4292 = vmatmul.mubr.bf16.gmra.mxu0 %v2462
    %v4293 = vpop.f32.mrf.mxu0
    %v4294 = vadd.f32 %v4229, %v4293
    %v4295 = vpop.f32.mrf.mxu0
    %v4296 = vpop.f32.mrf.mxu0
    %v4297 = vadd.f32 %v4232, %v4296
    %v4298 = vpop.f32.mrf.mxu0
    %4299 = vmatprep.mubr.bf16.mxu0 0
    %4300 = vmatmul.mubr.bf16.gmra.mxu0 %v2463
    %v4301 = vpop.f32.mrf.mxu0
    %v4302 = vadd.f32 %v4237, %v4301
    %v4303 = vpop.f32.mrf.mxu0
    %v4304 = vpop.f32.mrf.mxu0
    %v4305 = vadd.f32 %v4240, %v4304
    %v4306 = vpop.f32.mrf.mxu0
    %4307 = vdwg.mxu0
    %4308 = vmatprep.subr.bf16.mxu0 0
    %4309 = vmatpush1.bf16.msra.mxu0 %v3455
    %4310 = vmatprep.subr.bf16.mxu0 0
    %4311 = vmatpush1.bf16.msra.mxu0 %v3454
    %4312 = vmatprep.subr.bf16.mxu0 0
    %4313 = vmatpush1.bf16.msra.mxu0 %v3453
    %4314 = vmatprep.subr.bf16.mxu0 0
    %4315 = vmatpush1.bf16.msra.mxu0 %v3452
    %4316 = vmatprep.subr.bf16.mxu0 0
    %4317 = vmatpush1.bf16.msra.mxu0 %v3451
    %4318 = vmatprep.subr.bf16.mxu0 0
    %4319 = vmatpush1.bf16.msra.mxu0 %v3450
    %4320 = vmatprep.subr.bf16.mxu0 0
    %4321 = vmatpush1.bf16.msra.mxu0 %v3449
    %4322 = vmatprep.subr.bf16.mxu0 0
    %4323 = vmatpush1.bf16.msra.mxu0 %v3448
    %4324 = vmatprep.subr.bf16.mxu0 0
    %4325 = vmatpush2.bf16.msra.mxu0 0
    %4326 = vmatprep.subr.bf16.mxu0 0
    %4327 = vmatpush2.bf16.msra.mxu0 0
    %4328 = vmatprep.subr.bf16.mxu0 0
    %4329 = vmatpush2.bf16.msra.mxu0 0
    %4330 = vmatprep.subr.bf16.mxu0 0
    %4331 = vmatpush2.bf16.msra.mxu0 0
    %4332 = vmatprep.subr.bf16.mxu0 0
    %4333 = vmatpush2.bf16.msra.mxu0 0
    %4334 = vmatprep.subr.bf16.mxu0 0
    %4335 = vmatpush2.bf16.msra.mxu0 0
    %4336 = vmatprep.subr.bf16.mxu0 0
    %4337 = vmatpush2.bf16.msra.mxu0 0
    %4338 = vmatprep.subr.bf16.mxu0 0
    %4339 = vmatpush2.bf16.msra.mxu0 0
    %4340 = vmatprep.mubr.bf16.mxu0 0
    %4341 = vmatmul.mubr.bf16.gmra.mxu0 %v2461
    %v4342 = vpop.f32.mrf.mxu0
    %v4343 = vadd.f32 0.0, %v4342
    %v4344 = vpop.f32.mrf.mxu0
    %v4345 = vpop.f32.mrf.mxu0
    %v4346 = vadd.f32 0.0, %v4345
    %v4347 = vpop.f32.mrf.mxu0
    %4348 = vmatprep.mubr.bf16.mxu0 0
    %4349 = vmatmul.mubr.bf16.gmra.mxu0 %v2462
    %v4350 = vpop.f32.mrf.mxu0
    %v4351 = vadd.f32 0.0, %v4350
    %v4352 = vpop.f32.mrf.mxu0
    %v4353 = vpop.f32.mrf.mxu0
    %v4354 = vadd.f32 0.0, %v4353
    %v4355 = vpop.f32.mrf.mxu0
    %4356 = vmatprep.mubr.bf16.mxu0 0
    %4357 = vmatmul.mubr.bf16.gmra.mxu0 %v2463
    %v4358 = vpop.f32.mrf.mxu0
    %v4359 = vadd.f32 0.0, %v4358
    %v4360 = vpop.f32.mrf.mxu0
    %v4361 = vpop.f32.mrf.mxu0
    %v4362 = vadd.f32 0.0, %v4361
    %v4363 = vpop.f32.mrf.mxu0
    %4364 = vmatprep.mubr.bf16.mxu0 0
    %4365 = vmatmul.mubr.bf16.gmra.mxu0 %v2464
    %v4366 = vpop.f32.mrf.mxu0
    %v4367 = vadd.f32 0.0, %v4366
    %v4368 = vpop.f32.mrf.mxu0
    %v4369 = vpop.f32.mrf.mxu0
    %v4370 = vadd.f32 0.0, %v4369
    %v4371 = vpop.f32.mrf.mxu0
    %4372 = vdwg.mxu0
    %v4373 = vadd.f32 %v4278, %v4343
    %v4374 = vadd.f32 %v4281, %v4346
    %v4375 = vadd.f32 %v4286, %v4351
    %v4376 = vadd.f32 %v4289, %v4354
    %v4377 = vadd.f32 %v4294, %v4359
    %v4378 = vadd.f32 %v4297, %v4362
    %v4379 = vadd.f32 %v4302, %v4367
    %v4380 = vadd.f32 %v4305, %v4370
    %4381 = vmatprep.subr.bf16.mxu0 0
    %4382 = vmatpush1.bf16.msra.mxu0 %v3593
    %4383 = vmatprep.subr.bf16.mxu0 0
    %4384 = vmatpush1.bf16.msra.mxu0 %v3592
    %4385 = vmatprep.subr.bf16.mxu0 0
    %4386 = vmatpush1.bf16.msra.mxu0 %v3591
    %4387 = vmatprep.subr.bf16.mxu0 0
    %4388 = vmatpush1.bf16.msra.mxu0 %v3590
    %4389 = vmatprep.subr.bf16.mxu0 0
    %4390 = vmatpush1.bf16.msra.mxu0 %v3589
    %4391 = vmatprep.subr.bf16.mxu0 0
    %4392 = vmatpush1.bf16.msra.mxu0 %v3588
    %4393 = vmatprep.subr.bf16.mxu0 0
    %4394 = vmatpush1.bf16.msra.mxu0 %v3587
    %4395 = vmatprep.subr.bf16.mxu0 0
    %4396 = vmatpush1.bf16.msra.mxu0 %v3586
    %4397 = vmatprep.subr.bf16.mxu0 0
    %4398 = vmatpush2.bf16.msra.mxu0 0
    %4399 = vmatprep.subr.bf16.mxu0 0
    %4400 = vmatpush2.bf16.msra.mxu0 0
    %4401 = vmatprep.subr.bf16.mxu0 0
    %4402 = vmatpush2.bf16.msra.mxu0 0
    %4403 = vmatprep.subr.bf16.mxu0 0
    %4404 = vmatpush2.bf16.msra.mxu0 0
    %4405 = vmatprep.subr.bf16.mxu0 0
    %4406 = vmatpush2.bf16.msra.mxu0 0
    %4407 = vmatprep.subr.bf16.mxu0 0
    %4408 = vmatpush2.bf16.msra.mxu0 0
    %4409 = vmatprep.subr.bf16.mxu0 0
    %4410 = vmatpush2.bf16.msra.mxu0 0
    %4411 = vmatprep.subr.bf16.mxu0 0
    %4412 = vmatpush2.bf16.msra.mxu0 0
    %4413 = vmatprep.mubr.bf16.mxu0 0
    %4414 = vmatmul.mubr.bf16.gmra.mxu0 %v1292
    %v4415 = vpop.f32.mrf.mxu0
    %v4416 = vadd.f32 0.0, %v4415
    %v4417 = vpop.f32.mrf.mxu0
    %v4418 = vpop.f32.mrf.mxu0
    %v4419 = vadd.f32 0.0, %v4418
    %v4420 = vpop.f32.mrf.mxu0
    %4421 = vmatprep.mubr.bf16.mxu0 0
    %4422 = vmatmul.mubr.bf16.gmra.mxu0 %v1293
    %v4423 = vpop.f32.mrf.mxu0
    %v4424 = vadd.f32 0.0, %v4423
    %v4425 = vpop.f32.mrf.mxu0
    %v4426 = vpop.f32.mrf.mxu0
    %v4427 = vadd.f32 0.0, %v4426
    %v4428 = vpop.f32.mrf.mxu0
    %4429 = vmatprep.mubr.bf16.mxu0 0
    %4430 = vmatmul.mubr.bf16.gmra.mxu0 %v1294
    %v4431 = vpop.f32.mrf.mxu0
    %v4432 = vadd.f32 0.0, %v4431
    %v4433 = vpop.f32.mrf.mxu0
    %v4434 = vpop.f32.mrf.mxu0
    %v4435 = vadd.f32 0.0, %v4434
    %v4436 = vpop.f32.mrf.mxu0
    %4437 = vmatprep.mubr.bf16.mxu0 0
    %4438 = vmatmul.mubr.bf16.gmra.mxu0 %v1295
    %v4439 = vpop.f32.mrf.mxu0
    %v4440 = vadd.f32 0.0, %v4439
    %v4441 = vpop.f32.mrf.mxu0
    %v4442 = vpop.f32.mrf.mxu0
    %v4443 = vadd.f32 0.0, %v4442
    %v4444 = vpop.f32.mrf.mxu0
    %4445 = vdwg.mxu0
    %v4446 = vadd.f32 %v4373, %v4416
    %v4447 = vadd.f32 %v4374, %v4419
    %v4448 = vadd.f32 %v4375, %v4424
    %v4449 = vadd.f32 %v4376, %v4427
    %v4450 = vadd.f32 %v4377, %v4432
    %v4451 = vadd.f32 %v4378, %v4435
    %v4452 = vadd.f32 %v4379, %v4440
    %v4453 = vadd.f32 %v4380, %v4443
    %4454 = vmatprep.subr.bf16.mxu0 0
    %4455 = vmatpush1.bf16.msra.mxu0 %v3731
    %4456 = vmatprep.subr.bf16.mxu0 0
    %4457 = vmatpush1.bf16.msra.mxu0 %v3730
    %4458 = vmatprep.subr.bf16.mxu0 0
    %4459 = vmatpush1.bf16.msra.mxu0 %v3729
    %4460 = vmatprep.subr.bf16.mxu0 0
    %4461 = vmatpush1.bf16.msra.mxu0 %v3728
    %4462 = vmatprep.subr.bf16.mxu0 0
    %4463 = vmatpush1.bf16.msra.mxu0 %v3727
    %4464 = vmatprep.subr.bf16.mxu0 0
    %4465 = vmatpush1.bf16.msra.mxu0 %v3726
    %4466 = vmatprep.subr.bf16.mxu0 0
    %4467 = vmatpush1.bf16.msra.mxu0 %v3725
    %4468 = vmatprep.subr.bf16.mxu0 0
    %4469 = vmatpush1.bf16.msra.mxu0 %v3724
    %4470 = vmatprep.subr.bf16.mxu0 0
    %4471 = vmatpush2.bf16.msra.mxu0 0
    %4472 = vmatprep.subr.bf16.mxu0 0
    %4473 = vmatpush2.bf16.msra.mxu0 0
    %4474 = vmatprep.subr.bf16.mxu0 0
    %4475 = vmatpush2.bf16.msra.mxu0 0
    %4476 = vmatprep.subr.bf16.mxu0 0
    %4477 = vmatpush2.bf16.msra.mxu0 0
    %4478 = vmatprep.subr.bf16.mxu0 0
    %4479 = vmatpush2.bf16.msra.mxu0 0
    %4480 = vmatprep.subr.bf16.mxu0 0
    %4481 = vmatpush2.bf16.msra.mxu0 0
    %4482 = vmatprep.subr.bf16.mxu0 0
    %4483 = vmatpush2.bf16.msra.mxu0 0
    %4484 = vmatprep.subr.bf16.mxu0 0
    %4485 = vmatpush2.bf16.msra.mxu0 0
    %4486 = vmatprep.mubr.bf16.mxu0 0
    %4487 = vmatmul.mubr.bf16.gmra.mxu0 %v2462
    %v4488 = vpop.f32.mrf.mxu0
    %v4489 = vadd.f32 0.0, %v4488
    %v4490 = vpop.f32.mrf.mxu0
    %v4491 = vpop.f32.mrf.mxu0
    %v4492 = vadd.f32 0.0, %v4491
    %v4493 = vpop.f32.mrf.mxu0
    %4494 = vmatprep.mubr.bf16.mxu0 0
    %4495 = vmatmul.mubr.bf16.gmra.mxu0 %v2463
    %v4496 = vpop.f32.mrf.mxu0
    %v4497 = vadd.f32 0.0, %v4496
    %v4498 = vpop.f32.mrf.mxu0
    %v4499 = vpop.f32.mrf.mxu0
    %v4500 = vadd.f32 0.0, %v4499
    %v4501 = vpop.f32.mrf.mxu0
    %4502 = vmatprep.mubr.bf16.mxu0 0
    %4503 = vmatmul.mubr.bf16.gmra.mxu0 %v2464
    %v4504 = vpop.f32.mrf.mxu0
    %v4505 = vadd.f32 0.0, %v4504
    %v4506 = vpop.f32.mrf.mxu0
    %v4507 = vpop.f32.mrf.mxu0
    %v4508 = vadd.f32 0.0, %v4507
    %v4509 = vpop.f32.mrf.mxu0
    %4510 = vmatprep.mubr.bf16.mxu0 0
    %4511 = vmatmul.mubr.bf16.gmra.mxu0 %v2465
    %v4512 = vpop.f32.mrf.mxu0
    %v4513 = vadd.f32 0.0, %v4512
    %v4514 = vpop.f32.mrf.mxu0
    %v4515 = vpop.f32.mrf.mxu0
    %v4516 = vadd.f32 0.0, %v4515
    %v4517 = vpop.f32.mrf.mxu0
    %4518 = vdwg.mxu0
    %v4519 = vadd.f32 %v4446, %v4489
    %v4520 = vadd.f32 %v4447, %v4492
    %v4521 = vadd.f32 %v4448, %v4497
    %v4522 = vadd.f32 %v4449, %v4500
    %v4523 = vadd.f32 %v4450, %v4505
    %v4524 = vadd.f32 %v4451, %v4508
    %v4525 = vadd.f32 %v4452, %v4513
    %v4526 = vadd.f32 %v4453, %v4516
    %v4527 = vmax.f32 %v4170, %v4519
    %v4528 = vmax.f32 %v4171, %v4520
    %v4529 = vmax.f32 %v4172, %v4521
    %v4530 = vmax.f32 %v4173, %v4522
    %v4531 = vmax.f32 %v4174, %v4523
    %v4532 = vmax.f32 %v4175, %v4524
    %v4533 = vmax.f32 %v4176, %v4525
    %v4534 = vmax.f32 %v4177, %v4526
    %v4535 = vld [vmem:[%s5] sm:$0x1]
    %v4537 = vlaneseq
    %v4538 = vshrl.u32 %v4537, 7
    %v4539 = vsub.s32 0, %v4538
    %v4540 = vrot.slane %v4535, %v4539
    %v4542 = vadd.f32 %v4527, %v4540
    %v4543 = vadd.f32 %v4528, %v4540
    %v4544 = vadd.f32 %v4529, %v4540
    %v4545 = vadd.f32 %v4530, %v4540
    %v4546 = vadd.f32 %v4531, %v4540
    %v4547 = vadd.f32 %v4532, %v4540
    %v4548 = vadd.f32 %v4533, %v4540
    %v4549 = vadd.f32 %v4534, %v4540
    %v4550 = vmax.f32 %v4542, 0.0
    %v4551 = vmax.f32 %v4543, 0.0
    %v4552 = vmax.f32 %v4544, 0.0
    %v4553 = vmax.f32 %v4545, 0.0
    %v4554 = vmax.f32 %v4546, 0.0
    %v4555 = vmax.f32 %v4547, 0.0
    %v4556 = vmax.f32 %v4548, 0.0
    %v4557 = vmax.f32 %v4549, 0.0
    %v4558 = vpack.c.bf16 %v4551, %v4550
    %v4559 = vpack.c.bf16 %v4553, %v4552
    %v4560 = vpack.c.bf16 %v4555, %v4554
    %v4561 = vpack.c.bf16 %v4557, %v4556
    %v4562 = vld [vmem:[%s6] sm:$0xf]
    %v4563 = vld [vmem:[%s6 + $0x4] sm:$0xf]
    %v4564 = vld [vmem:[%s6 + $0x8] sm:$0xf]
    %v4565 = vld [vmem:[%s6 + $0xc] sm:$0xf]
    %v4566 = vld [vmem:[%s6 + $0x10] sm:$0xf]
    %v4567 = vld [vmem:[%s6 + $0x14] sm:$0xf]
    %v4568 = vld [vmem:[%s6 + $0x18] sm:$0xf]
    %v4569 = vld [vmem:[%s6 + $0x1c] sm:$0xf]
    %v4570 = vld [vmem:[%s6 + $0x20] sm:$0xf]
    %v4571 = vld [vmem:[%s6 + $0x24] sm:$0xf]
    %v4572 = vld [vmem:[%s6 + $0x28] sm:$0xf]
    %v4573 = vld [vmem:[%s6 + $0x2c] sm:$0xf]
    %v4574 = vld [vmem:[%s6 + $0x30] sm:$0xf]
    %v4575 = vld [vmem:[%s6 + $0x34] sm:$0xf]
    %v4576 = vld [vmem:[%s6 + $0x38] sm:$0xf]
    %v4577 = vld [vmem:[%s6 + $0x3c] sm:$0xf]
    %s4578 = scalar_lea.vmem %s6, 64
    %v4579 = vld [vmem:[%s4578] sm:$0xf]
    %v4580 = vld [vmem:[%s4578 + $0x4] sm:$0xf]
    %v4581 = vld [vmem:[%s4578 + $0x8] sm:$0xf]
    %v4582 = vld [vmem:[%s4578 + $0xc] sm:$0xf]
    %v4583 = vld [vmem:[%s4578 + $0x10] sm:$0xf]
    %v4584 = vld [vmem:[%s4578 + $0x14] sm:$0xf]
    %v4585 = vld [vmem:[%s4578 + $0x18] sm:$0xf]
    %v4586 = vld [vmem:[%s4578 + $0x1c] sm:$0xf]
    %v4587 = vld [vmem:[%s4578 + $0x20] sm:$0xf]
    %v4588 = vld [vmem:[%s4578 + $0x24] sm:$0xf]
    %v4589 = vld [vmem:[%s4578 + $0x28] sm:$0xf]
    %v4590 = vld [vmem:[%s4578 + $0x2c] sm:$0xf]
    %v4591 = vld [vmem:[%s4578 + $0x30] sm:$0xf]
    %v4592 = vld [vmem:[%s4578 + $0x34] sm:$0xf]
    %v4593 = vld [vmem:[%s4578 + $0x38] sm:$0xf]
    %v4594 = vld [vmem:[%s4578 + $0x3c] sm:$0xf]
    %v4611 = vunpack.c.l.b16 %v4579
    %v4612 = vunpack.c.l.b16 %v4580
    %v4613 = vunpack.c.l.b16 %v4581
    %v4614 = vunpack.c.l.b16 %v4582
    %v4615 = vunpack.c.l.b16 %v4583
    %v4616 = vunpack.c.l.b16 %v4584
    %v4617 = vunpack.c.l.b16 %v4585
    %v4618 = vunpack.c.l.b16 %v4586
    %v4619 = vunpack.c.l.b16 %v4587
    %v4620 = vunpack.c.l.b16 %v4588
    %v4621 = vunpack.c.l.b16 %v4589
    %v4622 = vunpack.c.l.b16 %v4590
    %v4623 = vunpack.c.l.b16 %v4591
    %v4624 = vunpack.c.l.b16 %v4592
    %v4625 = vunpack.c.l.b16 %v4593
    %v4626 = vunpack.c.l.b16 %v4594
    %v4627 = vpack.c.b16 %v4612, %v4611
    %v4628 = vpack.c.b16 %v4614, %v4613
    %v4629 = vpack.c.b16 %v4616, %v4615
    %v4630 = vpack.c.b16 %v4618, %v4617
    %v4631 = vpack.c.b16 %v4620, %v4619
    %v4632 = vpack.c.b16 %v4622, %v4621
    %v4633 = vpack.c.b16 %v4624, %v4623
    %v4634 = vpack.c.b16 %v4626, %v4625
    %4643 = vmatprep.subr.bf16.mxu0 0
    %4644 = vmatpush1.bf16.msra.mxu0 %v4634
    %4645 = vmatprep.subr.bf16.mxu0 0
    %4646 = vmatpush1.bf16.msra.mxu0 %v4633
    %4647 = vmatprep.subr.bf16.mxu0 0
    %4648 = vmatpush1.bf16.msra.mxu0 %v4632
    %4649 = vmatprep.subr.bf16.mxu0 0
    %4650 = vmatpush1.bf16.msra.mxu0 %v4631
    %4651 = vmatprep.subr.bf16.mxu0 0
    %4652 = vmatpush1.bf16.msra.mxu0 %v4630
    %4653 = vmatprep.subr.bf16.mxu0 0
    %4654 = vmatpush1.bf16.msra.mxu0 %v4629
    %4655 = vmatprep.subr.bf16.mxu0 0
    %4656 = vmatpush1.bf16.msra.mxu0 %v4628
    %4657 = vmatprep.subr.bf16.mxu0 0
    %4658 = vmatpush1.bf16.msra.mxu0 %v4627
    %4659 = vmatprep.subr.bf16.mxu0 0
    %4660 = vmatpush2.bf16.msra.mxu0 0
    %4661 = vmatprep.subr.bf16.mxu0 0
    %4662 = vmatpush2.bf16.msra.mxu0 0
    %4663 = vmatprep.subr.bf16.mxu0 0
    %4664 = vmatpush2.bf16.msra.mxu0 0
    %4665 = vmatprep.subr.bf16.mxu0 0
    %4666 = vmatpush2.bf16.msra.mxu0 0
    %4667 = vmatprep.subr.bf16.mxu0 0
    %4668 = vmatpush2.bf16.msra.mxu0 0
    %4669 = vmatprep.subr.bf16.mxu0 0
    %4670 = vmatpush2.bf16.msra.mxu0 0
    %4671 = vmatprep.subr.bf16.mxu0 0
    %4672 = vmatpush2.bf16.msra.mxu0 0
    %4673 = vmatprep.subr.bf16.mxu0 0
    %4674 = vmatpush2.bf16.msra.mxu0 0
    %4675 = vmatprep.mubr.bf16.mxu0 0
    %4676 = vmatmul.mubr.bf16.gmra.mxu0 %v4559
    %v4677 = vpop.f32.mrf.mxu0
    %v4678 = vadd.f32 0.0, %v4677
    %v4679 = vpop.f32.mrf.mxu0
    %v4680 = vpop.f32.mrf.mxu0
    %v4681 = vadd.f32 0.0, %v4680
    %v4682 = vpop.f32.mrf.mxu0
    %4683 = vdwg.mxu0
    %v4700 = vunpack.c.l.b16 %v4562
    %v4701 = vunpack.c.l.b16 %v4563
    %v4702 = vunpack.c.l.b16 %v4564
    %v4703 = vunpack.c.l.b16 %v4565
    %v4704 = vunpack.c.l.b16 %v4566
    %v4705 = vunpack.c.l.b16 %v4567
    %v4706 = vunpack.c.l.b16 %v4568
    %v4707 = vunpack.c.l.b16 %v4569
    %v4708 = vunpack.c.l.b16 %v4570
    %v4709 = vunpack.c.l.b16 %v4571
    %v4710 = vunpack.c.l.b16 %v4572
    %v4711 = vunpack.c.l.b16 %v4573
    %v4712 = vunpack.c.l.b16 %v4574
    %v4713 = vunpack.c.l.b16 %v4575
    %v4714 = vunpack.c.l.b16 %v4576
    %v4715 = vunpack.c.l.b16 %v4577
    %v4716 = vpack.c.b16 %v4701, %v4700
    %v4717 = vpack.c.b16 %v4703, %v4702
    %v4718 = vpack.c.b16 %v4705, %v4704
    %v4719 = vpack.c.b16 %v4707, %v4706
    %v4720 = vpack.c.b16 %v4709, %v4708
    %v4721 = vpack.c.b16 %v4711, %v4710
    %v4722 = vpack.c.b16 %v4713, %v4712
    %v4723 = vpack.c.b16 %v4715, %v4714
    %4732 = vmatprep.subr.bf16.mxu0 0
    %4733 = vmatpush1.bf16.msra.mxu0 %v4723
    %4734 = vmatprep.subr.bf16.mxu0 0
    %4735 = vmatpush1.bf16.msra.mxu0 %v4722
    %4736 = vmatprep.subr.bf16.mxu0 0
    %4737 = vmatpush1.bf16.msra.mxu0 %v4721
    %4738 = vmatprep.subr.bf16.mxu0 0
    %4739 = vmatpush1.bf16.msra.mxu0 %v4720
    %4740 = vmatprep.subr.bf16.mxu0 0
    %4741 = vmatpush1.bf16.msra.mxu0 %v4719
    %4742 = vmatprep.subr.bf16.mxu0 0
    %4743 = vmatpush1.bf16.msra.mxu0 %v4718
    %4744 = vmatprep.subr.bf16.mxu0 0
    %4745 = vmatpush1.bf16.msra.mxu0 %v4717
    %4746 = vmatprep.subr.bf16.mxu0 0
    %4747 = vmatpush1.bf16.msra.mxu0 %v4716
    %4748 = vmatprep.subr.bf16.mxu0 0
    %4749 = vmatpush2.bf16.msra.mxu0 0
    %4750 = vmatprep.subr.bf16.mxu0 0
    %4751 = vmatpush2.bf16.msra.mxu0 0
    %4752 = vmatprep.subr.bf16.mxu0 0
    %4753 = vmatpush2.bf16.msra.mxu0 0
    %4754 = vmatprep.subr.bf16.mxu0 0
    %4755 = vmatpush2.bf16.msra.mxu0 0
    %4756 = vmatprep.subr.bf16.mxu0 0
    %4757 = vmatpush2.bf16.msra.mxu0 0
    %4758 = vmatprep.subr.bf16.mxu0 0
    %4759 = vmatpush2.bf16.msra.mxu0 0
    %4760 = vmatprep.subr.bf16.mxu0 0
    %4761 = vmatpush2.bf16.msra.mxu0 0
    %4762 = vmatprep.subr.bf16.mxu0 0
    %4763 = vmatpush2.bf16.msra.mxu0 0
    %4764 = vmatprep.mubr.bf16.mxu0 0
    %4765 = vmatmul.mubr.bf16.gmra.mxu0 %v4558
    %v4766 = vpop.f32.mrf.mxu0
    %v4767 = vadd.f32 %v4678, %v4766
    %v4768 = vpop.f32.mrf.mxu0
    %v4769 = vpop.f32.mrf.mxu0
    %v4770 = vadd.f32 %v4681, %v4769
    %v4771 = vpop.f32.mrf.mxu0
    %4772 = vdwg.mxu0
    %s4773 = scalar_lea.vmem %s6, 128
    %v4774 = vld [vmem:[%s4773] sm:$0xf]
    %v4775 = vld [vmem:[%s4773 + $0x4] sm:$0xf]
    %v4776 = vld [vmem:[%s4773 + $0x8] sm:$0xf]
    %v4777 = vld [vmem:[%s4773 + $0xc] sm:$0xf]
    %v4778 = vld [vmem:[%s4773 + $0x10] sm:$0xf]
    %v4779 = vld [vmem:[%s4773 + $0x14] sm:$0xf]
    %v4780 = vld [vmem:[%s4773 + $0x18] sm:$0xf]
    %v4781 = vld [vmem:[%s4773 + $0x1c] sm:$0xf]
    %v4782 = vld [vmem:[%s4773 + $0x20] sm:$0xf]
    %v4783 = vld [vmem:[%s4773 + $0x24] sm:$0xf]
    %v4784 = vld [vmem:[%s4773 + $0x28] sm:$0xf]
    %v4785 = vld [vmem:[%s4773 + $0x2c] sm:$0xf]
    %v4786 = vld [vmem:[%s4773 + $0x30] sm:$0xf]
    %v4787 = vld [vmem:[%s4773 + $0x34] sm:$0xf]
    %v4788 = vld [vmem:[%s4773 + $0x38] sm:$0xf]
    %v4789 = vld [vmem:[%s4773 + $0x3c] sm:$0xf]
    %v4806 = vunpack.c.l.b16 %v4774
    %v4807 = vunpack.c.l.b16 %v4775
    %v4808 = vunpack.c.l.b16 %v4776
    %v4809 = vunpack.c.l.b16 %v4777
    %v4810 = vunpack.c.l.b16 %v4778
    %v4811 = vunpack.c.l.b16 %v4779
    %v4812 = vunpack.c.l.b16 %v4780
    %v4813 = vunpack.c.l.b16 %v4781
    %v4814 = vunpack.c.l.b16 %v4782
    %v4815 = vunpack.c.l.b16 %v4783
    %v4816 = vunpack.c.l.b16 %v4784
    %v4817 = vunpack.c.l.b16 %v4785
    %v4818 = vunpack.c.l.b16 %v4786
    %v4819 = vunpack.c.l.b16 %v4787
    %v4820 = vunpack.c.l.b16 %v4788
    %v4821 = vunpack.c.l.b16 %v4789
    %v4822 = vpack.c.b16 %v4807, %v4806
    %v4823 = vpack.c.b16 %v4809, %v4808
    %v4824 = vpack.c.b16 %v4811, %v4810
    %v4825 = vpack.c.b16 %v4813, %v4812
    %v4826 = vpack.c.b16 %v4815, %v4814
    %v4827 = vpack.c.b16 %v4817, %v4816
    %v4828 = vpack.c.b16 %v4819, %v4818
    %v4829 = vpack.c.b16 %v4821, %v4820
    %4838 = vmatprep.subr.bf16.mxu0 0
    %4839 = vmatpush1.bf16.msra.mxu0 %v4829
    %4840 = vmatprep.subr.bf16.mxu0 0
    %4841 = vmatpush1.bf16.msra.mxu0 %v4828
    %4842 = vmatprep.subr.bf16.mxu0 0
    %4843 = vmatpush1.bf16.msra.mxu0 %v4827
    %4844 = vmatprep.subr.bf16.mxu0 0
    %4845 = vmatpush1.bf16.msra.mxu0 %v4826
    %4846 = vmatprep.subr.bf16.mxu0 0
    %4847 = vmatpush1.bf16.msra.mxu0 %v4825
    %4848 = vmatprep.subr.bf16.mxu0 0
    %4849 = vmatpush1.bf16.msra.mxu0 %v4824
    %4850 = vmatprep.subr.bf16.mxu0 0
    %4851 = vmatpush1.bf16.msra.mxu0 %v4823
    %4852 = vmatprep.subr.bf16.mxu0 0
    %4853 = vmatpush1.bf16.msra.mxu0 %v4822
    %4854 = vmatprep.subr.bf16.mxu0 0
    %4855 = vmatpush2.bf16.msra.mxu0 0
    %4856 = vmatprep.subr.bf16.mxu0 0
    %4857 = vmatpush2.bf16.msra.mxu0 0
    %4858 = vmatprep.subr.bf16.mxu0 0
    %4859 = vmatpush2.bf16.msra.mxu0 0
    %4860 = vmatprep.subr.bf16.mxu0 0
    %4861 = vmatpush2.bf16.msra.mxu0 0
    %4862 = vmatprep.subr.bf16.mxu0 0
    %4863 = vmatpush2.bf16.msra.mxu0 0
    %4864 = vmatprep.subr.bf16.mxu0 0
    %4865 = vmatpush2.bf16.msra.mxu0 0
    %4866 = vmatprep.subr.bf16.mxu0 0
    %4867 = vmatpush2.bf16.msra.mxu0 0
    %4868 = vmatprep.subr.bf16.mxu0 0
    %4869 = vmatpush2.bf16.msra.mxu0 0
    %4870 = vmatprep.mubr.bf16.mxu0 0
    %4871 = vmatmul.mubr.bf16.gmra.mxu0 %v4560
    %v4872 = vpop.f32.mrf.mxu0
    %v4873 = vadd.f32 0.0, %v4872
    %v4874 = vpop.f32.mrf.mxu0
    %v4875 = vpop.f32.mrf.mxu0
    %v4876 = vadd.f32 0.0, %v4875
    %v4877 = vpop.f32.mrf.mxu0
    %4878 = vdwg.mxu0
    %v4879 = vadd.f32 %v4767, %v4873
    %v4880 = vadd.f32 %v4770, %v4876
    %s4881 = scalar_lea.vmem %s6, 192
    %v4882 = vld [vmem:[%s4881] sm:$0xf]
    %v4883 = vld [vmem:[%s4881 + $0x4] sm:$0xf]
    %v4884 = vld [vmem:[%s4881 + $0x8] sm:$0xf]
    %v4885 = vld [vmem:[%s4881 + $0xc] sm:$0xf]
    %v4886 = vld [vmem:[%s4881 + $0x10] sm:$0xf]
    %v4887 = vld [vmem:[%s4881 + $0x14] sm:$0xf]
    %v4888 = vld [vmem:[%s4881 + $0x18] sm:$0xf]
    %v4889 = vld [vmem:[%s4881 + $0x1c] sm:$0xf]
    %v4890 = vld [vmem:[%s4881 + $0x20] sm:$0xf]
    %v4891 = vld [vmem:[%s4881 + $0x24] sm:$0xf]
    %v4892 = vld [vmem:[%s4881 + $0x28] sm:$0xf]
    %v4893 = vld [vmem:[%s4881 + $0x2c] sm:$0xf]
    %v4894 = vld [vmem:[%s4881 + $0x30] sm:$0xf]
    %v4895 = vld [vmem:[%s4881 + $0x34] sm:$0xf]
    %v4896 = vld [vmem:[%s4881 + $0x38] sm:$0xf]
    %v4897 = vld [vmem:[%s4881 + $0x3c] sm:$0xf]
    %v4914 = vunpack.c.l.b16 %v4882
    %v4915 = vunpack.c.l.b16 %v4883
    %v4916 = vunpack.c.l.b16 %v4884
    %v4917 = vunpack.c.l.b16 %v4885
    %v4918 = vunpack.c.l.b16 %v4886
    %v4919 = vunpack.c.l.b16 %v4887
    %v4920 = vunpack.c.l.b16 %v4888
    %v4921 = vunpack.c.l.b16 %v4889
    %v4922 = vunpack.c.l.b16 %v4890
    %v4923 = vunpack.c.l.b16 %v4891
    %v4924 = vunpack.c.l.b16 %v4892
    %v4925 = vunpack.c.l.b16 %v4893
    %v4926 = vunpack.c.l.b16 %v4894
    %v4927 = vunpack.c.l.b16 %v4895
    %v4928 = vunpack.c.l.b16 %v4896
    %v4929 = vunpack.c.l.b16 %v4897
    %v4930 = vpack.c.b16 %v4915, %v4914
    %v4931 = vpack.c.b16 %v4917, %v4916
    %v4932 = vpack.c.b16 %v4919, %v4918
    %v4933 = vpack.c.b16 %v4921, %v4920
    %v4934 = vpack.c.b16 %v4923, %v4922
    %v4935 = vpack.c.b16 %v4925, %v4924
    %v4936 = vpack.c.b16 %v4927, %v4926
    %v4937 = vpack.c.b16 %v4929, %v4928
    %4946 = vmatprep.subr.bf16.mxu0 0
    %4947 = vmatpush1.bf16.msra.mxu0 %v4937
    %4948 = vmatprep.subr.bf16.mxu0 0
    %4949 = vmatpush1.bf16.msra.mxu0 %v4936
    %4950 = vmatprep.subr.bf16.mxu0 0
    %4951 = vmatpush1.bf16.msra.mxu0 %v4935
    %4952 = vmatprep.subr.bf16.mxu0 0
    %4953 = vmatpush1.bf16.msra.mxu0 %v4934
    %4954 = vmatprep.subr.bf16.mxu0 0
    %4955 = vmatpush1.bf16.msra.mxu0 %v4933
    %4956 = vmatprep.subr.bf16.mxu0 0
    %4957 = vmatpush1.bf16.msra.mxu0 %v4932
    %4958 = vmatprep.subr.bf16.mxu0 0
    %4959 = vmatpush1.bf16.msra.mxu0 %v4931
    %4960 = vmatprep.subr.bf16.mxu0 0
    %4961 = vmatpush1.bf16.msra.mxu0 %v4930
    %4962 = vmatprep.subr.bf16.mxu0 0
    %4963 = vmatpush2.bf16.msra.mxu0 0
    %4964 = vmatprep.subr.bf16.mxu0 0
    %4965 = vmatpush2.bf16.msra.mxu0 0
    %4966 = vmatprep.subr.bf16.mxu0 0
    %4967 = vmatpush2.bf16.msra.mxu0 0
    %4968 = vmatprep.subr.bf16.mxu0 0
    %4969 = vmatpush2.bf16.msra.mxu0 0
    %4970 = vmatprep.subr.bf16.mxu0 0
    %4971 = vmatpush2.bf16.msra.mxu0 0
    %4972 = vmatprep.subr.bf16.mxu0 0
    %4973 = vmatpush2.bf16.msra.mxu0 0
    %4974 = vmatprep.subr.bf16.mxu0 0
    %4975 = vmatpush2.bf16.msra.mxu0 0
    %4976 = vmatprep.subr.bf16.mxu0 0
    %4977 = vmatpush2.bf16.msra.mxu0 0
    %4978 = vmatprep.mubr.bf16.mxu0 0
    %4979 = vmatmul.mubr.bf16.gmra.mxu0 %v4561
    %v4980 = vpop.f32.mrf.mxu0
    %v4981 = vadd.f32 0.0, %v4980
    %v4982 = vpop.f32.mrf.mxu0
    %v4983 = vpop.f32.mrf.mxu0
    %v4984 = vadd.f32 0.0, %v4983
    %v4985 = vpop.f32.mrf.mxu0
    %4986 = vdwg.mxu0
    %v4987 = vadd.f32 %v4879, %v4981
    %v4988 = vadd.f32 %v4880, %v4984
    %v4989 = vld [vmem:[%s7] sm:$0x1]
    %v4991 = vlaneseq
    %v4992 = vshrl.u32 %v4991, 7
    %v4993 = vsub.s32 0, %v4992
    %v4994 = vrot.slane %v4989, %v4993
    %v4996 = vadd.f32 %v4987, %v4994
    %v4997 = vadd.f32 %v4988, %v4994
    %v4998 = vmax.f32 %v4996, 0.0
    %v4999 = vmax.f32 %v4997, 0.0
    %v5000 = vpack.c.bf16 %v4999, %v4998
    %v5001 = vld [vmem:[%s8] sm:$0xf]
    %v5002 = vld [vmem:[%s8 + $0x4] sm:$0xf]
    %v5003 = vld [vmem:[%s8 + $0x8] sm:$0xf]
    %v5004 = vld [vmem:[%s8 + $0xc] sm:$0xf]
    %v5005 = vld [vmem:[%s8 + $0x10] sm:$0xf]
    %v5006 = vld [vmem:[%s8 + $0x14] sm:$0xf]
    %v5007 = vld [vmem:[%s8 + $0x18] sm:$0xf]
    %v5008 = vld [vmem:[%s8 + $0x1c] sm:$0xf]
    %v5009 = vld [vmem:[%s9] sm:$0x1]
    %v5011 = vlaneseq
    %v5012 = vshrl.u32 %v5011, 7
    %v5013 = vsub.s32 0, %v5012
    %v5014 = vrot.slane %v5009, %v5013
    %v5024 = vunpack.c.l.b16 %v5001
    %v5025 = vunpack.c.l.b16 %v5002
    %v5026 = vunpack.c.l.b16 %v5003
    %v5027 = vunpack.c.l.b16 %v5004
    %v5028 = vunpack.c.l.b16 %v5005
    %v5029 = vunpack.c.l.b16 %v5006
    %v5030 = vunpack.c.l.b16 %v5007
    %v5031 = vunpack.c.l.b16 %v5008
    %v5032 = vpack.c.b16 %v5025, %v5024
    %v5033 = vpack.c.b16 %v5027, %v5026
    %v5034 = vpack.c.b16 %v5029, %v5028
    %v5035 = vpack.c.b16 %v5031, %v5030
    %vm5040 = vcmask 523264
    %v5042 = vsel %vm5040, %v5000, 0
    %5044 = vmatprep.subr.bf16.mxu0 0
    %5045 = vmatpush1.bf16.msra.mxu0 0
    %5046 = vmatprep.subr.bf16.mxu0 0
    %5047 = vmatpush1.bf16.msra.mxu0 0
    %5048 = vmatprep.subr.bf16.mxu0 0
    %5049 = vmatpush1.bf16.msra.mxu0 0
    %5050 = vmatprep.subr.bf16.mxu0 0
    %5051 = vmatpush1.bf16.msra.mxu0 0
    %5052 = vmatprep.subr.bf16.mxu0 0
    %5053 = vmatpush1.bf16.msra.mxu0 %v5035
    %5054 = vmatprep.subr.bf16.mxu0 0
    %5055 = vmatpush1.bf16.msra.mxu0 %v5034
    %5056 = vmatprep.subr.bf16.mxu0 0
    %5057 = vmatpush1.bf16.msra.mxu0 %v5033
    %5058 = vmatprep.subr.bf16.mxu0 0
    %5059 = vmatpush1.bf16.msra.mxu0 %v5032
    %5060 = vmatprep.subr.bf16.mxu0 0
    %5061 = vmatpush2.bf16.msra.mxu0 0
    %5062 = vmatprep.subr.bf16.mxu0 0
    %5063 = vmatpush2.bf16.msra.mxu0 0
    %5064 = vmatprep.subr.bf16.mxu0 0
    %5065 = vmatpush2.bf16.msra.mxu0 0
    %5066 = vmatprep.subr.bf16.mxu0 0
    %5067 = vmatpush2.bf16.msra.mxu0 0
    %5068 = vmatprep.subr.bf16.mxu0 0
    %5069 = vmatpush2.bf16.msra.mxu0 0
    %5070 = vmatprep.subr.bf16.mxu0 0
    %5071 = vmatpush2.bf16.msra.mxu0 0
    %5072 = vmatprep.subr.bf16.mxu0 0
    %5073 = vmatpush2.bf16.msra.mxu0 0
    %5074 = vmatprep.subr.bf16.mxu0 0
    %5075 = vmatpush2.bf16.msra.mxu0 0
    %5076 = vmatprep.mubr.bf16.mxu0 0
    %5077 = vmatmul.mubr.bf16.gmra.mxu0 %v5042
    %v5078 = vpop.f32.mrf.mxu0
    %v5079 = vadd.f32 %v5014, %v5078
    %v5080 = vpop.f32.mrf.mxu0
    %v5081 = vpop.f32.mrf.mxu0
    %v5082 = vadd.f32 %v5014, %v5081
    %v5083 = vpop.f32.mrf.mxu0
    %5084 = vdwg.mxu0
    %5085 = vmax.xlane.f32.xlu0 %v5079
    %v5086 = vpop.xlane.xlu0 %5085
    %5087 = vmax.xlane.f32.xlu0 %v5082
    %v5088 = vpop.xlane.xlu0 %5087
    %v5089 = vsub.f32 %v5079, %v5086
    %v5090 = vsub.f32 %v5082, %v5088
    %v5091 = vmul.f32 %v5089, 1.442695
    %v5092 = vpow.pop %v5091
    %v5093 = vmul.f32 %v5090, 1.442695
    %v5094 = vpow.pop %v5093
    %5095 = vadd.xlane.f32.xlu0 %v5092
    %v5096 = vpop.xlane.xlu0 %5095
    %5097 = vadd.xlane.f32.xlu0 %v5094
    %v5098 = vpop.xlane.xlu0 %5097
    %v5099 = vlog2.pop %v5096
    %v5100 = vmul.f32 %v5099, 0.6931472
    %v5101 = vlog2.pop %v5098
    %v5102 = vmul.f32 %v5101, 0.6931472
    %v5103 = vsub.f32 %v5089, %v5100
    %v5104 = vsub.f32 %v5090, %v5102
    %5105 = vst [vmem:[%s10] sm:$0xff] %v5103
    %5106 = vst [vmem:[%s10 + $0x8] sm:$0xff] %v5104
    // Predicated region
    $region46: #{net_forward.1} parent=1 // pred_check
      _
    $region47: #{net_forward.1} parent=1 // pred_check_branch
      %5108 = sbr.rel (0) target = $region49
    $region48: #{net_forward.1} parent=1 // pred_region
      _
    $region49: #{net_forward.1} parent=1 // pred_fallthru
      _
    // Predicated region
    $region50: #{net_forward.1} parent=1 // pred_check
      _
    $region51: #{net_forward.1} parent=1 // pred_check_branch
      %5110 = sbr.rel (0) target = $region53
    $region52: #{net_forward.1} parent=1 // pred_region
      _
    $region53: #{net_forward.1} parent=1 // pred_fallthru
      _
    %5111 = vsyncpa [#allocation3], 1

</llo_original>
